<compile_context>
chip_gen: v7x
topology: tpu7x:2x2x1
jax: 0.10.0
libtpu: 0.0.40
codegen_flags: <defaults>
</compile_context>

<pallas_src>
import functools
import math

import jax
import jax.numpy as jnp
from jax.experimental import pallas as pl
from jax.experimental.pallas import tpu as pltpu

VMEM = pltpu.MemorySpace.VMEM
LN_EPS = 1e-12
NUM_HEADS = 4


# --------------------------- fused Pallas kernel -----------------------------

def _simcse_fused_kernel(*refs, B, S, H, nH, n_layers, pooling):
    (we_ref, pe_ref, te_ref, mask_ref, emb_g_ref, emb_b_ref,
     wqkv_ref, bqkv_ref, wo_ref, bo_ref, ln1_g_ref, ln1_b_ref,
     wi_ref, bi_ref, wo2_ref, bo2_ref, ln2_g_ref, ln2_b_ref) = refs[:18]
    out_ref = refs[-1]
    if pooling == "pooler":
        pool_w_ref, pool_b_ref = refs[18], refs[19]

    dH = H // nH
    scale = 1.0 / math.sqrt(dH)

    def layernorm(x, g, b):
        mean = jnp.mean(x, axis=-1, keepdims=True)
        c = x - mean
        var = jnp.mean(c * c, axis=-1, keepdims=True)
        return c * jax.lax.rsqrt(var + LN_EPS) * g + b

    # Embedding sum + LayerNorm; activations stay (B*S, H) in VMEM throughout.
    x = we_ref[...] + pe_ref[...] + te_ref[...]
    x = layernorm(x, emb_g_ref[...], emb_b_ref[...])

    # Additive attention bias built in-kernel from the raw (B, S) mask.
    mask_bias = (1.0 - mask_ref[...]) * -10000.0                     # (B, S)

    first_hidden = x
    for li in range(n_layers):                                       # static unroll
        # Fused QKV projection: one (B*S,H)x(H,3H) MXU pass.
        qkv = jnp.dot(x, wqkv_ref[li],
                      preferred_element_type=jnp.float32) + bqkv_ref[li]  # (B*S, 3H)

        # Attention per (batch, head) via static lane/sublane slices of qkv —
        # no reshape/transpose glue between kernels, no (B*nH,S,S) mask tensor.
        ctx_rows = []
        for b in range(B):
            bias_b = mask_bias[b:b + 1, :]                           # (1, S)
            head_cols = []
            for h in range(nH):
                q = qkv[b * S:(b + 1) * S, h * dH:(h + 1) * dH]              # (S, dH)
                k = qkv[b * S:(b + 1) * S, H + h * dH:H + (h + 1) * dH]      # (S, dH)
                v = qkv[b * S:(b + 1) * S, 2 * H + h * dH:2 * H + (h + 1) * dH]
                s = jnp.einsum("qd,kd->qk", q, k,
                               preferred_element_type=jnp.float32) * scale
                s = s + bias_b
                m = jnp.max(s, axis=-1, keepdims=True)
                p = jnp.exp(s - m)
                # EUP reciprocal instead of a full-precision vector divide.
                p = p * pl.reciprocal(jnp.sum(p, axis=-1, keepdims=True),
                                      approx=True)
                head_cols.append(jnp.dot(p, v,
                                         preferred_element_type=jnp.float32))
            ctx_rows.append(jnp.concatenate(head_cols, axis=-1))     # (S, H)
        ctx = jnp.concatenate(ctx_rows, axis=0)                      # (B*S, H)

        attn_out = jnp.dot(ctx, wo_ref[li],
                           preferred_element_type=jnp.float32) + bo_ref[li]
        x = layernorm(attn_out + x, ln1_g_ref[li], ln1_b_ref[li])

        inter = jnp.dot(x, wi_ref[li],
                        preferred_element_type=jnp.float32) + bi_ref[li]
        inter = 0.5 * inter * (1.0 + jnp.tanh(
            0.7978845608028654 * (inter + 0.044715 * inter * inter * inter)))
        ffn_out = jnp.dot(inter, wo2_ref[li],
                          preferred_element_type=jnp.float32) + bo2_ref[li]
        x = layernorm(ffn_out + x, ln2_g_ref[li], ln2_b_ref[li])

        if li == 0:
            first_hidden = x        # hidden_states[1] (after first encoder layer)

    # Pooling fused into the same kernel; only the requested branch is traced.
    if pooling == "cls":
        pooled = jnp.concatenate([x[b * S:b * S + 1, :] for b in range(B)], axis=0)
    elif pooling == "pooler":
        cls = jnp.concatenate([x[b * S:b * S + 1, :] for b in range(B)], axis=0)
        pooled = jnp.tanh(
            jnp.dot(cls, pool_w_ref[...], preferred_element_type=jnp.float32)
            + pool_b_ref[...])
    elif pooling == "last-avg":
        pooled = jnp.concatenate(
            [jnp.mean(x[b * S:(b + 1) * S, :], axis=0, keepdims=True)
             for b in range(B)], axis=0)
    elif pooling == "first-last-avg":
        pooled = jnp.concatenate(
            [0.5 * (jnp.mean(first_hidden[b * S:(b + 1) * S, :], axis=0, keepdims=True)
                    + jnp.mean(x[b * S:(b + 1) * S, :], axis=0, keepdims=True))
             for b in range(B)], axis=0)
    else:
        raise ValueError(f"unknown pooling {pooling}")

    out_ref[...] = pooled.astype(out_ref.dtype)


# --------------------------- model --------------------------------------------

def init_params(key, vocab=100, type_vocab=2, max_pos=16, hidden=32, inter=64,
                n_layers=2):
    scale = 0.02
    keys = jax.random.split(key, 4 + n_layers)
    params = {
        "word_emb": scale * jax.random.normal(keys[0], (vocab, hidden), jnp.float32),
        "pos_emb": scale * jax.random.normal(keys[1], (max_pos, hidden), jnp.float32),
        "type_emb": scale * jax.random.normal(keys[2], (type_vocab, hidden), jnp.float32),
        "emb_ln_g": jnp.ones((1, hidden), jnp.float32),
        "emb_ln_b": jnp.zeros((1, hidden), jnp.float32),
        "pool_w": scale * jax.random.normal(keys[3], (hidden, hidden), jnp.float32),
        "pool_b": jnp.zeros((1, hidden), jnp.float32),
    }
    wqkv, bqkv, wo, bo, ln1g, ln1b = [], [], [], [], [], []
    wi, bi, wo2, bo2, ln2g, ln2b = [], [], [], [], [], []
    for li in range(n_layers):
        lk = jax.random.split(keys[4 + li], 6)
        wq = scale * jax.random.normal(lk[0], (hidden, hidden), jnp.float32)
        wk = scale * jax.random.normal(lk[1], (hidden, hidden), jnp.float32)
        wv = scale * jax.random.normal(lk[2], (hidden, hidden), jnp.float32)
        # Fused QKV weight (H, 3H) — one MXU pass instead of three.
        wqkv.append(jnp.concatenate([wq, wk, wv], axis=1))
        bqkv.append(jnp.zeros((1, 3 * hidden), jnp.float32))
        wo.append(scale * jax.random.normal(lk[3], (hidden, hidden), jnp.float32))
        bo.append(jnp.zeros((1, hidden), jnp.float32))
        ln1g.append(jnp.ones((1, hidden), jnp.float32))
        ln1b.append(jnp.zeros((1, hidden), jnp.float32))
        wi.append(scale * jax.random.normal(lk[4], (hidden, inter), jnp.float32))
        bi.append(jnp.zeros((1, inter), jnp.float32))
        wo2.append(scale * jax.random.normal(lk[5], (inter, hidden), jnp.float32))
        bo2.append(jnp.zeros((1, hidden), jnp.float32))
        ln2g.append(jnp.ones((1, hidden), jnp.float32))
        ln2b.append(jnp.zeros((1, hidden), jnp.float32))
    params.update(
        wqkv=jnp.stack(wqkv), bqkv=jnp.stack(bqkv),
        wo=jnp.stack(wo), bo=jnp.stack(bo),
        ln1_g=jnp.stack(ln1g), ln1_b=jnp.stack(ln1b),
        wi=jnp.stack(wi), bi=jnp.stack(bi),
        wo2=jnp.stack(wo2), bo2=jnp.stack(bo2),
        ln2_g=jnp.stack(ln2g), ln2_b=jnp.stack(ln2b))
    return params


@functools.partial(jax.jit, static_argnames=("pooling",))
def simcse_forward(params, input_ids, attention_mask, token_type_ids, pooling):
    B, S = input_ids.shape
    H = params["word_emb"].shape[1]
    n_layers = params["wqkv"].shape[0]

    # Embedding-table gathers stay in XLA glue; everything else is one kernel.
    we = params["word_emb"][input_ids].reshape(B * S, H)
    pe = jnp.broadcast_to(params["pos_emb"][None, :S, :], (B, S, H)).reshape(B * S, H)
    te = params["type_emb"][token_type_ids].reshape(B * S, H)
    mask = attention_mask.astype(jnp.float32)

    inputs = [we, pe, te, mask,
              params["emb_ln_g"], params["emb_ln_b"],
              params["wqkv"], params["bqkv"], params["wo"], params["bo"],
              params["ln1_g"], params["ln1_b"],
              params["wi"], params["bi"], params["wo2"], params["bo2"],
              params["ln2_g"], params["ln2_b"]]
    if pooling == "pooler":
        inputs += [params["pool_w"], params["pool_b"]]

    kernel = functools.partial(
        _simcse_fused_kernel, B=B, S=S, H=H, nH=NUM_HEADS,
        n_layers=n_layers, pooling=pooling)

    # Whole model fits trivially in VMEM at these sizes -> single gridless call.
    # TODO(synk): at real BERT sizes, tile over (B*S) rows with a grid, a
    # parallel batch axis for v7x's 2 TCs, bf16 matmul operands, and
    # vmem_limit_bytes headroom.
    return pl.pallas_call(
        kernel,
        out_shape=jax.ShapeDtypeStruct((B, H), jnp.float32),
        in_specs=[pl.BlockSpec(memory_space=VMEM)] * len(inputs),
        out_specs=pl.BlockSpec(memory_space=VMEM),
    )(*inputs)


# --------------------------- main ----------------------------------------------

if __name__ == "__main__":
    B, S, H = 2, 8, 32
    VOCAB, TYPE_VOCAB, MAX_POS = 100, 2, 16

    params = init_params(jax.random.PRNGKey(42), vocab=VOCAB, type_vocab=TYPE_VOCAB,
                         max_pos=MAX_POS, hidden=H, inter=64, n_layers=2)

    key = jax.random.PRNGKey(0)
    k_ids, _ = jax.random.split(key)
    input_ids = jax.random.randint(k_ids, (B, S), 0, VOCAB, dtype=jnp.int32)
    attention_mask = jnp.array([[1, 1, 1, 1, 1, 1, 1, 1],
                                [1, 1, 1, 1, 1, 1, 0, 0]], dtype=jnp.int32)
    token_type_ids = jnp.zeros((B, S), dtype=jnp.int32)

    outs = {}
    for pooling in ("cls", "pooler", "last-avg", "first-last-avg"):
        outs[pooling] = simcse_forward(params, input_ids, attention_mask,
                                       token_type_ids, pooling=pooling)
        assert outs[pooling].shape == (B, H)

    jax.block_until_ready(outs)
    print("KERNEL_OK")
</pallas_src>

<mosaic_0001>
module attributes {stable_mosaic.version = 11 : i64} {
  func.func @_simcse_fused_kernel(%arg0: memref<16x32xf32, #tpu.memory_space<vmem>>, %arg1: memref<16x32xf32, #tpu.memory_space<vmem>>, %arg2: memref<16x32xf32, #tpu.memory_space<vmem>>, %arg3: memref<2x8xf32, #tpu.memory_space<vmem>>, %arg4: memref<1x32xf32, #tpu.memory_space<vmem>>, %arg5: memref<1x32xf32, #tpu.memory_space<vmem>>, %arg6: memref<2x32x96xf32, #tpu.memory_space<vmem>>, %arg7: memref<2x1x96xf32, #tpu.memory_space<vmem>>, %arg8: memref<2x32x32xf32, #tpu.memory_space<vmem>>, %arg9: memref<2x1x32xf32, #tpu.memory_space<vmem>>, %arg10: memref<2x1x32xf32, #tpu.memory_space<vmem>>, %arg11: memref<2x1x32xf32, #tpu.memory_space<vmem>>, %arg12: memref<2x32x64xf32, #tpu.memory_space<vmem>>, %arg13: memref<2x1x64xf32, #tpu.memory_space<vmem>>, %arg14: memref<2x64x32xf32, #tpu.memory_space<vmem>>, %arg15: memref<2x1x32xf32, #tpu.memory_space<vmem>>, %arg16: memref<2x1x32xf32, #tpu.memory_space<vmem>>, %arg17: memref<2x1x32xf32, #tpu.memory_space<vmem>>, %arg18: memref<2x32xf32, #tpu.memory_space<vmem>>) attributes {dimension_semantics = [], scalar_prefetch = 0 : i64, scratch_operands = 0 : i64, tpu.core_type = #tpu.core_type<tc>} {
    %c0 = arith.constant 0 : index
    %c0_0 = arith.constant 0 : index
    %0 = vector.load %arg0[%c0, %c0_0] : memref<16x32xf32, #tpu.memory_space<vmem>>, vector<16x32xf32>
    %c0_1 = arith.constant 0 : index
    %c0_2 = arith.constant 0 : index
    %1 = vector.load %arg1[%c0_1, %c0_2] : memref<16x32xf32, #tpu.memory_space<vmem>>, vector<16x32xf32>
    %2 = arith.addf %0, %1 : vector<16x32xf32>
    %c0_3 = arith.constant 0 : index
    %c0_4 = arith.constant 0 : index
    %3 = vector.load %arg2[%c0_3, %c0_4] : memref<16x32xf32, #tpu.memory_space<vmem>>, vector<16x32xf32>
    %4 = arith.addf %2, %3 : vector<16x32xf32>
    %c0_5 = arith.constant 0 : index
    %c0_6 = arith.constant 0 : index
    %5 = vector.load %arg4[%c0_5, %c0_6] : memref<1x32xf32, #tpu.memory_space<vmem>>, vector<1x32xf32>
    %c0_7 = arith.constant 0 : index
    %c0_8 = arith.constant 0 : index
    %6 = vector.load %arg5[%c0_7, %c0_8] : memref<1x32xf32, #tpu.memory_space<vmem>>, vector<1x32xf32>
    %cst = arith.constant dense<0.000000e+00> : vector<16xf32>
    %7 = vector.multi_reduction <add>, %4, %cst [1] : vector<16x32xf32> to vector<16xf32>
    %8 = vector.shape_cast %7 : vector<16xf32> to vector<16x1xf32>
    %cst_9 = arith.constant 3.200000e+01 : f32
    %9 = vector.broadcast %cst_9 : f32 to vector<16x1xf32>
    %10 = arith.divf %8, %9 : vector<16x1xf32>
    %11 = vector.broadcast %10 : vector<16x1xf32> to vector<16x32xf32>
    %12 = arith.subf %4, %11 : vector<16x32xf32>
    %13 = arith.mulf %12, %12 : vector<16x32xf32>
    %cst_10 = arith.constant dense<0.000000e+00> : vector<16xf32>
    %14 = vector.multi_reduction <add>, %13, %cst_10 [1] : vector<16x32xf32> to vector<16xf32>
    %15 = vector.shape_cast %14 : vector<16xf32> to vector<16x1xf32>
    %cst_11 = arith.constant 3.200000e+01 : f32
    %16 = vector.broadcast %cst_11 : f32 to vector<16x1xf32>
    %17 = arith.divf %15, %16 : vector<16x1xf32>
    %cst_12 = arith.constant 9.99999996E-13 : f32
    %18 = vector.broadcast %cst_12 : f32 to vector<16x1xf32>
    %19 = arith.addf %17, %18 : vector<16x1xf32>
    %20 = math.rsqrt %19 : vector<16x1xf32>
    %21 = vector.broadcast %20 : vector<16x1xf32> to vector<16x32xf32>
    %22 = arith.mulf %12, %21 : vector<16x32xf32>
    %23 = vector.broadcast %5 : vector<1x32xf32> to vector<16x32xf32>
    %24 = arith.mulf %22, %23 : vector<16x32xf32>
    %25 = vector.broadcast %6 : vector<1x32xf32> to vector<16x32xf32>
    %26 = arith.addf %24, %25 : vector<16x32xf32>
    %c0_13 = arith.constant 0 : index
    %c0_14 = arith.constant 0 : index
    %27 = vector.load %arg3[%c0_13, %c0_14] : memref<2x8xf32, #tpu.memory_space<vmem>>, vector<2x8xf32>
    %cst_15 = arith.constant 1.000000e+00 : f32
    %28 = vector.broadcast %cst_15 : f32 to vector<2x8xf32>
    %29 = arith.subf %28, %27 : vector<2x8xf32>
    %cst_16 = arith.constant -1.000000e+04 : f32
    %30 = vector.broadcast %cst_16 : f32 to vector<2x8xf32>
    %31 = arith.mulf %29, %30 : vector<2x8xf32>
    %c0_17 = arith.constant 0 : index
    %c0_18 = arith.constant 0 : index
    %c0_19 = arith.constant 0 : index
    %32 = vector.load %arg6[%c0_17, %c0_18, %c0_19] : memref<2x32x96xf32, #tpu.memory_space<vmem>>, vector<1x32x96xf32>
    %33 = vector.shape_cast %32 : vector<1x32x96xf32> to vector<32x96xf32>
    %cst_20 = arith.constant dense<0.000000e+00> : vector<16x96xf32>
    %34 = tpu.matmul %26, %33, %cst_20 {dimension_numbers = #tpu.dot_dimension_numbers<[1], [0], [0], [1], [0, 0, 1, 1], [], []>} : vector<16x32xf32>, vector<32x96xf32>, vector<16x96xf32> -> vector<16x96xf32>
    %c0_21 = arith.constant 0 : index
    %c0_22 = arith.constant 0 : index
    %c0_23 = arith.constant 0 : index
    %35 = vector.load %arg7[%c0_21, %c0_22, %c0_23] : memref<2x1x96xf32, #tpu.memory_space<vmem>>, vector<1x1x96xf32>
    %36 = vector.shape_cast %35 : vector<1x1x96xf32> to vector<1x96xf32>
    %37 = vector.broadcast %36 : vector<1x96xf32> to vector<16x96xf32>
    %38 = arith.addf %34, %37 : vector<16x96xf32>
    %39 = vector.extract_strided_slice %31 {offsets = [0, 0], sizes = [1, 8], strides = [1, 1]} : vector<2x8xf32> to vector<1x8xf32>
    %40 = vector.extract_strided_slice %38 {offsets = [0, 0], sizes = [8, 8], strides = [1, 1]} : vector<16x96xf32> to vector<8x8xf32>
    %41 = vector.extract_strided_slice %38 {offsets = [0, 32], sizes = [8, 8], strides = [1, 1]} : vector<16x96xf32> to vector<8x8xf32>
    %42 = vector.extract_strided_slice %38 {offsets = [0, 64], sizes = [8, 8], strides = [1, 1]} : vector<16x96xf32> to vector<8x8xf32>
    "tpu.trace_start"() <{level = 10 : i32, message = "qd,kd->qk"}> : () -> ()
    %cst_24 = arith.constant dense<0.000000e+00> : vector<8x8xf32>
    %43 = tpu.matmul %40, %41, %cst_24 {dimension_numbers = #tpu.dot_dimension_numbers<[1], [1], [0], [0], [0, 0, 1, 0], [], []>} : vector<8x8xf32>, vector<8x8xf32>, vector<8x8xf32> -> vector<8x8xf32>
    "tpu.trace_stop"() : () -> ()
    %cst_25 = arith.constant 0.353553385 : f32
    %44 = vector.broadcast %cst_25 : f32 to vector<8x8xf32>
    %45 = arith.mulf %43, %44 : vector<8x8xf32>
    %46 = vector.broadcast %39 : vector<1x8xf32> to vector<8x8xf32>
    %47 = arith.addf %45, %46 : vector<8x8xf32>
    %cst_26 = arith.constant dense<0xFF800000> : vector<8xf32>
    %48 = vector.multi_reduction <maximumf>, %47, %cst_26 [1] : vector<8x8xf32> to vector<8xf32>
    %49 = vector.shape_cast %48 : vector<8xf32> to vector<8x1xf32>
    %50 = vector.broadcast %49 : vector<8x1xf32> to vector<8x8xf32>
    %51 = arith.subf %47, %50 : vector<8x8xf32>
    %52 = math.exp %51 : vector<8x8xf32>
    %cst_27 = arith.constant dense<0.000000e+00> : vector<8xf32>
    %53 = vector.multi_reduction <add>, %52, %cst_27 [1] : vector<8x8xf32> to vector<8xf32>
    %54 = vector.shape_cast %53 : vector<8xf32> to vector<8x1xf32>
    %55 = tpu.reciprocal %54 {approx = true} : vector<8x1xf32> -> vector<8x1xf32>
    %56 = vector.broadcast %55 : vector<8x1xf32> to vector<8x8xf32>
    %57 = arith.mulf %52, %56 : vector<8x8xf32>
    %cst_28 = arith.constant dense<0.000000e+00> : vector<8x8xf32>
    %58 = tpu.matmul %57, %42, %cst_28 {dimension_numbers = #tpu.dot_dimension_numbers<[1], [0], [0], [1], [0, 0, 1, 1], [], []>} : vector<8x8xf32>, vector<8x8xf32>, vector<8x8xf32> -> vector<8x8xf32>
    %59 = vector.extract_strided_slice %38 {offsets = [0, 8], sizes = [8, 8], strides = [1, 1]} : vector<16x96xf32> to vector<8x8xf32>
    %60 = vector.extract_strided_slice %38 {offsets = [0, 40], sizes = [8, 8], strides = [1, 1]} : vector<16x96xf32> to vector<8x8xf32>
    %61 = vector.extract_strided_slice %38 {offsets = [0, 72], sizes = [8, 8], strides = [1, 1]} : vector<16x96xf32> to vector<8x8xf32>
    "tpu.trace_start"() <{level = 10 : i32, message = "qd,kd->qk"}> : () -> ()
    %cst_29 = arith.constant dense<0.000000e+00> : vector<8x8xf32>
    %62 = tpu.matmul %59, %60, %cst_29 {dimension_numbers = #tpu.dot_dimension_numbers<[1], [1], [0], [0], [0, 0, 1, 0], [], []>} : vector<8x8xf32>, vector<8x8xf32>, vector<8x8xf32> -> vector<8x8xf32>
    "tpu.trace_stop"() : () -> ()
    %cst_30 = arith.constant 0.353553385 : f32
    %63 = vector.broadcast %cst_30 : f32 to vector<8x8xf32>
    %64 = arith.mulf %62, %63 : vector<8x8xf32>
    %65 = vector.broadcast %39 : vector<1x8xf32> to vector<8x8xf32>
    %66 = arith.addf %64, %65 : vector<8x8xf32>
    %cst_31 = arith.constant dense<0xFF800000> : vector<8xf32>
    %67 = vector.multi_reduction <maximumf>, %66, %cst_31 [1] : vector<8x8xf32> to vector<8xf32>
    %68 = vector.shape_cast %67 : vector<8xf32> to vector<8x1xf32>
    %69 = vector.broadcast %68 : vector<8x1xf32> to vector<8x8xf32>
    %70 = arith.subf %66, %69 : vector<8x8xf32>
    %71 = math.exp %70 : vector<8x8xf32>
    %cst_32 = arith.constant dense<0.000000e+00> : vector<8xf32>
    %72 = vector.multi_reduction <add>, %71, %cst_32 [1] : vector<8x8xf32> to vector<8xf32>
    %73 = vector.shape_cast %72 : vector<8xf32> to vector<8x1xf32>
    %74 = tpu.reciprocal %73 {approx = true} : vector<8x1xf32> -> vector<8x1xf32>
    %75 = vector.broadcast %74 : vector<8x1xf32> to vector<8x8xf32>
    %76 = arith.mulf %71, %75 : vector<8x8xf32>
    %cst_33 = arith.constant dense<0.000000e+00> : vector<8x8xf32>
    %77 = tpu.matmul %76, %61, %cst_33 {dimension_numbers = #tpu.dot_dimension_numbers<[1], [0], [0], [1], [0, 0, 1, 1], [], []>} : vector<8x8xf32>, vector<8x8xf32>, vector<8x8xf32> -> vector<8x8xf32>
    %78 = vector.extract_strided_slice %38 {offsets = [0, 16], sizes = [8, 8], strides = [1, 1]} : vector<16x96xf32> to vector<8x8xf32>
    %79 = vector.extract_strided_slice %38 {offsets = [0, 48], sizes = [8, 8], strides = [1, 1]} : vector<16x96xf32> to vector<8x8xf32>
    %80 = vector.extract_strided_slice %38 {offsets = [0, 80], sizes = [8, 8], strides = [1, 1]} : vector<16x96xf32> to vector<8x8xf32>
    "tpu.trace_start"() <{level = 10 : i32, message = "qd,kd->qk"}> : () -> ()
    %cst_34 = arith.constant dense<0.000000e+00> : vector<8x8xf32>
    %81 = tpu.matmul %78, %79, %cst_34 {dimension_numbers = #tpu.dot_dimension_numbers<[1], [1], [0], [0], [0, 0, 1, 0], [], []>} : vector<8x8xf32>, vector<8x8xf32>, vector<8x8xf32> -> vector<8x8xf32>
    "tpu.trace_stop"() : () -> ()
    %cst_35 = arith.constant 0.353553385 : f32
    %82 = vector.broadcast %cst_35 : f32 to vector<8x8xf32>
    %83 = arith.mulf %81, %82 : vector<8x8xf32>
    %84 = vector.broadcast %39 : vector<1x8xf32> to vector<8x8xf32>
    %85 = arith.addf %83, %84 : vector<8x8xf32>
    %cst_36 = arith.constant dense<0xFF800000> : vector<8xf32>
    %86 = vector.multi_reduction <maximumf>, %85, %cst_36 [1] : vector<8x8xf32> to vector<8xf32>
    %87 = vector.shape_cast %86 : vector<8xf32> to vector<8x1xf32>
    %88 = vector.broadcast %87 : vector<8x1xf32> to vector<8x8xf32>
    %89 = arith.subf %85, %88 : vector<8x8xf32>
    %90 = math.exp %89 : vector<8x8xf32>
    %cst_37 = arith.constant dense<0.000000e+00> : vector<8xf32>
    %91 = vector.multi_reduction <add>, %90, %cst_37 [1] : vector<8x8xf32> to vector<8xf32>
    %92 = vector.shape_cast %91 : vector<8xf32> to vector<8x1xf32>
    %93 = tpu.reciprocal %92 {approx = true} : vector<8x1xf32> -> vector<8x1xf32>
    %94 = vector.broadcast %93 : vector<8x1xf32> to vector<8x8xf32>
    %95 = arith.mulf %90, %94 : vector<8x8xf32>
    %cst_38 = arith.constant dense<0.000000e+00> : vector<8x8xf32>
    %96 = tpu.matmul %95, %80, %cst_38 {dimension_numbers = #tpu.dot_dimension_numbers<[1], [0], [0], [1], [0, 0, 1, 1], [], []>} : vector<8x8xf32>, vector<8x8xf32>, vector<8x8xf32> -> vector<8x8xf32>
    %97 = vector.extract_strided_slice %38 {offsets = [0, 24], sizes = [8, 8], strides = [1, 1]} : vector<16x96xf32> to vector<8x8xf32>
    %98 = vector.extract_strided_slice %38 {offsets = [0, 56], sizes = [8, 8], strides = [1, 1]} : vector<16x96xf32> to vector<8x8xf32>
    %99 = vector.extract_strided_slice %38 {offsets = [0, 88], sizes = [8, 8], strides = [1, 1]} : vector<16x96xf32> to vector<8x8xf32>
    "tpu.trace_start"() <{level = 10 : i32, message = "qd,kd->qk"}> : () -> ()
    %cst_39 = arith.constant dense<0.000000e+00> : vector<8x8xf32>
    %100 = tpu.matmul %97, %98, %cst_39 {dimension_numbers = #tpu.dot_dimension_numbers<[1], [1], [0], [0], [0, 0, 1, 0], [], []>} : vector<8x8xf32>, vector<8x8xf32>, vector<8x8xf32> -> vector<8x8xf32>
    "tpu.trace_stop"() : () -> ()
    %cst_40 = arith.constant 0.353553385 : f32
    %101 = vector.broadcast %cst_40 : f32 to vector<8x8xf32>
    %102 = arith.mulf %100, %101 : vector<8x8xf32>
    %103 = vector.broadcast %39 : vector<1x8xf32> to vector<8x8xf32>
    %104 = arith.addf %102, %103 : vector<8x8xf32>
    %cst_41 = arith.constant dense<0xFF800000> : vector<8xf32>
    %105 = vector.multi_reduction <maximumf>, %104, %cst_41 [1] : vector<8x8xf32> to vector<8xf32>
    %106 = vector.shape_cast %105 : vector<8xf32> to vector<8x1xf32>
    %107 = vector.broadcast %106 : vector<8x1xf32> to vector<8x8xf32>
    %108 = arith.subf %104, %107 : vector<8x8xf32>
    %109 = math.exp %108 : vector<8x8xf32>
    %cst_42 = arith.constant dense<0.000000e+00> : vector<8xf32>
    %110 = vector.multi_reduction <add>, %109, %cst_42 [1] : vector<8x8xf32> to vector<8xf32>
    %111 = vector.shape_cast %110 : vector<8xf32> to vector<8x1xf32>
    %112 = tpu.reciprocal %111 {approx = true} : vector<8x1xf32> -> vector<8x1xf32>
    %113 = vector.broadcast %112 : vector<8x1xf32> to vector<8x8xf32>
    %114 = arith.mulf %109, %113 : vector<8x8xf32>
    %cst_43 = arith.constant dense<0.000000e+00> : vector<8x8xf32>
    %115 = tpu.matmul %114, %99, %cst_43 {dimension_numbers = #tpu.dot_dimension_numbers<[1], [0], [0], [1], [0, 0, 1, 1], [], []>} : vector<8x8xf32>, vector<8x8xf32>, vector<8x8xf32> -> vector<8x8xf32>
    %116 = tpu.concatenate %58, %77, %96, %115 in 1 : vector<8x8xf32>, vector<8x8xf32>, vector<8x8xf32>, vector<8x8xf32> -> vector<8x32xf32>
    %117 = vector.extract_strided_slice %31 {offsets = [1, 0], sizes = [1, 8], strides = [1, 1]} : vector<2x8xf32> to vector<1x8xf32>
    %118 = vector.extract_strided_slice %38 {offsets = [8, 0], sizes = [8, 8], strides = [1, 1]} : vector<16x96xf32> to vector<8x8xf32>
    %119 = vector.extract_strided_slice %38 {offsets = [8, 32], sizes = [8, 8], strides = [1, 1]} : vector<16x96xf32> to vector<8x8xf32>
    %120 = vector.extract_strided_slice %38 {offsets = [8, 64], sizes = [8, 8], strides = [1, 1]} : vector<16x96xf32> to vector<8x8xf32>
    "tpu.trace_start"() <{level = 10 : i32, message = "qd,kd->qk"}> : () -> ()
    %cst_44 = arith.constant dense<0.000000e+00> : vector<8x8xf32>
    %121 = tpu.matmul %118, %119, %cst_44 {dimension_numbers = #tpu.dot_dimension_numbers<[1], [1], [0], [0], [0, 0, 1, 0], [], []>} : vector<8x8xf32>, vector<8x8xf32>, vector<8x8xf32> -> vector<8x8xf32>
    "tpu.trace_stop"() : () -> ()
    %cst_45 = arith.constant 0.353553385 : f32
    %122 = vector.broadcast %cst_45 : f32 to vector<8x8xf32>
    %123 = arith.mulf %121, %122 : vector<8x8xf32>
    %124 = vector.broadcast %117 : vector<1x8xf32> to vector<8x8xf32>
    %125 = arith.addf %123, %124 : vector<8x8xf32>
    %cst_46 = arith.constant dense<0xFF800000> : vector<8xf32>
    %126 = vector.multi_reduction <maximumf>, %125, %cst_46 [1] : vector<8x8xf32> to vector<8xf32>
    %127 = vector.shape_cast %126 : vector<8xf32> to vector<8x1xf32>
    %128 = vector.broadcast %127 : vector<8x1xf32> to vector<8x8xf32>
    %129 = arith.subf %125, %128 : vector<8x8xf32>
    %130 = math.exp %129 : vector<8x8xf32>
    %cst_47 = arith.constant dense<0.000000e+00> : vector<8xf32>
    %131 = vector.multi_reduction <add>, %130, %cst_47 [1] : vector<8x8xf32> to vector<8xf32>
    %132 = vector.shape_cast %131 : vector<8xf32> to vector<8x1xf32>
    %133 = tpu.reciprocal %132 {approx = true} : vector<8x1xf32> -> vector<8x1xf32>
    %134 = vector.broadcast %133 : vector<8x1xf32> to vector<8x8xf32>
    %135 = arith.mulf %130, %134 : vector<8x8xf32>
    %cst_48 = arith.constant dense<0.000000e+00> : vector<8x8xf32>
    %136 = tpu.matmul %135, %120, %cst_48 {dimension_numbers = #tpu.dot_dimension_numbers<[1], [0], [0], [1], [0, 0, 1, 1], [], []>} : vector<8x8xf32>, vector<8x8xf32>, vector<8x8xf32> -> vector<8x8xf32>
    %137 = vector.extract_strided_slice %38 {offsets = [8, 8], sizes = [8, 8], strides = [1, 1]} : vector<16x96xf32> to vector<8x8xf32>
    %138 = vector.extract_strided_slice %38 {offsets = [8, 40], sizes = [8, 8], strides = [1, 1]} : vector<16x96xf32> to vector<8x8xf32>
    %139 = vector.extract_strided_slice %38 {offsets = [8, 72], sizes = [8, 8], strides = [1, 1]} : vector<16x96xf32> to vector<8x8xf32>
    "tpu.trace_start"() <{level = 10 : i32, message = "qd,kd->qk"}> : () -> ()
    %cst_49 = arith.constant dense<0.000000e+00> : vector<8x8xf32>
    %140 = tpu.matmul %137, %138, %cst_49 {dimension_numbers = #tpu.dot_dimension_numbers<[1], [1], [0], [0], [0, 0, 1, 0], [], []>} : vector<8x8xf32>, vector<8x8xf32>, vector<8x8xf32> -> vector<8x8xf32>
    "tpu.trace_stop"() : () -> ()
    %cst_50 = arith.constant 0.353553385 : f32
    %141 = vector.broadcast %cst_50 : f32 to vector<8x8xf32>
    %142 = arith.mulf %140, %141 : vector<8x8xf32>
    %143 = vector.broadcast %117 : vector<1x8xf32> to vector<8x8xf32>
    %144 = arith.addf %142, %143 : vector<8x8xf32>
    %cst_51 = arith.constant dense<0xFF800000> : vector<8xf32>
    %145 = vector.multi_reduction <maximumf>, %144, %cst_51 [1] : vector<8x8xf32> to vector<8xf32>
    %146 = vector.shape_cast %145 : vector<8xf32> to vector<8x1xf32>
    %147 = vector.broadcast %146 : vector<8x1xf32> to vector<8x8xf32>
    %148 = arith.subf %144, %147 : vector<8x8xf32>
    %149 = math.exp %148 : vector<8x8xf32>
    %cst_52 = arith.constant dense<0.000000e+00> : vector<8xf32>
    %150 = vector.multi_reduction <add>, %149, %cst_52 [1] : vector<8x8xf32> to vector<8xf32>
    %151 = vector.shape_cast %150 : vector<8xf32> to vector<8x1xf32>
    %152 = tpu.reciprocal %151 {approx = true} : vector<8x1xf32> -> vector<8x1xf32>
    %153 = vector.broadcast %152 : vector<8x1xf32> to vector<8x8xf32>
    %154 = arith.mulf %149, %153 : vector<8x8xf32>
    %cst_53 = arith.constant dense<0.000000e+00> : vector<8x8xf32>
    %155 = tpu.matmul %154, %139, %cst_53 {dimension_numbers = #tpu.dot_dimension_numbers<[1], [0], [0], [1], [0, 0, 1, 1], [], []>} : vector<8x8xf32>, vector<8x8xf32>, vector<8x8xf32> -> vector<8x8xf32>
    %156 = vector.extract_strided_slice %38 {offsets = [8, 16], sizes = [8, 8], strides = [1, 1]} : vector<16x96xf32> to vector<8x8xf32>
    %157 = vector.extract_strided_slice %38 {offsets = [8, 48], sizes = [8, 8], strides = [1, 1]} : vector<16x96xf32> to vector<8x8xf32>
    %158 = vector.extract_strided_slice %38 {offsets = [8, 80], sizes = [8, 8], strides = [1, 1]} : vector<16x96xf32> to vector<8x8xf32>
    "tpu.trace_start"() <{level = 10 : i32, message = "qd,kd->qk"}> : () -> ()
    %cst_54 = arith.constant dense<0.000000e+00> : vector<8x8xf32>
    %159 = tpu.matmul %156, %157, %cst_54 {dimension_numbers = #tpu.dot_dimension_numbers<[1], [1], [0], [0], [0, 0, 1, 0], [], []>} : vector<8x8xf32>, vector<8x8xf32>, vector<8x8xf32> -> vector<8x8xf32>
    "tpu.trace_stop"() : () -> ()
    %cst_55 = arith.constant 0.353553385 : f32
    %160 = vector.broadcast %cst_55 : f32 to vector<8x8xf32>
    %161 = arith.mulf %159, %160 : vector<8x8xf32>
    %162 = vector.broadcast %117 : vector<1x8xf32> to vector<8x8xf32>
    %163 = arith.addf %161, %162 : vector<8x8xf32>
    %cst_56 = arith.constant dense<0xFF800000> : vector<8xf32>
    %164 = vector.multi_reduction <maximumf>, %163, %cst_56 [1] : vector<8x8xf32> to vector<8xf32>
    %165 = vector.shape_cast %164 : vector<8xf32> to vector<8x1xf32>
    %166 = vector.broadcast %165 : vector<8x1xf32> to vector<8x8xf32>
    %167 = arith.subf %163, %166 : vector<8x8xf32>
    %168 = math.exp %167 : vector<8x8xf32>
    %cst_57 = arith.constant dense<0.000000e+00> : vector<8xf32>
    %169 = vector.multi_reduction <add>, %168, %cst_57 [1] : vector<8x8xf32> to vector<8xf32>
    %170 = vector.shape_cast %169 : vector<8xf32> to vector<8x1xf32>
    %171 = tpu.reciprocal %170 {approx = true} : vector<8x1xf32> -> vector<8x1xf32>
    %172 = vector.broadcast %171 : vector<8x1xf32> to vector<8x8xf32>
    %173 = arith.mulf %168, %172 : vector<8x8xf32>
    %cst_58 = arith.constant dense<0.000000e+00> : vector<8x8xf32>
    %174 = tpu.matmul %173, %158, %cst_58 {dimension_numbers = #tpu.dot_dimension_numbers<[1], [0], [0], [1], [0, 0, 1, 1], [], []>} : vector<8x8xf32>, vector<8x8xf32>, vector<8x8xf32> -> vector<8x8xf32>
    %175 = vector.extract_strided_slice %38 {offsets = [8, 24], sizes = [8, 8], strides = [1, 1]} : vector<16x96xf32> to vector<8x8xf32>
    %176 = vector.extract_strided_slice %38 {offsets = [8, 56], sizes = [8, 8], strides = [1, 1]} : vector<16x96xf32> to vector<8x8xf32>
    %177 = vector.extract_strided_slice %38 {offsets = [8, 88], sizes = [8, 8], strides = [1, 1]} : vector<16x96xf32> to vector<8x8xf32>
    "tpu.trace_start"() <{level = 10 : i32, message = "qd,kd->qk"}> : () -> ()
    %cst_59 = arith.constant dense<0.000000e+00> : vector<8x8xf32>
    %178 = tpu.matmul %175, %176, %cst_59 {dimension_numbers = #tpu.dot_dimension_numbers<[1], [1], [0], [0], [0, 0, 1, 0], [], []>} : vector<8x8xf32>, vector<8x8xf32>, vector<8x8xf32> -> vector<8x8xf32>
    "tpu.trace_stop"() : () -> ()
    %cst_60 = arith.constant 0.353553385 : f32
    %179 = vector.broadcast %cst_60 : f32 to vector<8x8xf32>
    %180 = arith.mulf %178, %179 : vector<8x8xf32>
    %181 = vector.broadcast %117 : vector<1x8xf32> to vector<8x8xf32>
    %182 = arith.addf %180, %181 : vector<8x8xf32>
    %cst_61 = arith.constant dense<0xFF800000> : vector<8xf32>
    %183 = vector.multi_reduction <maximumf>, %182, %cst_61 [1] : vector<8x8xf32> to vector<8xf32>
    %184 = vector.shape_cast %183 : vector<8xf32> to vector<8x1xf32>
    %185 = vector.broadcast %184 : vector<8x1xf32> to vector<8x8xf32>
    %186 = arith.subf %182, %185 : vector<8x8xf32>
    %187 = math.exp %186 : vector<8x8xf32>
    %cst_62 = arith.constant dense<0.000000e+00> : vector<8xf32>
    %188 = vector.multi_reduction <add>, %187, %cst_62 [1] : vector<8x8xf32> to vector<8xf32>
    %189 = vector.shape_cast %188 : vector<8xf32> to vector<8x1xf32>
    %190 = tpu.reciprocal %189 {approx = true} : vector<8x1xf32> -> vector<8x1xf32>
    %191 = vector.broadcast %190 : vector<8x1xf32> to vector<8x8xf32>
    %192 = arith.mulf %187, %191 : vector<8x8xf32>
    %cst_63 = arith.constant dense<0.000000e+00> : vector<8x8xf32>
    %193 = tpu.matmul %192, %177, %cst_63 {dimension_numbers = #tpu.dot_dimension_numbers<[1], [0], [0], [1], [0, 0, 1, 1], [], []>} : vector<8x8xf32>, vector<8x8xf32>, vector<8x8xf32> -> vector<8x8xf32>
    %194 = tpu.concatenate %136, %155, %174, %193 in 1 : vector<8x8xf32>, vector<8x8xf32>, vector<8x8xf32>, vector<8x8xf32> -> vector<8x32xf32>
    %195 = tpu.concatenate %116, %194 in 0 : vector<8x32xf32>, vector<8x32xf32> -> vector<16x32xf32>
    %c0_64 = arith.constant 0 : index
    %c0_65 = arith.constant 0 : index
    %c0_66 = arith.constant 0 : index
    %196 = vector.load %arg8[%c0_64, %c0_65, %c0_66] : memref<2x32x32xf32, #tpu.memory_space<vmem>>, vector<1x32x32xf32>
    %197 = vector.shape_cast %196 : vector<1x32x32xf32> to vector<32x32xf32>
    %cst_67 = arith.constant dense<0.000000e+00> : vector<16x32xf32>
    %198 = tpu.matmul %195, %197, %cst_67 {dimension_numbers = #tpu.dot_dimension_numbers<[1], [0], [0], [1], [0, 0, 1, 1], [], []>} : vector<16x32xf32>, vector<32x32xf32>, vector<16x32xf32> -> vector<16x32xf32>
    %c0_68 = arith.constant 0 : index
    %c0_69 = arith.constant 0 : index
    %c0_70 = arith.constant 0 : index
    %199 = vector.load %arg9[%c0_68, %c0_69, %c0_70] : memref<2x1x32xf32, #tpu.memory_space<vmem>>, vector<1x1x32xf32>
    %200 = vector.shape_cast %199 : vector<1x1x32xf32> to vector<1x32xf32>
    %201 = vector.broadcast %200 : vector<1x32xf32> to vector<16x32xf32>
    %202 = arith.addf %198, %201 : vector<16x32xf32>
    %203 = arith.addf %202, %26 : vector<16x32xf32>
    %c0_71 = arith.constant 0 : index
    %c0_72 = arith.constant 0 : index
    %c0_73 = arith.constant 0 : index
    %204 = vector.load %arg10[%c0_71, %c0_72, %c0_73] : memref<2x1x32xf32, #tpu.memory_space<vmem>>, vector<1x1x32xf32>
    %205 = vector.shape_cast %204 : vector<1x1x32xf32> to vector<1x32xf32>
    %c0_74 = arith.constant 0 : index
    %c0_75 = arith.constant 0 : index
    %c0_76 = arith.constant 0 : index
    %206 = vector.load %arg11[%c0_74, %c0_75, %c0_76] : memref<2x1x32xf32, #tpu.memory_space<vmem>>, vector<1x1x32xf32>
    %207 = vector.shape_cast %206 : vector<1x1x32xf32> to vector<1x32xf32>
    %cst_77 = arith.constant dense<0.000000e+00> : vector<16xf32>
    %208 = vector.multi_reduction <add>, %203, %cst_77 [1] : vector<16x32xf32> to vector<16xf32>
    %209 = vector.shape_cast %208 : vector<16xf32> to vector<16x1xf32>
    %cst_78 = arith.constant 3.200000e+01 : f32
    %210 = vector.broadcast %cst_78 : f32 to vector<16x1xf32>
    %211 = arith.divf %209, %210 : vector<16x1xf32>
    %212 = vector.broadcast %211 : vector<16x1xf32> to vector<16x32xf32>
    %213 = arith.subf %203, %212 : vector<16x32xf32>
    %214 = arith.mulf %213, %213 : vector<16x32xf32>
    %cst_79 = arith.constant dense<0.000000e+00> : vector<16xf32>
    %215 = vector.multi_reduction <add>, %214, %cst_79 [1] : vector<16x32xf32> to vector<16xf32>
    %216 = vector.shape_cast %215 : vector<16xf32> to vector<16x1xf32>
    %cst_80 = arith.constant 3.200000e+01 : f32
    %217 = vector.broadcast %cst_80 : f32 to vector<16x1xf32>
    %218 = arith.divf %216, %217 : vector<16x1xf32>
    %cst_81 = arith.constant 9.99999996E-13 : f32
    %219 = vector.broadcast %cst_81 : f32 to vector<16x1xf32>
    %220 = arith.addf %218, %219 : vector<16x1xf32>
    %221 = math.rsqrt %220 : vector<16x1xf32>
    %222 = vector.broadcast %221 : vector<16x1xf32> to vector<16x32xf32>
    %223 = arith.mulf %213, %222 : vector<16x32xf32>
    %224 = vector.broadcast %205 : vector<1x32xf32> to vector<16x32xf32>
    %225 = arith.mulf %223, %224 : vector<16x32xf32>
    %226 = vector.broadcast %207 : vector<1x32xf32> to vector<16x32xf32>
    %227 = arith.addf %225, %226 : vector<16x32xf32>
    %c0_82 = arith.constant 0 : index
    %c0_83 = arith.constant 0 : index
    %c0_84 = arith.constant 0 : index
    %228 = vector.load %arg12[%c0_82, %c0_83, %c0_84] : memref<2x32x64xf32, #tpu.memory_space<vmem>>, vector<1x32x64xf32>
    %229 = vector.shape_cast %228 : vector<1x32x64xf32> to vector<32x64xf32>
    %cst_85 = arith.constant dense<0.000000e+00> : vector<16x64xf32>
    %230 = tpu.matmul %227, %229, %cst_85 {dimension_numbers = #tpu.dot_dimension_numbers<[1], [0], [0], [1], [0, 0, 1, 1], [], []>} : vector<16x32xf32>, vector<32x64xf32>, vector<16x64xf32> -> vector<16x64xf32>
    %c0_86 = arith.constant 0 : index
    %c0_87 = arith.constant 0 : index
    %c0_88 = arith.constant 0 : index
    %231 = vector.load %arg13[%c0_86, %c0_87, %c0_88] : memref<2x1x64xf32, #tpu.memory_space<vmem>>, vector<1x1x64xf32>
    %232 = vector.shape_cast %231 : vector<1x1x64xf32> to vector<1x64xf32>
    %233 = vector.broadcast %232 : vector<1x64xf32> to vector<16x64xf32>
    %234 = arith.addf %230, %233 : vector<16x64xf32>
    %cst_89 = arith.constant 5.000000e-01 : f32
    %235 = vector.broadcast %cst_89 : f32 to vector<16x64xf32>
    %236 = arith.mulf %235, %234 : vector<16x64xf32>
    %cst_90 = arith.constant 4.471500e-02 : f32
    %237 = vector.broadcast %cst_90 : f32 to vector<16x64xf32>
    %238 = arith.mulf %237, %234 : vector<16x64xf32>
    %239 = arith.mulf %238, %234 : vector<16x64xf32>
    %240 = arith.mulf %239, %234 : vector<16x64xf32>
    %241 = arith.addf %234, %240 : vector<16x64xf32>
    %cst_91 = arith.constant 0.797884583 : f32
    %242 = vector.broadcast %cst_91 : f32 to vector<16x64xf32>
    %243 = arith.mulf %242, %241 : vector<16x64xf32>
    %244 = math.tanh %243 : vector<16x64xf32>
    %cst_92 = arith.constant 1.000000e+00 : f32
    %245 = vector.broadcast %cst_92 : f32 to vector<16x64xf32>
    %246 = arith.addf %245, %244 : vector<16x64xf32>
    %247 = arith.mulf %236, %246 : vector<16x64xf32>
    %c0_93 = arith.constant 0 : index
    %c0_94 = arith.constant 0 : index
    %c0_95 = arith.constant 0 : index
    %248 = vector.load %arg14[%c0_93, %c0_94, %c0_95] : memref<2x64x32xf32, #tpu.memory_space<vmem>>, vector<1x64x32xf32>
    %249 = vector.shape_cast %248 : vector<1x64x32xf32> to vector<64x32xf32>
    %cst_96 = arith.constant dense<0.000000e+00> : vector<16x32xf32>
    %250 = tpu.matmul %247, %249, %cst_96 {dimension_numbers = #tpu.dot_dimension_numbers<[1], [0], [0], [1], [0, 0, 1, 1], [], []>} : vector<16x64xf32>, vector<64x32xf32>, vector<16x32xf32> -> vector<16x32xf32>
    %c0_97 = arith.constant 0 : index
    %c0_98 = arith.constant 0 : index
    %c0_99 = arith.constant 0 : index
    %251 = vector.load %arg15[%c0_97, %c0_98, %c0_99] : memref<2x1x32xf32, #tpu.memory_space<vmem>>, vector<1x1x32xf32>
    %252 = vector.shape_cast %251 : vector<1x1x32xf32> to vector<1x32xf32>
    %253 = vector.broadcast %252 : vector<1x32xf32> to vector<16x32xf32>
    %254 = arith.addf %250, %253 : vector<16x32xf32>
    %255 = arith.addf %254, %227 : vector<16x32xf32>
    %c0_100 = arith.constant 0 : index
    %c0_101 = arith.constant 0 : index
    %c0_102 = arith.constant 0 : index
    %256 = vector.load %arg16[%c0_100, %c0_101, %c0_102] : memref<2x1x32xf32, #tpu.memory_space<vmem>>, vector<1x1x32xf32>
    %257 = vector.shape_cast %256 : vector<1x1x32xf32> to vector<1x32xf32>
    %c0_103 = arith.constant 0 : index
    %c0_104 = arith.constant 0 : index
    %c0_105 = arith.constant 0 : index
    %258 = vector.load %arg17[%c0_103, %c0_104, %c0_105] : memref<2x1x32xf32, #tpu.memory_space<vmem>>, vector<1x1x32xf32>
    %259 = vector.shape_cast %258 : vector<1x1x32xf32> to vector<1x32xf32>
    %cst_106 = arith.constant dense<0.000000e+00> : vector<16xf32>
    %260 = vector.multi_reduction <add>, %255, %cst_106 [1] : vector<16x32xf32> to vector<16xf32>
    %261 = vector.shape_cast %260 : vector<16xf32> to vector<16x1xf32>
    %cst_107 = arith.constant 3.200000e+01 : f32
    %262 = vector.broadcast %cst_107 : f32 to vector<16x1xf32>
    %263 = arith.divf %261, %262 : vector<16x1xf32>
    %264 = vector.broadcast %263 : vector<16x1xf32> to vector<16x32xf32>
    %265 = arith.subf %255, %264 : vector<16x32xf32>
    %266 = arith.mulf %265, %265 : vector<16x32xf32>
    %cst_108 = arith.constant dense<0.000000e+00> : vector<16xf32>
    %267 = vector.multi_reduction <add>, %266, %cst_108 [1] : vector<16x32xf32> to vector<16xf32>
    %268 = vector.shape_cast %267 : vector<16xf32> to vector<16x1xf32>
    %cst_109 = arith.constant 3.200000e+01 : f32
    %269 = vector.broadcast %cst_109 : f32 to vector<16x1xf32>
    %270 = arith.divf %268, %269 : vector<16x1xf32>
    %cst_110 = arith.constant 9.99999996E-13 : f32
    %271 = vector.broadcast %cst_110 : f32 to vector<16x1xf32>
    %272 = arith.addf %270, %271 : vector<16x1xf32>
    %273 = math.rsqrt %272 : vector<16x1xf32>
    %274 = vector.broadcast %273 : vector<16x1xf32> to vector<16x32xf32>
    %275 = arith.mulf %265, %274 : vector<16x32xf32>
    %276 = vector.broadcast %257 : vector<1x32xf32> to vector<16x32xf32>
    %277 = arith.mulf %275, %276 : vector<16x32xf32>
    %278 = vector.broadcast %259 : vector<1x32xf32> to vector<16x32xf32>
    %279 = arith.addf %277, %278 : vector<16x32xf32>
    %c1 = arith.constant 1 : index
    %c0_111 = arith.constant 0 : index
    %c0_112 = arith.constant 0 : index
    %280 = vector.load %arg6[%c1, %c0_111, %c0_112] : memref<2x32x96xf32, #tpu.memory_space<vmem>>, vector<1x32x96xf32>
    %281 = vector.shape_cast %280 : vector<1x32x96xf32> to vector<32x96xf32>
    %cst_113 = arith.constant dense<0.000000e+00> : vector<16x96xf32>
    %282 = tpu.matmul %279, %281, %cst_113 {dimension_numbers = #tpu.dot_dimension_numbers<[1], [0], [0], [1], [0, 0, 1, 1], [], []>} : vector<16x32xf32>, vector<32x96xf32>, vector<16x96xf32> -> vector<16x96xf32>
    %c1_114 = arith.constant 1 : index
    %c0_115 = arith.constant 0 : index
    %c0_116 = arith.constant 0 : index
    %283 = vector.load %arg7[%c1_114, %c0_115, %c0_116] : memref<2x1x96xf32, #tpu.memory_space<vmem>>, vector<1x1x96xf32>
    %284 = vector.shape_cast %283 : vector<1x1x96xf32> to vector<1x96xf32>
    %285 = vector.broadcast %284 : vector<1x96xf32> to vector<16x96xf32>
    %286 = arith.addf %282, %285 : vector<16x96xf32>
    %287 = vector.extract_strided_slice %31 {offsets = [0, 0], sizes = [1, 8], strides = [1, 1]} : vector<2x8xf32> to vector<1x8xf32>
    %288 = vector.extract_strided_slice %286 {offsets = [0, 0], sizes = [8, 8], strides = [1, 1]} : vector<16x96xf32> to vector<8x8xf32>
    %289 = vector.extract_strided_slice %286 {offsets = [0, 32], sizes = [8, 8], strides = [1, 1]} : vector<16x96xf32> to vector<8x8xf32>
    %290 = vector.extract_strided_slice %286 {offsets = [0, 64], sizes = [8, 8], strides = [1, 1]} : vector<16x96xf32> to vector<8x8xf32>
    "tpu.trace_start"() <{level = 10 : i32, message = "qd,kd->qk"}> : () -> ()
    %cst_117 = arith.constant dense<0.000000e+00> : vector<8x8xf32>
    %291 = tpu.matmul %288, %289, %cst_117 {dimension_numbers = #tpu.dot_dimension_numbers<[1], [1], [0], [0], [0, 0, 1, 0], [], []>} : vector<8x8xf32>, vector<8x8xf32>, vector<8x8xf32> -> vector<8x8xf32>
    "tpu.trace_stop"() : () -> ()
    %cst_118 = arith.constant 0.353553385 : f32
    %292 = vector.broadcast %cst_118 : f32 to vector<8x8xf32>
    %293 = arith.mulf %291, %292 : vector<8x8xf32>
    %294 = vector.broadcast %287 : vector<1x8xf32> to vector<8x8xf32>
    %295 = arith.addf %293, %294 : vector<8x8xf32>
    %cst_119 = arith.constant dense<0xFF800000> : vector<8xf32>
    %296 = vector.multi_reduction <maximumf>, %295, %cst_119 [1] : vector<8x8xf32> to vector<8xf32>
    %297 = vector.shape_cast %296 : vector<8xf32> to vector<8x1xf32>
    %298 = vector.broadcast %297 : vector<8x1xf32> to vector<8x8xf32>
    %299 = arith.subf %295, %298 : vector<8x8xf32>
    %300 = math.exp %299 : vector<8x8xf32>
    %cst_120 = arith.constant dense<0.000000e+00> : vector<8xf32>
    %301 = vector.multi_reduction <add>, %300, %cst_120 [1] : vector<8x8xf32> to vector<8xf32>
    %302 = vector.shape_cast %301 : vector<8xf32> to vector<8x1xf32>
    %303 = tpu.reciprocal %302 {approx = true} : vector<8x1xf32> -> vector<8x1xf32>
    %304 = vector.broadcast %303 : vector<8x1xf32> to vector<8x8xf32>
    %305 = arith.mulf %300, %304 : vector<8x8xf32>
    %cst_121 = arith.constant dense<0.000000e+00> : vector<8x8xf32>
    %306 = tpu.matmul %305, %290, %cst_121 {dimension_numbers = #tpu.dot_dimension_numbers<[1], [0], [0], [1], [0, 0, 1, 1], [], []>} : vector<8x8xf32>, vector<8x8xf32>, vector<8x8xf32> -> vector<8x8xf32>
    %307 = vector.extract_strided_slice %286 {offsets = [0, 8], sizes = [8, 8], strides = [1, 1]} : vector<16x96xf32> to vector<8x8xf32>
    %308 = vector.extract_strided_slice %286 {offsets = [0, 40], sizes = [8, 8], strides = [1, 1]} : vector<16x96xf32> to vector<8x8xf32>
    %309 = vector.extract_strided_slice %286 {offsets = [0, 72], sizes = [8, 8], strides = [1, 1]} : vector<16x96xf32> to vector<8x8xf32>
    "tpu.trace_start"() <{level = 10 : i32, message = "qd,kd->qk"}> : () -> ()
    %cst_122 = arith.constant dense<0.000000e+00> : vector<8x8xf32>
    %310 = tpu.matmul %307, %308, %cst_122 {dimension_numbers = #tpu.dot_dimension_numbers<[1], [1], [0], [0], [0, 0, 1, 0], [], []>} : vector<8x8xf32>, vector<8x8xf32>, vector<8x8xf32> -> vector<8x8xf32>
    "tpu.trace_stop"() : () -> ()
    %cst_123 = arith.constant 0.353553385 : f32
    %311 = vector.broadcast %cst_123 : f32 to vector<8x8xf32>
    %312 = arith.mulf %310, %311 : vector<8x8xf32>
    %313 = vector.broadcast %287 : vector<1x8xf32> to vector<8x8xf32>
    %314 = arith.addf %312, %313 : vector<8x8xf32>
    %cst_124 = arith.constant dense<0xFF800000> : vector<8xf32>
    %315 = vector.multi_reduction <maximumf>, %314, %cst_124 [1] : vector<8x8xf32> to vector<8xf32>
    %316 = vector.shape_cast %315 : vector<8xf32> to vector<8x1xf32>
    %317 = vector.broadcast %316 : vector<8x1xf32> to vector<8x8xf32>
    %318 = arith.subf %314, %317 : vector<8x8xf32>
    %319 = math.exp %318 : vector<8x8xf32>
    %cst_125 = arith.constant dense<0.000000e+00> : vector<8xf32>
    %320 = vector.multi_reduction <add>, %319, %cst_125 [1] : vector<8x8xf32> to vector<8xf32>
    %321 = vector.shape_cast %320 : vector<8xf32> to vector<8x1xf32>
    %322 = tpu.reciprocal %321 {approx = true} : vector<8x1xf32> -> vector<8x1xf32>
    %323 = vector.broadcast %322 : vector<8x1xf32> to vector<8x8xf32>
    %324 = arith.mulf %319, %323 : vector<8x8xf32>
    %cst_126 = arith.constant dense<0.000000e+00> : vector<8x8xf32>
    %325 = tpu.matmul %324, %309, %cst_126 {dimension_numbers = #tpu.dot_dimension_numbers<[1], [0], [0], [1], [0, 0, 1, 1], [], []>} : vector<8x8xf32>, vector<8x8xf32>, vector<8x8xf32> -> vector<8x8xf32>
    %326 = vector.extract_strided_slice %286 {offsets = [0, 16], sizes = [8, 8], strides = [1, 1]} : vector<16x96xf32> to vector<8x8xf32>
    %327 = vector.extract_strided_slice %286 {offsets = [0, 48], sizes = [8, 8], strides = [1, 1]} : vector<16x96xf32> to vector<8x8xf32>
    %328 = vector.extract_strided_slice %286 {offsets = [0, 80], sizes = [8, 8], strides = [1, 1]} : vector<16x96xf32> to vector<8x8xf32>
    "tpu.trace_start"() <{level = 10 : i32, message = "qd,kd->qk"}> : () -> ()
    %cst_127 = arith.constant dense<0.000000e+00> : vector<8x8xf32>
    %329 = tpu.matmul %326, %327, %cst_127 {dimension_numbers = #tpu.dot_dimension_numbers<[1], [1], [0], [0], [0, 0, 1, 0], [], []>} : vector<8x8xf32>, vector<8x8xf32>, vector<8x8xf32> -> vector<8x8xf32>
    "tpu.trace_stop"() : () -> ()
    %cst_128 = arith.constant 0.353553385 : f32
    %330 = vector.broadcast %cst_128 : f32 to vector<8x8xf32>
    %331 = arith.mulf %329, %330 : vector<8x8xf32>
    %332 = vector.broadcast %287 : vector<1x8xf32> to vector<8x8xf32>
    %333 = arith.addf %331, %332 : vector<8x8xf32>
    %cst_129 = arith.constant dense<0xFF800000> : vector<8xf32>
    %334 = vector.multi_reduction <maximumf>, %333, %cst_129 [1] : vector<8x8xf32> to vector<8xf32>
    %335 = vector.shape_cast %334 : vector<8xf32> to vector<8x1xf32>
    %336 = vector.broadcast %335 : vector<8x1xf32> to vector<8x8xf32>
    %337 = arith.subf %333, %336 : vector<8x8xf32>
    %338 = math.exp %337 : vector<8x8xf32>
    %cst_130 = arith.constant dense<0.000000e+00> : vector<8xf32>
    %339 = vector.multi_reduction <add>, %338, %cst_130 [1] : vector<8x8xf32> to vector<8xf32>
    %340 = vector.shape_cast %339 : vector<8xf32> to vector<8x1xf32>
    %341 = tpu.reciprocal %340 {approx = true} : vector<8x1xf32> -> vector<8x1xf32>
    %342 = vector.broadcast %341 : vector<8x1xf32> to vector<8x8xf32>
    %343 = arith.mulf %338, %342 : vector<8x8xf32>
    %cst_131 = arith.constant dense<0.000000e+00> : vector<8x8xf32>
    %344 = tpu.matmul %343, %328, %cst_131 {dimension_numbers = #tpu.dot_dimension_numbers<[1], [0], [0], [1], [0, 0, 1, 1], [], []>} : vector<8x8xf32>, vector<8x8xf32>, vector<8x8xf32> -> vector<8x8xf32>
    %345 = vector.extract_strided_slice %286 {offsets = [0, 24], sizes = [8, 8], strides = [1, 1]} : vector<16x96xf32> to vector<8x8xf32>
    %346 = vector.extract_strided_slice %286 {offsets = [0, 56], sizes = [8, 8], strides = [1, 1]} : vector<16x96xf32> to vector<8x8xf32>
    %347 = vector.extract_strided_slice %286 {offsets = [0, 88], sizes = [8, 8], strides = [1, 1]} : vector<16x96xf32> to vector<8x8xf32>
    "tpu.trace_start"() <{level = 10 : i32, message = "qd,kd->qk"}> : () -> ()
    %cst_132 = arith.constant dense<0.000000e+00> : vector<8x8xf32>
    %348 = tpu.matmul %345, %346, %cst_132 {dimension_numbers = #tpu.dot_dimension_numbers<[1], [1], [0], [0], [0, 0, 1, 0], [], []>} : vector<8x8xf32>, vector<8x8xf32>, vector<8x8xf32> -> vector<8x8xf32>
    "tpu.trace_stop"() : () -> ()
    %cst_133 = arith.constant 0.353553385 : f32
    %349 = vector.broadcast %cst_133 : f32 to vector<8x8xf32>
    %350 = arith.mulf %348, %349 : vector<8x8xf32>
    %351 = vector.broadcast %287 : vector<1x8xf32> to vector<8x8xf32>
    %352 = arith.addf %350, %351 : vector<8x8xf32>
    %cst_134 = arith.constant dense<0xFF800000> : vector<8xf32>
    %353 = vector.multi_reduction <maximumf>, %352, %cst_134 [1] : vector<8x8xf32> to vector<8xf32>
    %354 = vector.shape_cast %353 : vector<8xf32> to vector<8x1xf32>
    %355 = vector.broadcast %354 : vector<8x1xf32> to vector<8x8xf32>
    %356 = arith.subf %352, %355 : vector<8x8xf32>
    %357 = math.exp %356 : vector<8x8xf32>
    %cst_135 = arith.constant dense<0.000000e+00> : vector<8xf32>
    %358 = vector.multi_reduction <add>, %357, %cst_135 [1] : vector<8x8xf32> to vector<8xf32>
    %359 = vector.shape_cast %358 : vector<8xf32> to vector<8x1xf32>
    %360 = tpu.reciprocal %359 {approx = true} : vector<8x1xf32> -> vector<8x1xf32>
    %361 = vector.broadcast %360 : vector<8x1xf32> to vector<8x8xf32>
    %362 = arith.mulf %357, %361 : vector<8x8xf32>
    %cst_136 = arith.constant dense<0.000000e+00> : vector<8x8xf32>
    %363 = tpu.matmul %362, %347, %cst_136 {dimension_numbers = #tpu.dot_dimension_numbers<[1], [0], [0], [1], [0, 0, 1, 1], [], []>} : vector<8x8xf32>, vector<8x8xf32>, vector<8x8xf32> -> vector<8x8xf32>
    %364 = tpu.concatenate %306, %325, %344, %363 in 1 : vector<8x8xf32>, vector<8x8xf32>, vector<8x8xf32>, vector<8x8xf32> -> vector<8x32xf32>
    %365 = vector.extract_strided_slice %31 {offsets = [1, 0], sizes = [1, 8], strides = [1, 1]} : vector<2x8xf32> to vector<1x8xf32>
    %366 = vector.extract_strided_slice %286 {offsets = [8, 0], sizes = [8, 8], strides = [1, 1]} : vector<16x96xf32> to vector<8x8xf32>
    %367 = vector.extract_strided_slice %286 {offsets = [8, 32], sizes = [8, 8], strides = [1, 1]} : vector<16x96xf32> to vector<8x8xf32>
    %368 = vector.extract_strided_slice %286 {offsets = [8, 64], sizes = [8, 8], strides = [1, 1]} : vector<16x96xf32> to vector<8x8xf32>
    "tpu.trace_start"() <{level = 10 : i32, message = "qd,kd->qk"}> : () -> ()
    %cst_137 = arith.constant dense<0.000000e+00> : vector<8x8xf32>
    %369 = tpu.matmul %366, %367, %cst_137 {dimension_numbers = #tpu.dot_dimension_numbers<[1], [1], [0], [0], [0, 0, 1, 0], [], []>} : vector<8x8xf32>, vector<8x8xf32>, vector<8x8xf32> -> vector<8x8xf32>
    "tpu.trace_stop"() : () -> ()
    %cst_138 = arith.constant 0.353553385 : f32
    %370 = vector.broadcast %cst_138 : f32 to vector<8x8xf32>
    %371 = arith.mulf %369, %370 : vector<8x8xf32>
    %372 = vector.broadcast %365 : vector<1x8xf32> to vector<8x8xf32>
    %373 = arith.addf %371, %372 : vector<8x8xf32>
    %cst_139 = arith.constant dense<0xFF800000> : vector<8xf32>
    %374 = vector.multi_reduction <maximumf>, %373, %cst_139 [1] : vector<8x8xf32> to vector<8xf32>
    %375 = vector.shape_cast %374 : vector<8xf32> to vector<8x1xf32>
    %376 = vector.broadcast %375 : vector<8x1xf32> to vector<8x8xf32>
    %377 = arith.subf %373, %376 : vector<8x8xf32>
    %378 = math.exp %377 : vector<8x8xf32>
    %cst_140 = arith.constant dense<0.000000e+00> : vector<8xf32>
    %379 = vector.multi_reduction <add>, %378, %cst_140 [1] : vector<8x8xf32> to vector<8xf32>
    %380 = vector.shape_cast %379 : vector<8xf32> to vector<8x1xf32>
    %381 = tpu.reciprocal %380 {approx = true} : vector<8x1xf32> -> vector<8x1xf32>
    %382 = vector.broadcast %381 : vector<8x1xf32> to vector<8x8xf32>
    %383 = arith.mulf %378, %382 : vector<8x8xf32>
    %cst_141 = arith.constant dense<0.000000e+00> : vector<8x8xf32>
    %384 = tpu.matmul %383, %368, %cst_141 {dimension_numbers = #tpu.dot_dimension_numbers<[1], [0], [0], [1], [0, 0, 1, 1], [], []>} : vector<8x8xf32>, vector<8x8xf32>, vector<8x8xf32> -> vector<8x8xf32>
    %385 = vector.extract_strided_slice %286 {offsets = [8, 8], sizes = [8, 8], strides = [1, 1]} : vector<16x96xf32> to vector<8x8xf32>
    %386 = vector.extract_strided_slice %286 {offsets = [8, 40], sizes = [8, 8], strides = [1, 1]} : vector<16x96xf32> to vector<8x8xf32>
    %387 = vector.extract_strided_slice %286 {offsets = [8, 72], sizes = [8, 8], strides = [1, 1]} : vector<16x96xf32> to vector<8x8xf32>
    "tpu.trace_start"() <{level = 10 : i32, message = "qd,kd->qk"}> : () -> ()
    %cst_142 = arith.constant dense<0.000000e+00> : vector<8x8xf32>
    %388 = tpu.matmul %385, %386, %cst_142 {dimension_numbers = #tpu.dot_dimension_numbers<[1], [1], [0], [0], [0, 0, 1, 0], [], []>} : vector<8x8xf32>, vector<8x8xf32>, vector<8x8xf32> -> vector<8x8xf32>
    "tpu.trace_stop"() : () -> ()
    %cst_143 = arith.constant 0.353553385 : f32
    %389 = vector.broadcast %cst_143 : f32 to vector<8x8xf32>
    %390 = arith.mulf %388, %389 : vector<8x8xf32>
    %391 = vector.broadcast %365 : vector<1x8xf32> to vector<8x8xf32>
    %392 = arith.addf %390, %391 : vector<8x8xf32>
    %cst_144 = arith.constant dense<0xFF800000> : vector<8xf32>
    %393 = vector.multi_reduction <maximumf>, %392, %cst_144 [1] : vector<8x8xf32> to vector<8xf32>
    %394 = vector.shape_cast %393 : vector<8xf32> to vector<8x1xf32>
    %395 = vector.broadcast %394 : vector<8x1xf32> to vector<8x8xf32>
    %396 = arith.subf %392, %395 : vector<8x8xf32>
    %397 = math.exp %396 : vector<8x8xf32>
    %cst_145 = arith.constant dense<0.000000e+00> : vector<8xf32>
    %398 = vector.multi_reduction <add>, %397, %cst_145 [1] : vector<8x8xf32> to vector<8xf32>
    %399 = vector.shape_cast %398 : vector<8xf32> to vector<8x1xf32>
    %400 = tpu.reciprocal %399 {approx = true} : vector<8x1xf32> -> vector<8x1xf32>
    %401 = vector.broadcast %400 : vector<8x1xf32> to vector<8x8xf32>
    %402 = arith.mulf %397, %401 : vector<8x8xf32>
    %cst_146 = arith.constant dense<0.000000e+00> : vector<8x8xf32>
    %403 = tpu.matmul %402, %387, %cst_146 {dimension_numbers = #tpu.dot_dimension_numbers<[1], [0], [0], [1], [0, 0, 1, 1], [], []>} : vector<8x8xf32>, vector<8x8xf32>, vector<8x8xf32> -> vector<8x8xf32>
    %404 = vector.extract_strided_slice %286 {offsets = [8, 16], sizes = [8, 8], strides = [1, 1]} : vector<16x96xf32> to vector<8x8xf32>
    %405 = vector.extract_strided_slice %286 {offsets = [8, 48], sizes = [8, 8], strides = [1, 1]} : vector<16x96xf32> to vector<8x8xf32>
    %406 = vector.extract_strided_slice %286 {offsets = [8, 80], sizes = [8, 8], strides = [1, 1]} : vector<16x96xf32> to vector<8x8xf32>
    "tpu.trace_start"() <{level = 10 : i32, message = "qd,kd->qk"}> : () -> ()
    %cst_147 = arith.constant dense<0.000000e+00> : vector<8x8xf32>
    %407 = tpu.matmul %404, %405, %cst_147 {dimension_numbers = #tpu.dot_dimension_numbers<[1], [1], [0], [0], [0, 0, 1, 0], [], []>} : vector<8x8xf32>, vector<8x8xf32>, vector<8x8xf32> -> vector<8x8xf32>
    "tpu.trace_stop"() : () -> ()
    %cst_148 = arith.constant 0.353553385 : f32
    %408 = vector.broadcast %cst_148 : f32 to vector<8x8xf32>
    %409 = arith.mulf %407, %408 : vector<8x8xf32>
    %410 = vector.broadcast %365 : vector<1x8xf32> to vector<8x8xf32>
    %411 = arith.addf %409, %410 : vector<8x8xf32>
    %cst_149 = arith.constant dense<0xFF800000> : vector<8xf32>
    %412 = vector.multi_reduction <maximumf>, %411, %cst_149 [1] : vector<8x8xf32> to vector<8xf32>
    %413 = vector.shape_cast %412 : vector<8xf32> to vector<8x1xf32>
    %414 = vector.broadcast %413 : vector<8x1xf32> to vector<8x8xf32>
    %415 = arith.subf %411, %414 : vector<8x8xf32>
    %416 = math.exp %415 : vector<8x8xf32>
    %cst_150 = arith.constant dense<0.000000e+00> : vector<8xf32>
    %417 = vector.multi_reduction <add>, %416, %cst_150 [1] : vector<8x8xf32> to vector<8xf32>
    %418 = vector.shape_cast %417 : vector<8xf32> to vector<8x1xf32>
    %419 = tpu.reciprocal %418 {approx = true} : vector<8x1xf32> -> vector<8x1xf32>
    %420 = vector.broadcast %419 : vector<8x1xf32> to vector<8x8xf32>
    %421 = arith.mulf %416, %420 : vector<8x8xf32>
    %cst_151 = arith.constant dense<0.000000e+00> : vector<8x8xf32>
    %422 = tpu.matmul %421, %406, %cst_151 {dimension_numbers = #tpu.dot_dimension_numbers<[1], [0], [0], [1], [0, 0, 1, 1], [], []>} : vector<8x8xf32>, vector<8x8xf32>, vector<8x8xf32> -> vector<8x8xf32>
    %423 = vector.extract_strided_slice %286 {offsets = [8, 24], sizes = [8, 8], strides = [1, 1]} : vector<16x96xf32> to vector<8x8xf32>
    %424 = vector.extract_strided_slice %286 {offsets = [8, 56], sizes = [8, 8], strides = [1, 1]} : vector<16x96xf32> to vector<8x8xf32>
    %425 = vector.extract_strided_slice %286 {offsets = [8, 88], sizes = [8, 8], strides = [1, 1]} : vector<16x96xf32> to vector<8x8xf32>
    "tpu.trace_start"() <{level = 10 : i32, message = "qd,kd->qk"}> : () -> ()
    %cst_152 = arith.constant dense<0.000000e+00> : vector<8x8xf32>
    %426 = tpu.matmul %423, %424, %cst_152 {dimension_numbers = #tpu.dot_dimension_numbers<[1], [1], [0], [0], [0, 0, 1, 0], [], []>} : vector<8x8xf32>, vector<8x8xf32>, vector<8x8xf32> -> vector<8x8xf32>
    "tpu.trace_stop"() : () -> ()
    %cst_153 = arith.constant 0.353553385 : f32
    %427 = vector.broadcast %cst_153 : f32 to vector<8x8xf32>
    %428 = arith.mulf %426, %427 : vector<8x8xf32>
    %429 = vector.broadcast %365 : vector<1x8xf32> to vector<8x8xf32>
    %430 = arith.addf %428, %429 : vector<8x8xf32>
    %cst_154 = arith.constant dense<0xFF800000> : vector<8xf32>
    %431 = vector.multi_reduction <maximumf>, %430, %cst_154 [1] : vector<8x8xf32> to vector<8xf32>
    %432 = vector.shape_cast %431 : vector<8xf32> to vector<8x1xf32>
    %433 = vector.broadcast %432 : vector<8x1xf32> to vector<8x8xf32>
    %434 = arith.subf %430, %433 : vector<8x8xf32>
    %435 = math.exp %434 : vector<8x8xf32>
    %cst_155 = arith.constant dense<0.000000e+00> : vector<8xf32>
    %436 = vector.multi_reduction <add>, %435, %cst_155 [1] : vector<8x8xf32> to vector<8xf32>
    %437 = vector.shape_cast %436 : vector<8xf32> to vector<8x1xf32>
    %438 = tpu.reciprocal %437 {approx = true} : vector<8x1xf32> -> vector<8x1xf32>
    %439 = vector.broadcast %438 : vector<8x1xf32> to vector<8x8xf32>
    %440 = arith.mulf %435, %439 : vector<8x8xf32>
    %cst_156 = arith.constant dense<0.000000e+00> : vector<8x8xf32>
    %441 = tpu.matmul %440, %425, %cst_156 {dimension_numbers = #tpu.dot_dimension_numbers<[1], [0], [0], [1], [0, 0, 1, 1], [], []>} : vector<8x8xf32>, vector<8x8xf32>, vector<8x8xf32> -> vector<8x8xf32>
    %442 = tpu.concatenate %384, %403, %422, %441 in 1 : vector<8x8xf32>, vector<8x8xf32>, vector<8x8xf32>, vector<8x8xf32> -> vector<8x32xf32>
    %443 = tpu.concatenate %364, %442 in 0 : vector<8x32xf32>, vector<8x32xf32> -> vector<16x32xf32>
    %c1_157 = arith.constant 1 : index
    %c0_158 = arith.constant 0 : index
    %c0_159 = arith.constant 0 : index
    %444 = vector.load %arg8[%c1_157, %c0_158, %c0_159] : memref<2x32x32xf32, #tpu.memory_space<vmem>>, vector<1x32x32xf32>
    %445 = vector.shape_cast %444 : vector<1x32x32xf32> to vector<32x32xf32>
    %cst_160 = arith.constant dense<0.000000e+00> : vector<16x32xf32>
    %446 = tpu.matmul %443, %445, %cst_160 {dimension_numbers = #tpu.dot_dimension_numbers<[1], [0], [0], [1], [0, 0, 1, 1], [], []>} : vector<16x32xf32>, vector<32x32xf32>, vector<16x32xf32> -> vector<16x32xf32>
    %c1_161 = arith.constant 1 : index
    %c0_162 = arith.constant 0 : index
    %c0_163 = arith.constant 0 : index
    %447 = vector.load %arg9[%c1_161, %c0_162, %c0_163] : memref<2x1x32xf32, #tpu.memory_space<vmem>>, vector<1x1x32xf32>
    %448 = vector.shape_cast %447 : vector<1x1x32xf32> to vector<1x32xf32>
    %449 = vector.broadcast %448 : vector<1x32xf32> to vector<16x32xf32>
    %450 = arith.addf %446, %449 : vector<16x32xf32>
    %451 = arith.addf %450, %279 : vector<16x32xf32>
    %c1_164 = arith.constant 1 : index
    %c0_165 = arith.constant 0 : index
    %c0_166 = arith.constant 0 : index
    %452 = vector.load %arg10[%c1_164, %c0_165, %c0_166] : memref<2x1x32xf32, #tpu.memory_space<vmem>>, vector<1x1x32xf32>
    %453 = vector.shape_cast %452 : vector<1x1x32xf32> to vector<1x32xf32>
    %c1_167 = arith.constant 1 : index
    %c0_168 = arith.constant 0 : index
    %c0_169 = arith.constant 0 : index
    %454 = vector.load %arg11[%c1_167, %c0_168, %c0_169] : memref<2x1x32xf32, #tpu.memory_space<vmem>>, vector<1x1x32xf32>
    %455 = vector.shape_cast %454 : vector<1x1x32xf32> to vector<1x32xf32>
    %cst_170 = arith.constant dense<0.000000e+00> : vector<16xf32>
    %456 = vector.multi_reduction <add>, %451, %cst_170 [1] : vector<16x32xf32> to vector<16xf32>
    %457 = vector.shape_cast %456 : vector<16xf32> to vector<16x1xf32>
    %cst_171 = arith.constant 3.200000e+01 : f32
    %458 = vector.broadcast %cst_171 : f32 to vector<16x1xf32>
    %459 = arith.divf %457, %458 : vector<16x1xf32>
    %460 = vector.broadcast %459 : vector<16x1xf32> to vector<16x32xf32>
    %461 = arith.subf %451, %460 : vector<16x32xf32>
    %462 = arith.mulf %461, %461 : vector<16x32xf32>
    %cst_172 = arith.constant dense<0.000000e+00> : vector<16xf32>
    %463 = vector.multi_reduction <add>, %462, %cst_172 [1] : vector<16x32xf32> to vector<16xf32>
    %464 = vector.shape_cast %463 : vector<16xf32> to vector<16x1xf32>
    %cst_173 = arith.constant 3.200000e+01 : f32
    %465 = vector.broadcast %cst_173 : f32 to vector<16x1xf32>
    %466 = arith.divf %464, %465 : vector<16x1xf32>
    %cst_174 = arith.constant 9.99999996E-13 : f32
    %467 = vector.broadcast %cst_174 : f32 to vector<16x1xf32>
    %468 = arith.addf %466, %467 : vector<16x1xf32>
    %469 = math.rsqrt %468 : vector<16x1xf32>
    %470 = vector.broadcast %469 : vector<16x1xf32> to vector<16x32xf32>
    %471 = arith.mulf %461, %470 : vector<16x32xf32>
    %472 = vector.broadcast %453 : vector<1x32xf32> to vector<16x32xf32>
    %473 = arith.mulf %471, %472 : vector<16x32xf32>
    %474 = vector.broadcast %455 : vector<1x32xf32> to vector<16x32xf32>
    %475 = arith.addf %473, %474 : vector<16x32xf32>
    %c1_175 = arith.constant 1 : index
    %c0_176 = arith.constant 0 : index
    %c0_177 = arith.constant 0 : index
    %476 = vector.load %arg12[%c1_175, %c0_176, %c0_177] : memref<2x32x64xf32, #tpu.memory_space<vmem>>, vector<1x32x64xf32>
    %477 = vector.shape_cast %476 : vector<1x32x64xf32> to vector<32x64xf32>
    %cst_178 = arith.constant dense<0.000000e+00> : vector<16x64xf32>
    %478 = tpu.matmul %475, %477, %cst_178 {dimension_numbers = #tpu.dot_dimension_numbers<[1], [0], [0], [1], [0, 0, 1, 1], [], []>} : vector<16x32xf32>, vector<32x64xf32>, vector<16x64xf32> -> vector<16x64xf32>
    %c1_179 = arith.constant 1 : index
    %c0_180 = arith.constant 0 : index
    %c0_181 = arith.constant 0 : index
    %479 = vector.load %arg13[%c1_179, %c0_180, %c0_181] : memref<2x1x64xf32, #tpu.memory_space<vmem>>, vector<1x1x64xf32>
    %480 = vector.shape_cast %479 : vector<1x1x64xf32> to vector<1x64xf32>
    %481 = vector.broadcast %480 : vector<1x64xf32> to vector<16x64xf32>
    %482 = arith.addf %478, %481 : vector<16x64xf32>
    %cst_182 = arith.constant 5.000000e-01 : f32
    %483 = vector.broadcast %cst_182 : f32 to vector<16x64xf32>
    %484 = arith.mulf %483, %482 : vector<16x64xf32>
    %cst_183 = arith.constant 4.471500e-02 : f32
    %485 = vector.broadcast %cst_183 : f32 to vector<16x64xf32>
    %486 = arith.mulf %485, %482 : vector<16x64xf32>
    %487 = arith.mulf %486, %482 : vector<16x64xf32>
    %488 = arith.mulf %487, %482 : vector<16x64xf32>
    %489 = arith.addf %482, %488 : vector<16x64xf32>
    %cst_184 = arith.constant 0.797884583 : f32
    %490 = vector.broadcast %cst_184 : f32 to vector<16x64xf32>
    %491 = arith.mulf %490, %489 : vector<16x64xf32>
    %492 = math.tanh %491 : vector<16x64xf32>
    %cst_185 = arith.constant 1.000000e+00 : f32
    %493 = vector.broadcast %cst_185 : f32 to vector<16x64xf32>
    %494 = arith.addf %493, %492 : vector<16x64xf32>
    %495 = arith.mulf %484, %494 : vector<16x64xf32>
    %c1_186 = arith.constant 1 : index
    %c0_187 = arith.constant 0 : index
    %c0_188 = arith.constant 0 : index
    %496 = vector.load %arg14[%c1_186, %c0_187, %c0_188] : memref<2x64x32xf32, #tpu.memory_space<vmem>>, vector<1x64x32xf32>
    %497 = vector.shape_cast %496 : vector<1x64x32xf32> to vector<64x32xf32>
    %cst_189 = arith.constant dense<0.000000e+00> : vector<16x32xf32>
    %498 = tpu.matmul %495, %497, %cst_189 {dimension_numbers = #tpu.dot_dimension_numbers<[1], [0], [0], [1], [0, 0, 1, 1], [], []>} : vector<16x64xf32>, vector<64x32xf32>, vector<16x32xf32> -> vector<16x32xf32>
    %c1_190 = arith.constant 1 : index
    %c0_191 = arith.constant 0 : index
    %c0_192 = arith.constant 0 : index
    %499 = vector.load %arg15[%c1_190, %c0_191, %c0_192] : memref<2x1x32xf32, #tpu.memory_space<vmem>>, vector<1x1x32xf32>
    %500 = vector.shape_cast %499 : vector<1x1x32xf32> to vector<1x32xf32>
    %501 = vector.broadcast %500 : vector<1x32xf32> to vector<16x32xf32>
    %502 = arith.addf %498, %501 : vector<16x32xf32>
    %503 = arith.addf %502, %475 : vector<16x32xf32>
    %c1_193 = arith.constant 1 : index
    %c0_194 = arith.constant 0 : index
    %c0_195 = arith.constant 0 : index
    %504 = vector.load %arg16[%c1_193, %c0_194, %c0_195] : memref<2x1x32xf32, #tpu.memory_space<vmem>>, vector<1x1x32xf32>
    %505 = vector.shape_cast %504 : vector<1x1x32xf32> to vector<1x32xf32>
    %c1_196 = arith.constant 1 : index
    %c0_197 = arith.constant 0 : index
    %c0_198 = arith.constant 0 : index
    %506 = vector.load %arg17[%c1_196, %c0_197, %c0_198] : memref<2x1x32xf32, #tpu.memory_space<vmem>>, vector<1x1x32xf32>
    %507 = vector.shape_cast %506 : vector<1x1x32xf32> to vector<1x32xf32>
    %cst_199 = arith.constant dense<0.000000e+00> : vector<16xf32>
    %508 = vector.multi_reduction <add>, %503, %cst_199 [1] : vector<16x32xf32> to vector<16xf32>
    %509 = vector.shape_cast %508 : vector<16xf32> to vector<16x1xf32>
    %cst_200 = arith.constant 3.200000e+01 : f32
    %510 = vector.broadcast %cst_200 : f32 to vector<16x1xf32>
    %511 = arith.divf %509, %510 : vector<16x1xf32>
    %512 = vector.broadcast %511 : vector<16x1xf32> to vector<16x32xf32>
    %513 = arith.subf %503, %512 : vector<16x32xf32>
    %514 = arith.mulf %513, %513 : vector<16x32xf32>
    %cst_201 = arith.constant dense<0.000000e+00> : vector<16xf32>
    %515 = vector.multi_reduction <add>, %514, %cst_201 [1] : vector<16x32xf32> to vector<16xf32>
    %516 = vector.shape_cast %515 : vector<16xf32> to vector<16x1xf32>
    %cst_202 = arith.constant 3.200000e+01 : f32
    %517 = vector.broadcast %cst_202 : f32 to vector<16x1xf32>
    %518 = arith.divf %516, %517 : vector<16x1xf32>
    %cst_203 = arith.constant 9.99999996E-13 : f32
    %519 = vector.broadcast %cst_203 : f32 to vector<16x1xf32>
    %520 = arith.addf %518, %519 : vector<16x1xf32>
    %521 = math.rsqrt %520 : vector<16x1xf32>
    %522 = vector.broadcast %521 : vector<16x1xf32> to vector<16x32xf32>
    %523 = arith.mulf %513, %522 : vector<16x32xf32>
    %524 = vector.broadcast %505 : vector<1x32xf32> to vector<16x32xf32>
    %525 = arith.mulf %523, %524 : vector<16x32xf32>
    %526 = vector.broadcast %507 : vector<1x32xf32> to vector<16x32xf32>
    %527 = arith.addf %525, %526 : vector<16x32xf32>
    %528 = vector.extract_strided_slice %527 {offsets = [0, 0], sizes = [1, 32], strides = [1, 1]} : vector<16x32xf32> to vector<1x32xf32>
    %529 = vector.extract_strided_slice %527 {offsets = [8, 0], sizes = [1, 32], strides = [1, 1]} : vector<16x32xf32> to vector<1x32xf32>
    %530 = tpu.concatenate %528, %529 in 0 : vector<1x32xf32>, vector<1x32xf32> -> vector<2x32xf32>
    %c0_204 = arith.constant 0 : index
    %c0_205 = arith.constant 0 : index
    %531 = vector.load %arg18[%c0_204, %c0_205] : memref<2x32xf32, #tpu.memory_space<vmem>>, vector<2x32xf32>
    tpu.vector_store %arg18[%c0_204, %c0_205], %530 {strides = array<i32>} : memref<2x32xf32, #tpu.memory_space<vmem>>, vector<2x32xf32>,
    return
  }
}

</mosaic_0001>

<llo_original>
// kernel: simcse_forward.1
$region0: #{simcse_forward.1}
  #allocation0 [shape = 'u32[]', space=smem, size = 0x4, offset = 0x4, fixed_abs, tag = 'smem constant byte address 0x4 - core index']
  #allocation1 [shape = 'u32[144,128]{1,0:T(1,128)}', space=vmem, size = 0x12000, scoped, tag = 'internal scratch']
  %s0 = inlined_call_operand.vmem [shape: f32[16,32], index: 0, kind: input, shape index: {}]
  %s1 = inlined_call_operand.vmem [shape: f32[16,32], index: 1, kind: input, shape index: {}]
  %s2 = inlined_call_operand.vmem [shape: f32[16,32], index: 2, kind: input, shape index: {}]
  %s3 = inlined_call_operand.vmem [shape: f32[2,8], index: 3, kind: input, shape index: {}]
  %s4 = inlined_call_operand.vmem [shape: f32[1,32], index: 4, kind: input, shape index: {}]
  %s5 = inlined_call_operand.vmem [shape: f32[1,32], index: 5, kind: input, shape index: {}]
  %s6 = inlined_call_operand.vmem [shape: f32[2,32,96], index: 6, kind: input, shape index: {}]
  %s7 = inlined_call_operand.vmem [shape: f32[2,1,96], index: 7, kind: input, shape index: {}]
  %s8 = inlined_call_operand.vmem [shape: f32[2,32,32], index: 8, kind: input, shape index: {}]
  %s9 = inlined_call_operand.vmem [shape: f32[2,1,32], index: 9, kind: input, shape index: {}]
  %s10 = inlined_call_operand.vmem [shape: f32[2,1,32], index: 10, kind: input, shape index: {}]
  %s11 = inlined_call_operand.vmem [shape: f32[2,1,32], index: 11, kind: input, shape index: {}]
  %s12 = inlined_call_operand.vmem [shape: f32[2,32,64], index: 12, kind: input, shape index: {}]
  %s13 = inlined_call_operand.vmem [shape: f32[2,1,64], index: 13, kind: input, shape index: {}]
  %s14 = inlined_call_operand.vmem [shape: f32[2,64,32], index: 14, kind: input, shape index: {}]
  %s15 = inlined_call_operand.vmem [shape: f32[2,1,32], index: 15, kind: input, shape index: {}]
  %s16 = inlined_call_operand.vmem [shape: f32[2,1,32], index: 16, kind: input, shape index: {}]
  %s17 = inlined_call_operand.vmem [shape: f32[2,1,32], index: 17, kind: input, shape index: {}]
  %s18 = inlined_call_operand.hbm [shape: f32[2,32], index: 18, kind: output, shape index: {}]
  %s19 = sld [smem:[#allocation0]]
  $region82: #{simcse_forward.1} parent=0
    _
  %s21 = ssub.s32 1, %s19
  %s22 = scalar_select 0, %s21, %s19
  $region1: #{simcse_forward.1} parent=0
    #allocation2 [shape = 'u8[1024]{0}', space=vmem, size = 0x400, scoped, tag = 'output window, operand 0, single buffered']
    #allocation3 [shape = 's32[1]{0}', space=sflag, size = 0x4, scoped, tag = 'scoped memory for simcse_forward.1']
    %23 = vsyncpa [#allocation3], 0
    // Predicated region
    $region2: #{simcse_forward.1} parent=1 // pred_check
      _
    $region3: #{simcse_forward.1} parent=1 // pred_check_branch
      %25 = sbr.rel (0) target = $region5
    $region4: #{simcse_forward.1} parent=1 // pred_region
      _
    $region5: #{simcse_forward.1} parent=1 // pred_fallthru
      _
    // Predicated region
    $region6: #{simcse_forward.1} parent=1 // pred_check
      _
    $region7: #{simcse_forward.1} parent=1 // pred_check_branch
      %27 = sbr.rel (0) target = $region9
    $region8: #{simcse_forward.1} parent=1 // pred_region
      _
    $region9: #{simcse_forward.1} parent=1 // pred_fallthru
      _
    // Predicated region
    $region10: #{simcse_forward.1} parent=1 // pred_check
      _
    $region11: #{simcse_forward.1} parent=1 // pred_check_branch
      %29 = sbr.rel (0) target = $region13
    $region12: #{simcse_forward.1} parent=1 // pred_region
      _
    $region13: #{simcse_forward.1} parent=1 // pred_fallthru
      _
    // Predicated region
    $region14: #{simcse_forward.1} parent=1 // pred_check
      _
    $region15: #{simcse_forward.1} parent=1 // pred_check_branch
      %31 = sbr.rel (0) target = $region17
    $region16: #{simcse_forward.1} parent=1 // pred_region
      _
    $region17: #{simcse_forward.1} parent=1 // pred_fallthru
      _
    // Predicated region
    $region18: #{simcse_forward.1} parent=1 // pred_check
      _
    $region19: #{simcse_forward.1} parent=1 // pred_check_branch
      %33 = sbr.rel (0) target = $region21
    $region20: #{simcse_forward.1} parent=1 // pred_region
      _
    $region21: #{simcse_forward.1} parent=1 // pred_fallthru
      _
    // Predicated region
    $region22: #{simcse_forward.1} parent=1 // pred_check
      _
    $region23: #{simcse_forward.1} parent=1 // pred_check_branch
      %35 = sbr.rel (0) target = $region25
    $region24: #{simcse_forward.1} parent=1 // pred_region
      _
    $region25: #{simcse_forward.1} parent=1 // pred_fallthru
      _
    // Predicated region
    $region26: #{simcse_forward.1} parent=1 // pred_check
      _
    $region27: #{simcse_forward.1} parent=1 // pred_check_branch
      %37 = sbr.rel (0) target = $region29
    $region28: #{simcse_forward.1} parent=1 // pred_region
      _
    $region29: #{simcse_forward.1} parent=1 // pred_fallthru
      _
    // Predicated region
    $region30: #{simcse_forward.1} parent=1 // pred_check
      _
    $region31: #{simcse_forward.1} parent=1 // pred_check_branch
      %39 = sbr.rel (0) target = $region33
    $region32: #{simcse_forward.1} parent=1 // pred_region
      _
    $region33: #{simcse_forward.1} parent=1 // pred_fallthru
      _
    // Predicated region
    $region34: #{simcse_forward.1} parent=1 // pred_check
      _
    $region35: #{simcse_forward.1} parent=1 // pred_check_branch
      %41 = sbr.rel (0) target = $region37
    $region36: #{simcse_forward.1} parent=1 // pred_region
      _
    $region37: #{simcse_forward.1} parent=1 // pred_fallthru
      _
    // Predicated region
    $region38: #{simcse_forward.1} parent=1 // pred_check
      _
    $region39: #{simcse_forward.1} parent=1 // pred_check_branch
      %43 = sbr.rel (0) target = $region41
    $region40: #{simcse_forward.1} parent=1 // pred_region
      _
    $region41: #{simcse_forward.1} parent=1 // pred_fallthru
      _
    // Predicated region
    $region42: #{simcse_forward.1} parent=1 // pred_check
      _
    $region43: #{simcse_forward.1} parent=1 // pred_check_branch
      %45 = sbr.rel (0) target = $region45
    $region44: #{simcse_forward.1} parent=1 // pred_region
      _
    $region45: #{simcse_forward.1} parent=1 // pred_fallthru
      _
    // Predicated region
    $region46: #{simcse_forward.1} parent=1 // pred_check
      _
    $region47: #{simcse_forward.1} parent=1 // pred_check_branch
      %47 = sbr.rel (0) target = $region49
    $region48: #{simcse_forward.1} parent=1 // pred_region
      _
    $region49: #{simcse_forward.1} parent=1 // pred_fallthru
      _
    // Predicated region
    $region50: #{simcse_forward.1} parent=1 // pred_check
      _
    $region51: #{simcse_forward.1} parent=1 // pred_check_branch
      %49 = sbr.rel (0) target = $region53
    $region52: #{simcse_forward.1} parent=1 // pred_region
      _
    $region53: #{simcse_forward.1} parent=1 // pred_fallthru
      _
    // Predicated region
    $region54: #{simcse_forward.1} parent=1 // pred_check
      _
    $region55: #{simcse_forward.1} parent=1 // pred_check_branch
      %51 = sbr.rel (0) target = $region57
    $region56: #{simcse_forward.1} parent=1 // pred_region
      _
    $region57: #{simcse_forward.1} parent=1 // pred_fallthru
      _
    // Predicated region
    $region58: #{simcse_forward.1} parent=1 // pred_check
      _
    $region59: #{simcse_forward.1} parent=1 // pred_check_branch
      %53 = sbr.rel (0) target = $region61
    $region60: #{simcse_forward.1} parent=1 // pred_region
      _
    $region61: #{simcse_forward.1} parent=1 // pred_fallthru
      _
    // Predicated region
    $region62: #{simcse_forward.1} parent=1 // pred_check
      _
    $region63: #{simcse_forward.1} parent=1 // pred_check_branch
      %55 = sbr.rel (0) target = $region65
    $region64: #{simcse_forward.1} parent=1 // pred_region
      _
    $region65: #{simcse_forward.1} parent=1 // pred_fallthru
      _
    // Predicated region
    $region66: #{simcse_forward.1} parent=1 // pred_check
      _
    $region67: #{simcse_forward.1} parent=1 // pred_check_branch
      %57 = sbr.rel (0) target = $region69
    $region68: #{simcse_forward.1} parent=1 // pred_region
      _
    $region69: #{simcse_forward.1} parent=1 // pred_fallthru
      _
    // Predicated region
    $region70: #{simcse_forward.1} parent=1 // pred_check
      _
    $region71: #{simcse_forward.1} parent=1 // pred_check_branch
      %59 = sbr.rel (0) target = $region73
    $region72: #{simcse_forward.1} parent=1 // pred_region
      _
    $region73: #{simcse_forward.1} parent=1 // pred_fallthru
      _
    %v60 = vld [vmem:[%s0] sm:$0xff]
    %v61 = vld [vmem:[%s0 + $0x8] sm:$0xff]
    %v62 = vld [vmem:[%s1] sm:$0xff]
    %v63 = vld [vmem:[%s1 + $0x8] sm:$0xff]
    %v64 = vadd.f32 %v60, %v62
    %v65 = vadd.f32 %v61, %v63
    %v66 = vld [vmem:[%s2] sm:$0xff]
    %v67 = vld [vmem:[%s2 + $0x8] sm:$0xff]
    %v68 = vadd.f32 %v64, %v66
    %v69 = vadd.f32 %v65, %v67
    %v70 = vld [vmem:[%s4] sm:$0x1]
    %v71 = vld [vmem:[%s5] sm:$0x1]
    %vm72 = vcmask 261120
    %v73 = vsel %vm72, %v68, 0.0
    %74 = vadd.xlane.f32.xlu0 %v73
    %v75 = vpop.xlane.xlu0 %74
    %v76 = vsel %vm72, %v69, 0.0
    %77 = vadd.xlane.f32.xlu0 %v76
    %v78 = vpop.xlane.xlu0 %77
    %v79 = vrcp.pop 32.0
    %v80 = vmul.f32 %v75, %v79
    %v81 = vmul.f32 %v78, %v79
    %v82 = vsub.f32 %v68, %v80
    %v83 = vsub.f32 %v69, %v81
    %v84 = vmul.f32 %v82, %v82
    %v85 = vmul.f32 %v83, %v83
    %v86 = vsel %vm72, %v84, 0.0
    %87 = vadd.xlane.f32.xlu0 %v86
    %v88 = vpop.xlane.xlu0 %87
    %v89 = vsel %vm72, %v85, 0.0
    %90 = vadd.xlane.f32.xlu0 %v89
    %v91 = vpop.xlane.xlu0 %90
    %v92 = vmul.f32 %v88, %v79
    %v93 = vmul.f32 %v91, %v79
    %v94 = vadd.f32 %v92, 1e-12
    %v95 = vadd.f32 %v93, 1e-12
    %v96 = vrsqrt.pop %v94
    %v97 = vrsqrt.pop %v95
    %v98 = vmul.f32 %v82, %v96
    %v99 = vmul.f32 %v83, %v97
    %v101 = vlaneseq
    %v102 = vshrl.u32 %v101, 7
    %v103 = vsub.s32 0, %v102
    %v104 = vrot.slane %v70, %v103
    %v106 = vmul.f32 %v98, %v104
    %v107 = vmul.f32 %v99, %v104
    %v109 = vlaneseq
    %v110 = vshrl.u32 %v109, 7
    %v111 = vsub.s32 0, %v110
    %v112 = vrot.slane %v71, %v111
    %v114 = vadd.f32 %v106, %v112
    %v115 = vadd.f32 %v107, %v112
    %v116 = vld [vmem:[%s3] sm:$0x3]
    %v117 = vsub.f32 1.0, %v116
    %v118 = vmul.f32 %v117, -10000.0
    %v119 = vld [vmem:[%s6] sm:$0xff]
    %v120 = vld [vmem:[%s6 + $0x8] sm:$0xff]
    %v121 = vld [vmem:[%s6 + $0x10] sm:$0xff]
    %v122 = vld [vmem:[%s6 + $0x18] sm:$0xff]
    %v123 = vld [vmem:[%s7] sm:$0x1]
    %v125 = vlaneseq
    %v126 = vshrl.u32 %v125, 7
    %v127 = vsub.s32 0, %v126
    %v128 = vrot.slane %v123, %v127
    %v131 = vsel %vm72, %v114, 0
    %v134 = vsel %vm72, %v115, 0
    %136 = vmatprep.subr.mxu0 0.0
    %137 = vmatpush1.msra.mxu0 %v119
    %138 = vmatprep.subr.mxu0 0.0
    %139 = vmatpush1.msra.mxu0 %v120
    %140 = vmatprep.subr.mxu0 0.0
    %141 = vmatpush1.msra.mxu0 %v121
    %142 = vmatprep.subr.mxu0 0.0
    %143 = vmatpush1.msra.mxu0 %v122
    %144 = vmatprep.subr.mxu0 0.0
    %145 = vmatpush1.msra.mxu0 0.0
    %146 = vmatprep.subr.mxu0 0.0
    %147 = vmatpush1.msra.mxu0 0.0
    %148 = vmatprep.subr.mxu0 0.0
    %149 = vmatpush1.msra.mxu0 0.0
    %150 = vmatprep.subr.mxu0 0.0
    %151 = vmatpush1.msra.mxu0 0.0
    %152 = vmatprep.subr.mxu0 0.0
    %153 = vmatpush1.msra.mxu0 0.0
    %154 = vmatprep.subr.mxu0 0.0
    %155 = vmatpush1.msra.mxu0 0.0
    %156 = vmatprep.subr.mxu0 0.0
    %157 = vmatpush1.msra.mxu0 0.0
    %158 = vmatprep.subr.mxu0 0.0
    %159 = vmatpush1.msra.mxu0 0.0
    %160 = vmatprep.subr.mxu0 0.0
    %161 = vmatpush1.msra.mxu0 0.0
    %162 = vmatprep.subr.mxu0 0.0
    %163 = vmatpush1.msra.mxu0 0.0
    %164 = vmatprep.subr.mxu0 0.0
    %165 = vmatpush1.msra.mxu0 0.0
    %166 = vmatprep.subr.mxu0 0.0
    %167 = vmatpush1.msra.mxu0 0.0
    %168 = vmatprep.subr.mxu0 0.0
    %169 = vmatpush1.msra.mxu0 0.0
    %170 = vmatprep.subr.mxu0 0.0
    %171 = vmatpush1.msra.mxu0 0.0
    %172 = vmatprep.subr.mxu0 0.0
    %173 = vmatpush1.msra.mxu0 0.0
    %174 = vmatprep.subr.mxu0 0.0
    %175 = vmatpush1.msra.mxu0 0.0
    %176 = vmatprep.subr.mxu0 0.0
    %177 = vmatpush1.msra.mxu0 0.0
    %178 = vmatprep.subr.mxu0 0.0
    %179 = vmatpush1.msra.mxu0 0.0
    %180 = vmatprep.subr.mxu0 0.0
    %181 = vmatpush1.msra.mxu0 0.0
    %182 = vmatprep.subr.mxu0 0.0
    %183 = vmatpush1.msra.mxu0 0.0
    %184 = vmatprep.subr.mxu0 0.0
    %185 = vmatpush1.msra.mxu0 0.0
    %186 = vmatprep.subr.mxu0 0.0
    %187 = vmatpush1.msra.mxu0 0.0
    %188 = vmatprep.subr.mxu0 0.0
    %189 = vmatpush1.msra.mxu0 0.0
    %190 = vmatprep.subr.mxu0 0.0
    %191 = vmatpush1.msra.mxu0 0.0
    %192 = vmatprep.subr.mxu0 0.0
    %193 = vmatpush1.msra.mxu0 0.0
    %194 = vmatprep.subr.mxu0 0.0
    %195 = vmatpush1.msra.mxu0 0.0
    %196 = vmatprep.subr.mxu0 0.0
    %197 = vmatpush1.msra.mxu0 0.0
    %198 = vmatprep.subr.mxu0 0.0
    %199 = vmatpush1.msra.mxu0 0.0
    %200 = vmatprep.mubr.f32.mxu0 0.0
    %201 = vmatmul.mubr.f32.gmra.mrb[0].mxu0 %v131
    %v202 = vpop.f32.mrb[0].mxu0
    %v203 = vadd.f32 %v128, %v202
    %v204 = vpop.f32.mrb[0].mxu0
    %205 = vmatprep.mubr.f32.mxu0 0.0
    %206 = vmatmul.mubr.f32.gmra.mrb[0].mxu0 %v134
    %v207 = vpop.f32.mrb[0].mxu0
    %v208 = vadd.f32 %v128, %v207
    %v209 = vpop.f32.mrb[0].mxu0
    %210 = vdwg.mxu0
    %212 = vrot.lane.b32.xlu0 %v203, 96
    %v213 = vpop.permute.xlu0 %212
    %vm214 = vcmask 64512
    %v215 = vsel %vm214, %v203, 0
    %v217 = vsel %vm214, %v213, 0
    %219 = vmatprep.subr.mxu0 0.0
    %220 = vmatpush1.xpose.msra.mxu0 %v217
    %221 = vmatprep.subr.mxu0 0.0
    %222 = vmatpush1.xpose.msra.mxu0 0.0
    %223 = vmatprep.subr.mxu0 0.0
    %224 = vmatpush1.xpose.msra.mxu0 0.0
    %225 = vmatprep.subr.mxu0 0.0
    %226 = vmatpush1.xpose.msra.mxu0 0.0
    %227 = vmatprep.subr.mxu0 0.0
    %228 = vmatpush1.xpose.msra.mxu0 0.0
    %229 = vmatprep.subr.mxu0 0.0
    %230 = vmatpush1.xpose.msra.mxu0 0.0
    %231 = vmatprep.subr.mxu0 0.0
    %232 = vmatpush1.xpose.msra.mxu0 0.0
    %233 = vmatprep.subr.mxu0 0.0
    %234 = vmatpush1.xpose.msra.mxu0 0.0
    %235 = vmatprep.subr.mxu0 0.0
    %236 = vmatpush1.xpose.msra.mxu0 0.0
    %237 = vmatprep.subr.mxu0 0.0
    %238 = vmatpush1.xpose.msra.mxu0 0.0
    %239 = vmatprep.subr.mxu0 0.0
    %240 = vmatpush1.xpose.msra.mxu0 0.0
    %241 = vmatprep.subr.mxu0 0.0
    %242 = vmatpush1.xpose.msra.mxu0 0.0
    %243 = vmatprep.subr.mxu0 0.0
    %244 = vmatpush1.xpose.msra.mxu0 0.0
    %245 = vmatprep.subr.mxu0 0.0
    %246 = vmatpush1.xpose.msra.mxu0 0.0
    %247 = vmatprep.subr.mxu0 0.0
    %248 = vmatpush1.xpose.msra.mxu0 0.0
    %249 = vmatprep.subr.mxu0 0.0
    %250 = vmatpush1.xpose.msra.mxu0 0.0
    %251 = vmatprep.subr.mxu0 0.0
    %252 = vmatpush1.xpose.msra.mxu0 0.0
    %253 = vmatprep.subr.mxu0 0.0
    %254 = vmatpush1.xpose.msra.mxu0 0.0
    %255 = vmatprep.subr.mxu0 0.0
    %256 = vmatpush1.xpose.msra.mxu0 0.0
    %257 = vmatprep.subr.mxu0 0.0
    %258 = vmatpush1.xpose.msra.mxu0 0.0
    %259 = vmatprep.subr.mxu0 0.0
    %260 = vmatpush1.xpose.msra.mxu0 0.0
    %261 = vmatprep.subr.mxu0 0.0
    %262 = vmatpush1.xpose.msra.mxu0 0.0
    %263 = vmatprep.subr.mxu0 0.0
    %264 = vmatpush1.xpose.msra.mxu0 0.0
    %265 = vmatprep.subr.mxu0 0.0
    %266 = vmatpush1.xpose.msra.mxu0 0.0
    %267 = vmatprep.subr.mxu0 0.0
    %268 = vmatpush1.xpose.msra.mxu0 0.0
    %269 = vmatprep.subr.mxu0 0.0
    %270 = vmatpush1.xpose.msra.mxu0 0.0
    %271 = vmatprep.subr.mxu0 0.0
    %272 = vmatpush1.xpose.msra.mxu0 0.0
    %273 = vmatprep.subr.mxu0 0.0
    %274 = vmatpush1.xpose.msra.mxu0 0.0
    %275 = vmatprep.subr.mxu0 0.0
    %276 = vmatpush1.xpose.msra.mxu0 0.0
    %277 = vmatprep.subr.mxu0 0.0
    %278 = vmatpush1.xpose.msra.mxu0 0.0
    %279 = vmatprep.subr.mxu0 0.0
    %280 = vmatpush1.xpose.msra.mxu0 0.0
    %281 = vmatprep.subr.mxu0 0.0
    %282 = vmatpush1.xpose.msra.mxu0 0.0
    %283 = vmatprep.mubr.f32.mxu0 0.0
    %284 = vmatmul.mubr.f32.gmra.mrb[0].mxu0 %v215
    %v285 = vpop.f32.mrb[0].mxu0
    %v286 = vadd.f32 0.0, %v285
    %v287 = vpop.f32.mrb[0].mxu0
    %288 = vdwg.mxu0
    %v289 = vmul.f32 %v286, 0.35355338
    %v290 = vlaneseq
    %v291 = vshrl.u32 %v290, 7
    %v292 = vsub.s32 0, %v291
    %v293 = vrot.slane %v118, %v292
    %v294 = vadd.f32 %v289, %v293
    %v295 = vsel %vm214, %v294, -inf
    %296 = vmax.xlane.f32.xlu0 %v295
    %v297 = vpop.xlane.xlu0 %296
    %v298 = vsub.f32 %v294, %v297
    %v299 = vmul.f32 %v298, 1.442695
    %v300 = vpow.pop %v299
    %v301 = vsel %vm214, %v300, 0.0
    %302 = vadd.xlane.f32.xlu0 %v301
    %v303 = vpop.xlane.xlu0 %302
    %v304 = vrcp.pop %v303
    %v305 = vmul.f32 %v300, %v304
    %306 = vrot.lane.b32.xlu0 %v203, 64
    %v307 = vpop.permute.xlu0 %306
    %v310 = vsel %vm214, %v305, 0
    %312 = vmatprep.subr.mxu0 0.0
    %313 = vmatpush1.msra.mxu0 %v307
    %314 = vmatprep.subr.mxu0 0.0
    %315 = vmatpush1.msra.mxu0 0.0
    %316 = vmatprep.subr.mxu0 0.0
    %317 = vmatpush1.msra.mxu0 0.0
    %318 = vmatprep.subr.mxu0 0.0
    %319 = vmatpush1.msra.mxu0 0.0
    %320 = vmatprep.subr.mxu0 0.0
    %321 = vmatpush1.msra.mxu0 0.0
    %322 = vmatprep.subr.mxu0 0.0
    %323 = vmatpush1.msra.mxu0 0.0
    %324 = vmatprep.subr.mxu0 0.0
    %325 = vmatpush1.msra.mxu0 0.0
    %326 = vmatprep.subr.mxu0 0.0
    %327 = vmatpush1.msra.mxu0 0.0
    %328 = vmatprep.subr.mxu0 0.0
    %329 = vmatpush1.msra.mxu0 0.0
    %330 = vmatprep.subr.mxu0 0.0
    %331 = vmatpush1.msra.mxu0 0.0
    %332 = vmatprep.subr.mxu0 0.0
    %333 = vmatpush1.msra.mxu0 0.0
    %334 = vmatprep.subr.mxu0 0.0
    %335 = vmatpush1.msra.mxu0 0.0
    %336 = vmatprep.subr.mxu0 0.0
    %337 = vmatpush1.msra.mxu0 0.0
    %338 = vmatprep.subr.mxu0 0.0
    %339 = vmatpush1.msra.mxu0 0.0
    %340 = vmatprep.subr.mxu0 0.0
    %341 = vmatpush1.msra.mxu0 0.0
    %342 = vmatprep.subr.mxu0 0.0
    %343 = vmatpush1.msra.mxu0 0.0
    %344 = vmatprep.subr.mxu0 0.0
    %345 = vmatpush1.msra.mxu0 0.0
    %346 = vmatprep.subr.mxu0 0.0
    %347 = vmatpush1.msra.mxu0 0.0
    %348 = vmatprep.subr.mxu0 0.0
    %349 = vmatpush1.msra.mxu0 0.0
    %350 = vmatprep.subr.mxu0 0.0
    %351 = vmatpush1.msra.mxu0 0.0
    %352 = vmatprep.subr.mxu0 0.0
    %353 = vmatpush1.msra.mxu0 0.0
    %354 = vmatprep.subr.mxu0 0.0
    %355 = vmatpush1.msra.mxu0 0.0
    %356 = vmatprep.subr.mxu0 0.0
    %357 = vmatpush1.msra.mxu0 0.0
    %358 = vmatprep.subr.mxu0 0.0
    %359 = vmatpush1.msra.mxu0 0.0
    %360 = vmatprep.subr.mxu0 0.0
    %361 = vmatpush1.msra.mxu0 0.0
    %362 = vmatprep.subr.mxu0 0.0
    %363 = vmatpush1.msra.mxu0 0.0
    %364 = vmatprep.subr.mxu0 0.0
    %365 = vmatpush1.msra.mxu0 0.0
    %366 = vmatprep.subr.mxu0 0.0
    %367 = vmatpush1.msra.mxu0 0.0
    %368 = vmatprep.subr.mxu0 0.0
    %369 = vmatpush1.msra.mxu0 0.0
    %370 = vmatprep.subr.mxu0 0.0
    %371 = vmatpush1.msra.mxu0 0.0
    %372 = vmatprep.subr.mxu0 0.0
    %373 = vmatpush1.msra.mxu0 0.0
    %374 = vmatprep.subr.mxu0 0.0
    %375 = vmatpush1.msra.mxu0 0.0
    %376 = vmatprep.mubr.f32.mxu0 0.0
    %377 = vmatmul.mubr.f32.gmra.mrb[0].mxu0 %v310
    %v378 = vpop.f32.mrb[0].mxu0
    %v379 = vadd.f32 0.0, %v378
    %v380 = vpop.f32.mrb[0].mxu0
    %381 = vdwg.mxu0
    %382 = vrot.lane.b32.xlu0 %v203, 120
    %v383 = vpop.permute.xlu0 %382
    %384 = vrot.lane.b32.xlu0 %v203, 88
    %v385 = vpop.permute.xlu0 %384
    %v386 = vsel %vm214, %v383, 0
    %v388 = vsel %vm214, %v385, 0
    %390 = vmatprep.subr.mxu0 0.0
    %391 = vmatpush1.xpose.msra.mxu0 %v388
    %392 = vmatprep.subr.mxu0 0.0
    %393 = vmatpush1.xpose.msra.mxu0 0.0
    %394 = vmatprep.subr.mxu0 0.0
    %395 = vmatpush1.xpose.msra.mxu0 0.0
    %396 = vmatprep.subr.mxu0 0.0
    %397 = vmatpush1.xpose.msra.mxu0 0.0
    %398 = vmatprep.subr.mxu0 0.0
    %399 = vmatpush1.xpose.msra.mxu0 0.0
    %400 = vmatprep.subr.mxu0 0.0
    %401 = vmatpush1.xpose.msra.mxu0 0.0
    %402 = vmatprep.subr.mxu0 0.0
    %403 = vmatpush1.xpose.msra.mxu0 0.0
    %404 = vmatprep.subr.mxu0 0.0
    %405 = vmatpush1.xpose.msra.mxu0 0.0
    %406 = vmatprep.subr.mxu0 0.0
    %407 = vmatpush1.xpose.msra.mxu0 0.0
    %408 = vmatprep.subr.mxu0 0.0
    %409 = vmatpush1.xpose.msra.mxu0 0.0
    %410 = vmatprep.subr.mxu0 0.0
    %411 = vmatpush1.xpose.msra.mxu0 0.0
    %412 = vmatprep.subr.mxu0 0.0
    %413 = vmatpush1.xpose.msra.mxu0 0.0
    %414 = vmatprep.subr.mxu0 0.0
    %415 = vmatpush1.xpose.msra.mxu0 0.0
    %416 = vmatprep.subr.mxu0 0.0
    %417 = vmatpush1.xpose.msra.mxu0 0.0
    %418 = vmatprep.subr.mxu0 0.0
    %419 = vmatpush1.xpose.msra.mxu0 0.0
    %420 = vmatprep.subr.mxu0 0.0
    %421 = vmatpush1.xpose.msra.mxu0 0.0
    %422 = vmatprep.subr.mxu0 0.0
    %423 = vmatpush1.xpose.msra.mxu0 0.0
    %424 = vmatprep.subr.mxu0 0.0
    %425 = vmatpush1.xpose.msra.mxu0 0.0
    %426 = vmatprep.subr.mxu0 0.0
    %427 = vmatpush1.xpose.msra.mxu0 0.0
    %428 = vmatprep.subr.mxu0 0.0
    %429 = vmatpush1.xpose.msra.mxu0 0.0
    %430 = vmatprep.subr.mxu0 0.0
    %431 = vmatpush1.xpose.msra.mxu0 0.0
    %432 = vmatprep.subr.mxu0 0.0
    %433 = vmatpush1.xpose.msra.mxu0 0.0
    %434 = vmatprep.subr.mxu0 0.0
    %435 = vmatpush1.xpose.msra.mxu0 0.0
    %436 = vmatprep.subr.mxu0 0.0
    %437 = vmatpush1.xpose.msra.mxu0 0.0
    %438 = vmatprep.subr.mxu0 0.0
    %439 = vmatpush1.xpose.msra.mxu0 0.0
    %440 = vmatprep.subr.mxu0 0.0
    %441 = vmatpush1.xpose.msra.mxu0 0.0
    %442 = vmatprep.subr.mxu0 0.0
    %443 = vmatpush1.xpose.msra.mxu0 0.0
    %444 = vmatprep.subr.mxu0 0.0
    %445 = vmatpush1.xpose.msra.mxu0 0.0
    %446 = vmatprep.subr.mxu0 0.0
    %447 = vmatpush1.xpose.msra.mxu0 0.0
    %448 = vmatprep.subr.mxu0 0.0
    %449 = vmatpush1.xpose.msra.mxu0 0.0
    %450 = vmatprep.subr.mxu0 0.0
    %451 = vmatpush1.xpose.msra.mxu0 0.0
    %452 = vmatprep.subr.mxu0 0.0
    %453 = vmatpush1.xpose.msra.mxu0 0.0
    %454 = vmatprep.mubr.f32.mxu0 0.0
    %455 = vmatmul.mubr.f32.gmra.mrb[0].mxu0 %v386
    %v456 = vpop.f32.mrb[0].mxu0
    %v457 = vadd.f32 0.0, %v456
    %v458 = vpop.f32.mrb[0].mxu0
    %459 = vdwg.mxu0
    %v460 = vmul.f32 %v457, 0.35355338
    %v461 = vadd.f32 %v460, %v293
    %v462 = vsel %vm214, %v461, -inf
    %463 = vmax.xlane.f32.xlu0 %v462
    %v464 = vpop.xlane.xlu0 %463
    %v465 = vsub.f32 %v461, %v464
    %v466 = vmul.f32 %v465, 1.442695
    %v467 = vpow.pop %v466
    %v468 = vsel %vm214, %v467, 0.0
    %469 = vadd.xlane.f32.xlu0 %v468
    %v470 = vpop.xlane.xlu0 %469
    %v471 = vrcp.pop %v470
    %v472 = vmul.f32 %v467, %v471
    %473 = vrot.lane.b32.xlu0 %v203, 56
    %v474 = vpop.permute.xlu0 %473
    %v477 = vsel %vm214, %v472, 0
    %479 = vmatprep.subr.mxu0 0.0
    %480 = vmatpush1.msra.mxu0 %v474
    %481 = vmatprep.subr.mxu0 0.0
    %482 = vmatpush1.msra.mxu0 0.0
    %483 = vmatprep.subr.mxu0 0.0
    %484 = vmatpush1.msra.mxu0 0.0
    %485 = vmatprep.subr.mxu0 0.0
    %486 = vmatpush1.msra.mxu0 0.0
    %487 = vmatprep.subr.mxu0 0.0
    %488 = vmatpush1.msra.mxu0 0.0
    %489 = vmatprep.subr.mxu0 0.0
    %490 = vmatpush1.msra.mxu0 0.0
    %491 = vmatprep.subr.mxu0 0.0
    %492 = vmatpush1.msra.mxu0 0.0
    %493 = vmatprep.subr.mxu0 0.0
    %494 = vmatpush1.msra.mxu0 0.0
    %495 = vmatprep.subr.mxu0 0.0
    %496 = vmatpush1.msra.mxu0 0.0
    %497 = vmatprep.subr.mxu0 0.0
    %498 = vmatpush1.msra.mxu0 0.0
    %499 = vmatprep.subr.mxu0 0.0
    %500 = vmatpush1.msra.mxu0 0.0
    %501 = vmatprep.subr.mxu0 0.0
    %502 = vmatpush1.msra.mxu0 0.0
    %503 = vmatprep.subr.mxu0 0.0
    %504 = vmatpush1.msra.mxu0 0.0
    %505 = vmatprep.subr.mxu0 0.0
    %506 = vmatpush1.msra.mxu0 0.0
    %507 = vmatprep.subr.mxu0 0.0
    %508 = vmatpush1.msra.mxu0 0.0
    %509 = vmatprep.subr.mxu0 0.0
    %510 = vmatpush1.msra.mxu0 0.0
    %511 = vmatprep.subr.mxu0 0.0
    %512 = vmatpush1.msra.mxu0 0.0
    %513 = vmatprep.subr.mxu0 0.0
    %514 = vmatpush1.msra.mxu0 0.0
    %515 = vmatprep.subr.mxu0 0.0
    %516 = vmatpush1.msra.mxu0 0.0
    %517 = vmatprep.subr.mxu0 0.0
    %518 = vmatpush1.msra.mxu0 0.0
    %519 = vmatprep.subr.mxu0 0.0
    %520 = vmatpush1.msra.mxu0 0.0
    %521 = vmatprep.subr.mxu0 0.0
    %522 = vmatpush1.msra.mxu0 0.0
    %523 = vmatprep.subr.mxu0 0.0
    %524 = vmatpush1.msra.mxu0 0.0
    %525 = vmatprep.subr.mxu0 0.0
    %526 = vmatpush1.msra.mxu0 0.0
    %527 = vmatprep.subr.mxu0 0.0
    %528 = vmatpush1.msra.mxu0 0.0
    %529 = vmatprep.subr.mxu0 0.0
    %530 = vmatpush1.msra.mxu0 0.0
    %531 = vmatprep.subr.mxu0 0.0
    %532 = vmatpush1.msra.mxu0 0.0
    %533 = vmatprep.subr.mxu0 0.0
    %534 = vmatpush1.msra.mxu0 0.0
    %535 = vmatprep.subr.mxu0 0.0
    %536 = vmatpush1.msra.mxu0 0.0
    %537 = vmatprep.subr.mxu0 0.0
    %538 = vmatpush1.msra.mxu0 0.0
    %539 = vmatprep.subr.mxu0 0.0
    %540 = vmatpush1.msra.mxu0 0.0
    %541 = vmatprep.subr.mxu0 0.0
    %542 = vmatpush1.msra.mxu0 0.0
    %543 = vmatprep.mubr.f32.mxu0 0.0
    %544 = vmatmul.mubr.f32.gmra.mrb[0].mxu0 %v477
    %v545 = vpop.f32.mrb[0].mxu0
    %v546 = vadd.f32 0.0, %v545
    %v547 = vpop.f32.mrb[0].mxu0
    %548 = vdwg.mxu0
    %549 = vrot.lane.b32.xlu0 %v203, 112
    %v550 = vpop.permute.xlu0 %549
    %551 = vrot.lane.b32.xlu0 %v203, 80
    %v552 = vpop.permute.xlu0 %551
    %v553 = vsel %vm214, %v550, 0
    %v555 = vsel %vm214, %v552, 0
    %557 = vmatprep.subr.mxu0 0.0
    %558 = vmatpush1.xpose.msra.mxu0 %v555
    %559 = vmatprep.subr.mxu0 0.0
    %560 = vmatpush1.xpose.msra.mxu0 0.0
    %561 = vmatprep.subr.mxu0 0.0
    %562 = vmatpush1.xpose.msra.mxu0 0.0
    %563 = vmatprep.subr.mxu0 0.0
    %564 = vmatpush1.xpose.msra.mxu0 0.0
    %565 = vmatprep.subr.mxu0 0.0
    %566 = vmatpush1.xpose.msra.mxu0 0.0
    %567 = vmatprep.subr.mxu0 0.0
    %568 = vmatpush1.xpose.msra.mxu0 0.0
    %569 = vmatprep.subr.mxu0 0.0
    %570 = vmatpush1.xpose.msra.mxu0 0.0
    %571 = vmatprep.subr.mxu0 0.0
    %572 = vmatpush1.xpose.msra.mxu0 0.0
    %573 = vmatprep.subr.mxu0 0.0
    %574 = vmatpush1.xpose.msra.mxu0 0.0
    %575 = vmatprep.subr.mxu0 0.0
    %576 = vmatpush1.xpose.msra.mxu0 0.0
    %577 = vmatprep.subr.mxu0 0.0
    %578 = vmatpush1.xpose.msra.mxu0 0.0
    %579 = vmatprep.subr.mxu0 0.0
    %580 = vmatpush1.xpose.msra.mxu0 0.0
    %581 = vmatprep.subr.mxu0 0.0
    %582 = vmatpush1.xpose.msra.mxu0 0.0
    %583 = vmatprep.subr.mxu0 0.0
    %584 = vmatpush1.xpose.msra.mxu0 0.0
    %585 = vmatprep.subr.mxu0 0.0
    %586 = vmatpush1.xpose.msra.mxu0 0.0
    %587 = vmatprep.subr.mxu0 0.0
    %588 = vmatpush1.xpose.msra.mxu0 0.0
    %589 = vmatprep.subr.mxu0 0.0
    %590 = vmatpush1.xpose.msra.mxu0 0.0
    %591 = vmatprep.subr.mxu0 0.0
    %592 = vmatpush1.xpose.msra.mxu0 0.0
    %593 = vmatprep.subr.mxu0 0.0
    %594 = vmatpush1.xpose.msra.mxu0 0.0
    %595 = vmatprep.subr.mxu0 0.0
    %596 = vmatpush1.xpose.msra.mxu0 0.0
    %597 = vmatprep.subr.mxu0 0.0
    %598 = vmatpush1.xpose.msra.mxu0 0.0
    %599 = vmatprep.subr.mxu0 0.0
    %600 = vmatpush1.xpose.msra.mxu0 0.0
    %601 = vmatprep.subr.mxu0 0.0
    %602 = vmatpush1.xpose.msra.mxu0 0.0
    %603 = vmatprep.subr.mxu0 0.0
    %604 = vmatpush1.xpose.msra.mxu0 0.0
    %605 = vmatprep.subr.mxu0 0.0
    %606 = vmatpush1.xpose.msra.mxu0 0.0
    %607 = vmatprep.subr.mxu0 0.0
    %608 = vmatpush1.xpose.msra.mxu0 0.0
    %609 = vmatprep.subr.mxu0 0.0
    %610 = vmatpush1.xpose.msra.mxu0 0.0
    %611 = vmatprep.subr.mxu0 0.0
    %612 = vmatpush1.xpose.msra.mxu0 0.0
    %613 = vmatprep.subr.mxu0 0.0
    %614 = vmatpush1.xpose.msra.mxu0 0.0
    %615 = vmatprep.subr.mxu0 0.0
    %616 = vmatpush1.xpose.msra.mxu0 0.0
    %617 = vmatprep.subr.mxu0 0.0
    %618 = vmatpush1.xpose.msra.mxu0 0.0
    %619 = vmatprep.subr.mxu0 0.0
    %620 = vmatpush1.xpose.msra.mxu0 0.0
    %621 = vmatprep.mubr.f32.mxu0 0.0
    %622 = vmatmul.mubr.f32.gmra.mrb[0].mxu0 %v553
    %v623 = vpop.f32.mrb[0].mxu0
    %v624 = vadd.f32 0.0, %v623
    %v625 = vpop.f32.mrb[0].mxu0
    %626 = vdwg.mxu0
    %v627 = vmul.f32 %v624, 0.35355338
    %v628 = vadd.f32 %v627, %v293
    %v629 = vsel %vm214, %v628, -inf
    %630 = vmax.xlane.f32.xlu0 %v629
    %v631 = vpop.xlane.xlu0 %630
    %v632 = vsub.f32 %v628, %v631
    %v633 = vmul.f32 %v632, 1.442695
    %v634 = vpow.pop %v633
    %v635 = vsel %vm214, %v634, 0.0
    %636 = vadd.xlane.f32.xlu0 %v635
    %v637 = vpop.xlane.xlu0 %636
    %v638 = vrcp.pop %v637
    %v639 = vmul.f32 %v634, %v638
    %640 = vrot.lane.b32.xlu0 %v203, 48
    %v641 = vpop.permute.xlu0 %640
    %v644 = vsel %vm214, %v639, 0
    %646 = vmatprep.subr.mxu0 0.0
    %647 = vmatpush1.msra.mxu0 %v641
    %648 = vmatprep.subr.mxu0 0.0
    %649 = vmatpush1.msra.mxu0 0.0
    %650 = vmatprep.subr.mxu0 0.0
    %651 = vmatpush1.msra.mxu0 0.0
    %652 = vmatprep.subr.mxu0 0.0
    %653 = vmatpush1.msra.mxu0 0.0
    %654 = vmatprep.subr.mxu0 0.0
    %655 = vmatpush1.msra.mxu0 0.0
    %656 = vmatprep.subr.mxu0 0.0
    %657 = vmatpush1.msra.mxu0 0.0
    %658 = vmatprep.subr.mxu0 0.0
    %659 = vmatpush1.msra.mxu0 0.0
    %660 = vmatprep.subr.mxu0 0.0
    %661 = vmatpush1.msra.mxu0 0.0
    %662 = vmatprep.subr.mxu0 0.0
    %663 = vmatpush1.msra.mxu0 0.0
    %664 = vmatprep.subr.mxu0 0.0
    %665 = vmatpush1.msra.mxu0 0.0
    %666 = vmatprep.subr.mxu0 0.0
    %667 = vmatpush1.msra.mxu0 0.0
    %668 = vmatprep.subr.mxu0 0.0
    %669 = vmatpush1.msra.mxu0 0.0
    %670 = vmatprep.subr.mxu0 0.0
    %671 = vmatpush1.msra.mxu0 0.0
    %672 = vmatprep.subr.mxu0 0.0
    %673 = vmatpush1.msra.mxu0 0.0
    %674 = vmatprep.subr.mxu0 0.0
    %675 = vmatpush1.msra.mxu0 0.0
    %676 = vmatprep.subr.mxu0 0.0
    %677 = vmatpush1.msra.mxu0 0.0
    %678 = vmatprep.subr.mxu0 0.0
    %679 = vmatpush1.msra.mxu0 0.0
    %680 = vmatprep.subr.mxu0 0.0
    %681 = vmatpush1.msra.mxu0 0.0
    %682 = vmatprep.subr.mxu0 0.0
    %683 = vmatpush1.msra.mxu0 0.0
    %684 = vmatprep.subr.mxu0 0.0
    %685 = vmatpush1.msra.mxu0 0.0
    %686 = vmatprep.subr.mxu0 0.0
    %687 = vmatpush1.msra.mxu0 0.0
    %688 = vmatprep.subr.mxu0 0.0
    %689 = vmatpush1.msra.mxu0 0.0
    %690 = vmatprep.subr.mxu0 0.0
    %691 = vmatpush1.msra.mxu0 0.0
    %692 = vmatprep.subr.mxu0 0.0
    %693 = vmatpush1.msra.mxu0 0.0
    %694 = vmatprep.subr.mxu0 0.0
    %695 = vmatpush1.msra.mxu0 0.0
    %696 = vmatprep.subr.mxu0 0.0
    %697 = vmatpush1.msra.mxu0 0.0
    %698 = vmatprep.subr.mxu0 0.0
    %699 = vmatpush1.msra.mxu0 0.0
    %700 = vmatprep.subr.mxu0 0.0
    %701 = vmatpush1.msra.mxu0 0.0
    %702 = vmatprep.subr.mxu0 0.0
    %703 = vmatpush1.msra.mxu0 0.0
    %704 = vmatprep.subr.mxu0 0.0
    %705 = vmatpush1.msra.mxu0 0.0
    %706 = vmatprep.subr.mxu0 0.0
    %707 = vmatpush1.msra.mxu0 0.0
    %708 = vmatprep.subr.mxu0 0.0
    %709 = vmatpush1.msra.mxu0 0.0
    %710 = vmatprep.mubr.f32.mxu0 0.0
    %711 = vmatmul.mubr.f32.gmra.mrb[0].mxu0 %v644
    %v712 = vpop.f32.mrb[0].mxu0
    %v713 = vadd.f32 0.0, %v712
    %v714 = vpop.f32.mrb[0].mxu0
    %715 = vdwg.mxu0
    %716 = vrot.lane.b32.xlu0 %v203, 104
    %v717 = vpop.permute.xlu0 %716
    %718 = vrot.lane.b32.xlu0 %v203, 72
    %v719 = vpop.permute.xlu0 %718
    %v720 = vsel %vm214, %v717, 0
    %v722 = vsel %vm214, %v719, 0
    %724 = vmatprep.subr.mxu0 0.0
    %725 = vmatpush1.xpose.msra.mxu0 %v722
    %726 = vmatprep.subr.mxu0 0.0
    %727 = vmatpush1.xpose.msra.mxu0 0.0
    %728 = vmatprep.subr.mxu0 0.0
    %729 = vmatpush1.xpose.msra.mxu0 0.0
    %730 = vmatprep.subr.mxu0 0.0
    %731 = vmatpush1.xpose.msra.mxu0 0.0
    %732 = vmatprep.subr.mxu0 0.0
    %733 = vmatpush1.xpose.msra.mxu0 0.0
    %734 = vmatprep.subr.mxu0 0.0
    %735 = vmatpush1.xpose.msra.mxu0 0.0
    %736 = vmatprep.subr.mxu0 0.0
    %737 = vmatpush1.xpose.msra.mxu0 0.0
    %738 = vmatprep.subr.mxu0 0.0
    %739 = vmatpush1.xpose.msra.mxu0 0.0
    %740 = vmatprep.subr.mxu0 0.0
    %741 = vmatpush1.xpose.msra.mxu0 0.0
    %742 = vmatprep.subr.mxu0 0.0
    %743 = vmatpush1.xpose.msra.mxu0 0.0
    %744 = vmatprep.subr.mxu0 0.0
    %745 = vmatpush1.xpose.msra.mxu0 0.0
    %746 = vmatprep.subr.mxu0 0.0
    %747 = vmatpush1.xpose.msra.mxu0 0.0
    %748 = vmatprep.subr.mxu0 0.0
    %749 = vmatpush1.xpose.msra.mxu0 0.0
    %750 = vmatprep.subr.mxu0 0.0
    %751 = vmatpush1.xpose.msra.mxu0 0.0
    %752 = vmatprep.subr.mxu0 0.0
    %753 = vmatpush1.xpose.msra.mxu0 0.0
    %754 = vmatprep.subr.mxu0 0.0
    %755 = vmatpush1.xpose.msra.mxu0 0.0
    %756 = vmatprep.subr.mxu0 0.0
    %757 = vmatpush1.xpose.msra.mxu0 0.0
    %758 = vmatprep.subr.mxu0 0.0
    %759 = vmatpush1.xpose.msra.mxu0 0.0
    %760 = vmatprep.subr.mxu0 0.0
    %761 = vmatpush1.xpose.msra.mxu0 0.0
    %762 = vmatprep.subr.mxu0 0.0
    %763 = vmatpush1.xpose.msra.mxu0 0.0
    %764 = vmatprep.subr.mxu0 0.0
    %765 = vmatpush1.xpose.msra.mxu0 0.0
    %766 = vmatprep.subr.mxu0 0.0
    %767 = vmatpush1.xpose.msra.mxu0 0.0
    %768 = vmatprep.subr.mxu0 0.0
    %769 = vmatpush1.xpose.msra.mxu0 0.0
    %770 = vmatprep.subr.mxu0 0.0
    %771 = vmatpush1.xpose.msra.mxu0 0.0
    %772 = vmatprep.subr.mxu0 0.0
    %773 = vmatpush1.xpose.msra.mxu0 0.0
    %774 = vmatprep.subr.mxu0 0.0
    %775 = vmatpush1.xpose.msra.mxu0 0.0
    %776 = vmatprep.subr.mxu0 0.0
    %777 = vmatpush1.xpose.msra.mxu0 0.0
    %778 = vmatprep.subr.mxu0 0.0
    %779 = vmatpush1.xpose.msra.mxu0 0.0
    %780 = vmatprep.subr.mxu0 0.0
    %781 = vmatpush1.xpose.msra.mxu0 0.0
    %782 = vmatprep.subr.mxu0 0.0
    %783 = vmatpush1.xpose.msra.mxu0 0.0
    %784 = vmatprep.subr.mxu0 0.0
    %785 = vmatpush1.xpose.msra.mxu0 0.0
    %786 = vmatprep.subr.mxu0 0.0
    %787 = vmatpush1.xpose.msra.mxu0 0.0
    %788 = vmatprep.mubr.f32.mxu0 0.0
    %789 = vmatmul.mubr.f32.gmra.mrb[0].mxu0 %v720
    %v790 = vpop.f32.mrb[0].mxu0
    %v791 = vadd.f32 0.0, %v790
    %v792 = vpop.f32.mrb[0].mxu0
    %793 = vdwg.mxu0
    %v794 = vmul.f32 %v791, 0.35355338
    %v795 = vadd.f32 %v794, %v293
    %v796 = vsel %vm214, %v795, -inf
    %797 = vmax.xlane.f32.xlu0 %v796
    %v798 = vpop.xlane.xlu0 %797
    %v799 = vsub.f32 %v795, %v798
    %v800 = vmul.f32 %v799, 1.442695
    %v801 = vpow.pop %v800
    %v802 = vsel %vm214, %v801, 0.0
    %803 = vadd.xlane.f32.xlu0 %v802
    %v804 = vpop.xlane.xlu0 %803
    %v805 = vrcp.pop %v804
    %v806 = vmul.f32 %v801, %v805
    %807 = vrot.lane.b32.xlu0 %v203, 40
    %v808 = vpop.permute.xlu0 %807
    %v811 = vsel %vm214, %v806, 0
    %813 = vmatprep.subr.mxu0 0.0
    %814 = vmatpush1.msra.mxu0 %v808
    %815 = vmatprep.subr.mxu0 0.0
    %816 = vmatpush1.msra.mxu0 0.0
    %817 = vmatprep.subr.mxu0 0.0
    %818 = vmatpush1.msra.mxu0 0.0
    %819 = vmatprep.subr.mxu0 0.0
    %820 = vmatpush1.msra.mxu0 0.0
    %821 = vmatprep.subr.mxu0 0.0
    %822 = vmatpush1.msra.mxu0 0.0
    %823 = vmatprep.subr.mxu0 0.0
    %824 = vmatpush1.msra.mxu0 0.0
    %825 = vmatprep.subr.mxu0 0.0
    %826 = vmatpush1.msra.mxu0 0.0
    %827 = vmatprep.subr.mxu0 0.0
    %828 = vmatpush1.msra.mxu0 0.0
    %829 = vmatprep.subr.mxu0 0.0
    %830 = vmatpush1.msra.mxu0 0.0
    %831 = vmatprep.subr.mxu0 0.0
    %832 = vmatpush1.msra.mxu0 0.0
    %833 = vmatprep.subr.mxu0 0.0
    %834 = vmatpush1.msra.mxu0 0.0
    %835 = vmatprep.subr.mxu0 0.0
    %836 = vmatpush1.msra.mxu0 0.0
    %837 = vmatprep.subr.mxu0 0.0
    %838 = vmatpush1.msra.mxu0 0.0
    %839 = vmatprep.subr.mxu0 0.0
    %840 = vmatpush1.msra.mxu0 0.0
    %841 = vmatprep.subr.mxu0 0.0
    %842 = vmatpush1.msra.mxu0 0.0
    %843 = vmatprep.subr.mxu0 0.0
    %844 = vmatpush1.msra.mxu0 0.0
    %845 = vmatprep.subr.mxu0 0.0
    %846 = vmatpush1.msra.mxu0 0.0
    %847 = vmatprep.subr.mxu0 0.0
    %848 = vmatpush1.msra.mxu0 0.0
    %849 = vmatprep.subr.mxu0 0.0
    %850 = vmatpush1.msra.mxu0 0.0
    %851 = vmatprep.subr.mxu0 0.0
    %852 = vmatpush1.msra.mxu0 0.0
    %853 = vmatprep.subr.mxu0 0.0
    %854 = vmatpush1.msra.mxu0 0.0
    %855 = vmatprep.subr.mxu0 0.0
    %856 = vmatpush1.msra.mxu0 0.0
    %857 = vmatprep.subr.mxu0 0.0
    %858 = vmatpush1.msra.mxu0 0.0
    %859 = vmatprep.subr.mxu0 0.0
    %860 = vmatpush1.msra.mxu0 0.0
    %861 = vmatprep.subr.mxu0 0.0
    %862 = vmatpush1.msra.mxu0 0.0
    %863 = vmatprep.subr.mxu0 0.0
    %864 = vmatpush1.msra.mxu0 0.0
    %865 = vmatprep.subr.mxu0 0.0
    %866 = vmatpush1.msra.mxu0 0.0
    %867 = vmatprep.subr.mxu0 0.0
    %868 = vmatpush1.msra.mxu0 0.0
    %869 = vmatprep.subr.mxu0 0.0
    %870 = vmatpush1.msra.mxu0 0.0
    %871 = vmatprep.subr.mxu0 0.0
    %872 = vmatpush1.msra.mxu0 0.0
    %873 = vmatprep.subr.mxu0 0.0
    %874 = vmatpush1.msra.mxu0 0.0
    %875 = vmatprep.subr.mxu0 0.0
    %876 = vmatpush1.msra.mxu0 0.0
    %877 = vmatprep.mubr.f32.mxu0 0.0
    %878 = vmatmul.mubr.f32.gmra.mrb[0].mxu0 %v811
    %v879 = vpop.f32.mrb[0].mxu0
    %v880 = vadd.f32 0.0, %v879
    %v881 = vpop.f32.mrb[0].mxu0
    %882 = vdwg.mxu0
    %884 = vrot.lane.b32.xlu0 %v546, 8
    %v885 = vpop.permute.xlu0 %884
    %888 = vrot.lane.b32.xlu0 %v713, 16
    %v889 = vpop.permute.xlu0 %888
    %892 = vrot.lane.b32.xlu0 %v880, 24
    %v893 = vpop.permute.xlu0 %892
    %v895 = vsel %vm214, %v379, %v885
    %vm896 = vcmask 130048
    %v897 = vsel %vm896, %v895, %v889
    %vm898 = vcmask 195584
    %v899 = vsel %vm898, %v897, %v893
    %901 = vrot.lane.b32.xlu0 %v208, 96
    %v902 = vpop.permute.xlu0 %901
    %v903 = vsel %vm214, %v208, 0
    %v905 = vsel %vm214, %v902, 0
    %907 = vmatprep.subr.mxu0 0.0
    %908 = vmatpush1.xpose.msra.mxu0 %v905
    %909 = vmatprep.subr.mxu0 0.0
    %910 = vmatpush1.xpose.msra.mxu0 0.0
    %911 = vmatprep.subr.mxu0 0.0
    %912 = vmatpush1.xpose.msra.mxu0 0.0
    %913 = vmatprep.subr.mxu0 0.0
    %914 = vmatpush1.xpose.msra.mxu0 0.0
    %915 = vmatprep.subr.mxu0 0.0
    %916 = vmatpush1.xpose.msra.mxu0 0.0
    %917 = vmatprep.subr.mxu0 0.0
    %918 = vmatpush1.xpose.msra.mxu0 0.0
    %919 = vmatprep.subr.mxu0 0.0
    %920 = vmatpush1.xpose.msra.mxu0 0.0
    %921 = vmatprep.subr.mxu0 0.0
    %922 = vmatpush1.xpose.msra.mxu0 0.0
    %923 = vmatprep.subr.mxu0 0.0
    %924 = vmatpush1.xpose.msra.mxu0 0.0
    %925 = vmatprep.subr.mxu0 0.0
    %926 = vmatpush1.xpose.msra.mxu0 0.0
    %927 = vmatprep.subr.mxu0 0.0
    %928 = vmatpush1.xpose.msra.mxu0 0.0
    %929 = vmatprep.subr.mxu0 0.0
    %930 = vmatpush1.xpose.msra.mxu0 0.0
    %931 = vmatprep.subr.mxu0 0.0
    %932 = vmatpush1.xpose.msra.mxu0 0.0
    %933 = vmatprep.subr.mxu0 0.0
    %934 = vmatpush1.xpose.msra.mxu0 0.0
    %935 = vmatprep.subr.mxu0 0.0
    %936 = vmatpush1.xpose.msra.mxu0 0.0
    %937 = vmatprep.subr.mxu0 0.0
    %938 = vmatpush1.xpose.msra.mxu0 0.0
    %939 = vmatprep.subr.mxu0 0.0
    %940 = vmatpush1.xpose.msra.mxu0 0.0
    %941 = vmatprep.subr.mxu0 0.0
    %942 = vmatpush1.xpose.msra.mxu0 0.0
    %943 = vmatprep.subr.mxu0 0.0
    %944 = vmatpush1.xpose.msra.mxu0 0.0
    %945 = vmatprep.subr.mxu0 0.0
    %946 = vmatpush1.xpose.msra.mxu0 0.0
    %947 = vmatprep.subr.mxu0 0.0
    %948 = vmatpush1.xpose.msra.mxu0 0.0
    %949 = vmatprep.subr.mxu0 0.0
    %950 = vmatpush1.xpose.msra.mxu0 0.0
    %951 = vmatprep.subr.mxu0 0.0
    %952 = vmatpush1.xpose.msra.mxu0 0.0
    %953 = vmatprep.subr.mxu0 0.0
    %954 = vmatpush1.xpose.msra.mxu0 0.0
    %955 = vmatprep.subr.mxu0 0.0
    %956 = vmatpush1.xpose.msra.mxu0 0.0
    %957 = vmatprep.subr.mxu0 0.0
    %958 = vmatpush1.xpose.msra.mxu0 0.0
    %959 = vmatprep.subr.mxu0 0.0
    %960 = vmatpush1.xpose.msra.mxu0 0.0
    %961 = vmatprep.subr.mxu0 0.0
    %962 = vmatpush1.xpose.msra.mxu0 0.0
    %963 = vmatprep.subr.mxu0 0.0
    %964 = vmatpush1.xpose.msra.mxu0 0.0
    %965 = vmatprep.subr.mxu0 0.0
    %966 = vmatpush1.xpose.msra.mxu0 0.0
    %967 = vmatprep.subr.mxu0 0.0
    %968 = vmatpush1.xpose.msra.mxu0 0.0
    %969 = vmatprep.subr.mxu0 0.0
    %970 = vmatpush1.xpose.msra.mxu0 0.0
    %971 = vmatprep.mubr.f32.mxu0 0.0
    %972 = vmatmul.mubr.f32.gmra.mrb[0].mxu0 %v903
    %v973 = vpop.f32.mrb[0].mxu0
    %v974 = vadd.f32 0.0, %v973
    %v975 = vpop.f32.mrb[0].mxu0
    %976 = vdwg.mxu0
    %v977 = vmul.f32 %v974, 0.35355338
    %v978 = vlaneseq
    %v979 = vshrl.u32 %v978, 7
    %v980 = vsub.s32 1, %v979
    %v981 = vrot.slane %v118, %v980
    %v982 = vadd.f32 %v977, %v981
    %v983 = vsel %vm214, %v982, -inf
    %984 = vmax.xlane.f32.xlu0 %v983
    %v985 = vpop.xlane.xlu0 %984
    %v986 = vsub.f32 %v982, %v985
    %v987 = vmul.f32 %v986, 1.442695
    %v988 = vpow.pop %v987
    %v989 = vsel %vm214, %v988, 0.0
    %990 = vadd.xlane.f32.xlu0 %v989
    %v991 = vpop.xlane.xlu0 %990
    %v992 = vrcp.pop %v991
    %v993 = vmul.f32 %v988, %v992
    %994 = vrot.lane.b32.xlu0 %v208, 64
    %v995 = vpop.permute.xlu0 %994
    %v998 = vsel %vm214, %v993, 0
    %1000 = vmatprep.subr.mxu0 0.0
    %1001 = vmatpush1.msra.mxu0 %v995
    %1002 = vmatprep.subr.mxu0 0.0
    %1003 = vmatpush1.msra.mxu0 0.0
    %1004 = vmatprep.subr.mxu0 0.0
    %1005 = vmatpush1.msra.mxu0 0.0
    %1006 = vmatprep.subr.mxu0 0.0
    %1007 = vmatpush1.msra.mxu0 0.0
    %1008 = vmatprep.subr.mxu0 0.0
    %1009 = vmatpush1.msra.mxu0 0.0
    %1010 = vmatprep.subr.mxu0 0.0
    %1011 = vmatpush1.msra.mxu0 0.0
    %1012 = vmatprep.subr.mxu0 0.0
    %1013 = vmatpush1.msra.mxu0 0.0
    %1014 = vmatprep.subr.mxu0 0.0
    %1015 = vmatpush1.msra.mxu0 0.0
    %1016 = vmatprep.subr.mxu0 0.0
    %1017 = vmatpush1.msra.mxu0 0.0
    %1018 = vmatprep.subr.mxu0 0.0
    %1019 = vmatpush1.msra.mxu0 0.0
    %1020 = vmatprep.subr.mxu0 0.0
    %1021 = vmatpush1.msra.mxu0 0.0
    %1022 = vmatprep.subr.mxu0 0.0
    %1023 = vmatpush1.msra.mxu0 0.0
    %1024 = vmatprep.subr.mxu0 0.0
    %1025 = vmatpush1.msra.mxu0 0.0
    %1026 = vmatprep.subr.mxu0 0.0
    %1027 = vmatpush1.msra.mxu0 0.0
    %1028 = vmatprep.subr.mxu0 0.0
    %1029 = vmatpush1.msra.mxu0 0.0
    %1030 = vmatprep.subr.mxu0 0.0
    %1031 = vmatpush1.msra.mxu0 0.0
    %1032 = vmatprep.subr.mxu0 0.0
    %1033 = vmatpush1.msra.mxu0 0.0
    %1034 = vmatprep.subr.mxu0 0.0
    %1035 = vmatpush1.msra.mxu0 0.0
    %1036 = vmatprep.subr.mxu0 0.0
    %1037 = vmatpush1.msra.mxu0 0.0
    %1038 = vmatprep.subr.mxu0 0.0
    %1039 = vmatpush1.msra.mxu0 0.0
    %1040 = vmatprep.subr.mxu0 0.0
    %1041 = vmatpush1.msra.mxu0 0.0
    %1042 = vmatprep.subr.mxu0 0.0
    %1043 = vmatpush1.msra.mxu0 0.0
    %1044 = vmatprep.subr.mxu0 0.0
    %1045 = vmatpush1.msra.mxu0 0.0
    %1046 = vmatprep.subr.mxu0 0.0
    %1047 = vmatpush1.msra.mxu0 0.0
    %1048 = vmatprep.subr.mxu0 0.0
    %1049 = vmatpush1.msra.mxu0 0.0
    %1050 = vmatprep.subr.mxu0 0.0
    %1051 = vmatpush1.msra.mxu0 0.0
    %1052 = vmatprep.subr.mxu0 0.0
    %1053 = vmatpush1.msra.mxu0 0.0
    %1054 = vmatprep.subr.mxu0 0.0
    %1055 = vmatpush1.msra.mxu0 0.0
    %1056 = vmatprep.subr.mxu0 0.0
    %1057 = vmatpush1.msra.mxu0 0.0
    %1058 = vmatprep.subr.mxu0 0.0
    %1059 = vmatpush1.msra.mxu0 0.0
    %1060 = vmatprep.subr.mxu0 0.0
    %1061 = vmatpush1.msra.mxu0 0.0
    %1062 = vmatprep.subr.mxu0 0.0
    %1063 = vmatpush1.msra.mxu0 0.0
    %1064 = vmatprep.mubr.f32.mxu0 0.0
    %1065 = vmatmul.mubr.f32.gmra.mrb[0].mxu0 %v998
    %v1066 = vpop.f32.mrb[0].mxu0
    %v1067 = vadd.f32 0.0, %v1066
    %v1068 = vpop.f32.mrb[0].mxu0
    %1069 = vdwg.mxu0
    %1070 = vrot.lane.b32.xlu0 %v208, 120
    %v1071 = vpop.permute.xlu0 %1070
    %1072 = vrot.lane.b32.xlu0 %v208, 88
    %v1073 = vpop.permute.xlu0 %1072
    %v1074 = vsel %vm214, %v1071, 0
    %v1076 = vsel %vm214, %v1073, 0
    %1078 = vmatprep.subr.mxu0 0.0
    %1079 = vmatpush1.xpose.msra.mxu0 %v1076
    %1080 = vmatprep.subr.mxu0 0.0
    %1081 = vmatpush1.xpose.msra.mxu0 0.0
    %1082 = vmatprep.subr.mxu0 0.0
    %1083 = vmatpush1.xpose.msra.mxu0 0.0
    %1084 = vmatprep.subr.mxu0 0.0
    %1085 = vmatpush1.xpose.msra.mxu0 0.0
    %1086 = vmatprep.subr.mxu0 0.0
    %1087 = vmatpush1.xpose.msra.mxu0 0.0
    %1088 = vmatprep.subr.mxu0 0.0
    %1089 = vmatpush1.xpose.msra.mxu0 0.0
    %1090 = vmatprep.subr.mxu0 0.0
    %1091 = vmatpush1.xpose.msra.mxu0 0.0
    %1092 = vmatprep.subr.mxu0 0.0
    %1093 = vmatpush1.xpose.msra.mxu0 0.0
    %1094 = vmatprep.subr.mxu0 0.0
    %1095 = vmatpush1.xpose.msra.mxu0 0.0
    %1096 = vmatprep.subr.mxu0 0.0
    %1097 = vmatpush1.xpose.msra.mxu0 0.0
    %1098 = vmatprep.subr.mxu0 0.0
    %1099 = vmatpush1.xpose.msra.mxu0 0.0
    %1100 = vmatprep.subr.mxu0 0.0
    %1101 = vmatpush1.xpose.msra.mxu0 0.0
    %1102 = vmatprep.subr.mxu0 0.0
    %1103 = vmatpush1.xpose.msra.mxu0 0.0
    %1104 = vmatprep.subr.mxu0 0.0
    %1105 = vmatpush1.xpose.msra.mxu0 0.0
    %1106 = vmatprep.subr.mxu0 0.0
    %1107 = vmatpush1.xpose.msra.mxu0 0.0
    %1108 = vmatprep.subr.mxu0 0.0
    %1109 = vmatpush1.xpose.msra.mxu0 0.0
    %1110 = vmatprep.subr.mxu0 0.0
    %1111 = vmatpush1.xpose.msra.mxu0 0.0
    %1112 = vmatprep.subr.mxu0 0.0
    %1113 = vmatpush1.xpose.msra.mxu0 0.0
    %1114 = vmatprep.subr.mxu0 0.0
    %1115 = vmatpush1.xpose.msra.mxu0 0.0
    %1116 = vmatprep.subr.mxu0 0.0
    %1117 = vmatpush1.xpose.msra.mxu0 0.0
    %1118 = vmatprep.subr.mxu0 0.0
    %1119 = vmatpush1.xpose.msra.mxu0 0.0
    %1120 = vmatprep.subr.mxu0 0.0
    %1121 = vmatpush1.xpose.msra.mxu0 0.0
    %1122 = vmatprep.subr.mxu0 0.0
    %1123 = vmatpush1.xpose.msra.mxu0 0.0
    %1124 = vmatprep.subr.mxu0 0.0
    %1125 = vmatpush1.xpose.msra.mxu0 0.0
    %1126 = vmatprep.subr.mxu0 0.0
    %1127 = vmatpush1.xpose.msra.mxu0 0.0
    %1128 = vmatprep.subr.mxu0 0.0
    %1129 = vmatpush1.xpose.msra.mxu0 0.0
    %1130 = vmatprep.subr.mxu0 0.0
    %1131 = vmatpush1.xpose.msra.mxu0 0.0
    %1132 = vmatprep.subr.mxu0 0.0
    %1133 = vmatpush1.xpose.msra.mxu0 0.0
    %1134 = vmatprep.subr.mxu0 0.0
    %1135 = vmatpush1.xpose.msra.mxu0 0.0
    %1136 = vmatprep.subr.mxu0 0.0
    %1137 = vmatpush1.xpose.msra.mxu0 0.0
    %1138 = vmatprep.subr.mxu0 0.0
    %1139 = vmatpush1.xpose.msra.mxu0 0.0
    %1140 = vmatprep.subr.mxu0 0.0
    %1141 = vmatpush1.xpose.msra.mxu0 0.0
    %1142 = vmatprep.mubr.f32.mxu0 0.0
    %1143 = vmatmul.mubr.f32.gmra.mrb[0].mxu0 %v1074
    %v1144 = vpop.f32.mrb[0].mxu0
    %v1145 = vadd.f32 0.0, %v1144
    %v1146 = vpop.f32.mrb[0].mxu0
    %1147 = vdwg.mxu0
    %v1148 = vmul.f32 %v1145, 0.35355338
    %v1149 = vadd.f32 %v1148, %v981
    %v1150 = vsel %vm214, %v1149, -inf
    %1151 = vmax.xlane.f32.xlu0 %v1150
    %v1152 = vpop.xlane.xlu0 %1151
    %v1153 = vsub.f32 %v1149, %v1152
    %v1154 = vmul.f32 %v1153, 1.442695
    %v1155 = vpow.pop %v1154
    %v1156 = vsel %vm214, %v1155, 0.0
    %1157 = vadd.xlane.f32.xlu0 %v1156
    %v1158 = vpop.xlane.xlu0 %1157
    %v1159 = vrcp.pop %v1158
    %v1160 = vmul.f32 %v1155, %v1159
    %1161 = vrot.lane.b32.xlu0 %v208, 56
    %v1162 = vpop.permute.xlu0 %1161
    %v1165 = vsel %vm214, %v1160, 0
    %1167 = vmatprep.subr.mxu0 0.0
    %1168 = vmatpush1.msra.mxu0 %v1162
    %1169 = vmatprep.subr.mxu0 0.0
    %1170 = vmatpush1.msra.mxu0 0.0
    %1171 = vmatprep.subr.mxu0 0.0
    %1172 = vmatpush1.msra.mxu0 0.0
    %1173 = vmatprep.subr.mxu0 0.0
    %1174 = vmatpush1.msra.mxu0 0.0
    %1175 = vmatprep.subr.mxu0 0.0
    %1176 = vmatpush1.msra.mxu0 0.0
    %1177 = vmatprep.subr.mxu0 0.0
    %1178 = vmatpush1.msra.mxu0 0.0
    %1179 = vmatprep.subr.mxu0 0.0
    %1180 = vmatpush1.msra.mxu0 0.0
    %1181 = vmatprep.subr.mxu0 0.0
    %1182 = vmatpush1.msra.mxu0 0.0
    %1183 = vmatprep.subr.mxu0 0.0
    %1184 = vmatpush1.msra.mxu0 0.0
    %1185 = vmatprep.subr.mxu0 0.0
    %1186 = vmatpush1.msra.mxu0 0.0
    %1187 = vmatprep.subr.mxu0 0.0
    %1188 = vmatpush1.msra.mxu0 0.0
    %1189 = vmatprep.subr.mxu0 0.0
    %1190 = vmatpush1.msra.mxu0 0.0
    %1191 = vmatprep.subr.mxu0 0.0
    %1192 = vmatpush1.msra.mxu0 0.0
    %1193 = vmatprep.subr.mxu0 0.0
    %1194 = vmatpush1.msra.mxu0 0.0
    %1195 = vmatprep.subr.mxu0 0.0
    %1196 = vmatpush1.msra.mxu0 0.0
    %1197 = vmatprep.subr.mxu0 0.0
    %1198 = vmatpush1.msra.mxu0 0.0
    %1199 = vmatprep.subr.mxu0 0.0
    %1200 = vmatpush1.msra.mxu0 0.0
    %1201 = vmatprep.subr.mxu0 0.0
    %1202 = vmatpush1.msra.mxu0 0.0
    %1203 = vmatprep.subr.mxu0 0.0
    %1204 = vmatpush1.msra.mxu0 0.0
    %1205 = vmatprep.subr.mxu0 0.0
    %1206 = vmatpush1.msra.mxu0 0.0
    %1207 = vmatprep.subr.mxu0 0.0
    %1208 = vmatpush1.msra.mxu0 0.0
    %1209 = vmatprep.subr.mxu0 0.0
    %1210 = vmatpush1.msra.mxu0 0.0
    %1211 = vmatprep.subr.mxu0 0.0
    %1212 = vmatpush1.msra.mxu0 0.0
    %1213 = vmatprep.subr.mxu0 0.0
    %1214 = vmatpush1.msra.mxu0 0.0
    %1215 = vmatprep.subr.mxu0 0.0
    %1216 = vmatpush1.msra.mxu0 0.0
    %1217 = vmatprep.subr.mxu0 0.0
    %1218 = vmatpush1.msra.mxu0 0.0
    %1219 = vmatprep.subr.mxu0 0.0
    %1220 = vmatpush1.msra.mxu0 0.0
    %1221 = vmatprep.subr.mxu0 0.0
    %1222 = vmatpush1.msra.mxu0 0.0
    %1223 = vmatprep.subr.mxu0 0.0
    %1224 = vmatpush1.msra.mxu0 0.0
    %1225 = vmatprep.subr.mxu0 0.0
    %1226 = vmatpush1.msra.mxu0 0.0
    %1227 = vmatprep.subr.mxu0 0.0
    %1228 = vmatpush1.msra.mxu0 0.0
    %1229 = vmatprep.subr.mxu0 0.0
    %1230 = vmatpush1.msra.mxu0 0.0
    %1231 = vmatprep.mubr.f32.mxu0 0.0
    %1232 = vmatmul.mubr.f32.gmra.mrb[0].mxu0 %v1165
    %v1233 = vpop.f32.mrb[0].mxu0
    %v1234 = vadd.f32 0.0, %v1233
    %v1235 = vpop.f32.mrb[0].mxu0
    %1236 = vdwg.mxu0
    %1237 = vrot.lane.b32.xlu0 %v208, 112
    %v1238 = vpop.permute.xlu0 %1237
    %1239 = vrot.lane.b32.xlu0 %v208, 80
    %v1240 = vpop.permute.xlu0 %1239
    %v1241 = vsel %vm214, %v1238, 0
    %v1243 = vsel %vm214, %v1240, 0
    %1245 = vmatprep.subr.mxu0 0.0
    %1246 = vmatpush1.xpose.msra.mxu0 %v1243
    %1247 = vmatprep.subr.mxu0 0.0
    %1248 = vmatpush1.xpose.msra.mxu0 0.0
    %1249 = vmatprep.subr.mxu0 0.0
    %1250 = vmatpush1.xpose.msra.mxu0 0.0
    %1251 = vmatprep.subr.mxu0 0.0
    %1252 = vmatpush1.xpose.msra.mxu0 0.0
    %1253 = vmatprep.subr.mxu0 0.0
    %1254 = vmatpush1.xpose.msra.mxu0 0.0
    %1255 = vmatprep.subr.mxu0 0.0
    %1256 = vmatpush1.xpose.msra.mxu0 0.0
    %1257 = vmatprep.subr.mxu0 0.0
    %1258 = vmatpush1.xpose.msra.mxu0 0.0
    %1259 = vmatprep.subr.mxu0 0.0
    %1260 = vmatpush1.xpose.msra.mxu0 0.0
    %1261 = vmatprep.subr.mxu0 0.0
    %1262 = vmatpush1.xpose.msra.mxu0 0.0
    %1263 = vmatprep.subr.mxu0 0.0
    %1264 = vmatpush1.xpose.msra.mxu0 0.0
    %1265 = vmatprep.subr.mxu0 0.0
    %1266 = vmatpush1.xpose.msra.mxu0 0.0
    %1267 = vmatprep.subr.mxu0 0.0
    %1268 = vmatpush1.xpose.msra.mxu0 0.0
    %1269 = vmatprep.subr.mxu0 0.0
    %1270 = vmatpush1.xpose.msra.mxu0 0.0
    %1271 = vmatprep.subr.mxu0 0.0
    %1272 = vmatpush1.xpose.msra.mxu0 0.0
    %1273 = vmatprep.subr.mxu0 0.0
    %1274 = vmatpush1.xpose.msra.mxu0 0.0
    %1275 = vmatprep.subr.mxu0 0.0
    %1276 = vmatpush1.xpose.msra.mxu0 0.0
    %1277 = vmatprep.subr.mxu0 0.0
    %1278 = vmatpush1.xpose.msra.mxu0 0.0
    %1279 = vmatprep.subr.mxu0 0.0
    %1280 = vmatpush1.xpose.msra.mxu0 0.0
    %1281 = vmatprep.subr.mxu0 0.0
    %1282 = vmatpush1.xpose.msra.mxu0 0.0
    %1283 = vmatprep.subr.mxu0 0.0
    %1284 = vmatpush1.xpose.msra.mxu0 0.0
    %1285 = vmatprep.subr.mxu0 0.0
    %1286 = vmatpush1.xpose.msra.mxu0 0.0
    %1287 = vmatprep.subr.mxu0 0.0
    %1288 = vmatpush1.xpose.msra.mxu0 0.0
    %1289 = vmatprep.subr.mxu0 0.0
    %1290 = vmatpush1.xpose.msra.mxu0 0.0
    %1291 = vmatprep.subr.mxu0 0.0
    %1292 = vmatpush1.xpose.msra.mxu0 0.0
    %1293 = vmatprep.subr.mxu0 0.0
    %1294 = vmatpush1.xpose.msra.mxu0 0.0
    %1295 = vmatprep.subr.mxu0 0.0
    %1296 = vmatpush1.xpose.msra.mxu0 0.0
    %1297 = vmatprep.subr.mxu0 0.0
    %1298 = vmatpush1.xpose.msra.mxu0 0.0
    %1299 = vmatprep.subr.mxu0 0.0
    %1300 = vmatpush1.xpose.msra.mxu0 0.0
    %1301 = vmatprep.subr.mxu0 0.0
    %1302 = vmatpush1.xpose.msra.mxu0 0.0
    %1303 = vmatprep.subr.mxu0 0.0
    %1304 = vmatpush1.xpose.msra.mxu0 0.0
    %1305 = vmatprep.subr.mxu0 0.0
    %1306 = vmatpush1.xpose.msra.mxu0 0.0
    %1307 = vmatprep.subr.mxu0 0.0
    %1308 = vmatpush1.xpose.msra.mxu0 0.0
    %1309 = vmatprep.mubr.f32.mxu0 0.0
    %1310 = vmatmul.mubr.f32.gmra.mrb[0].mxu0 %v1241
    %v1311 = vpop.f32.mrb[0].mxu0
    %v1312 = vadd.f32 0.0, %v1311
    %v1313 = vpop.f32.mrb[0].mxu0
    %1314 = vdwg.mxu0
    %v1315 = vmul.f32 %v1312, 0.35355338
    %v1316 = vadd.f32 %v1315, %v981
    %v1317 = vsel %vm214, %v1316, -inf
    %1318 = vmax.xlane.f32.xlu0 %v1317
    %v1319 = vpop.xlane.xlu0 %1318
    %v1320 = vsub.f32 %v1316, %v1319
    %v1321 = vmul.f32 %v1320, 1.442695
    %v1322 = vpow.pop %v1321
    %v1323 = vsel %vm214, %v1322, 0.0
    %1324 = vadd.xlane.f32.xlu0 %v1323
    %v1325 = vpop.xlane.xlu0 %1324
    %v1326 = vrcp.pop %v1325
    %v1327 = vmul.f32 %v1322, %v1326
    %1328 = vrot.lane.b32.xlu0 %v208, 48
    %v1329 = vpop.permute.xlu0 %1328
    %v1332 = vsel %vm214, %v1327, 0
    %1334 = vmatprep.subr.mxu0 0.0
    %1335 = vmatpush1.msra.mxu0 %v1329
    %1336 = vmatprep.subr.mxu0 0.0
    %1337 = vmatpush1.msra.mxu0 0.0
    %1338 = vmatprep.subr.mxu0 0.0
    %1339 = vmatpush1.msra.mxu0 0.0
    %1340 = vmatprep.subr.mxu0 0.0
    %1341 = vmatpush1.msra.mxu0 0.0
    %1342 = vmatprep.subr.mxu0 0.0
    %1343 = vmatpush1.msra.mxu0 0.0
    %1344 = vmatprep.subr.mxu0 0.0
    %1345 = vmatpush1.msra.mxu0 0.0
    %1346 = vmatprep.subr.mxu0 0.0
    %1347 = vmatpush1.msra.mxu0 0.0
    %1348 = vmatprep.subr.mxu0 0.0
    %1349 = vmatpush1.msra.mxu0 0.0
    %1350 = vmatprep.subr.mxu0 0.0
    %1351 = vmatpush1.msra.mxu0 0.0
    %1352 = vmatprep.subr.mxu0 0.0
    %1353 = vmatpush1.msra.mxu0 0.0
    %1354 = vmatprep.subr.mxu0 0.0
    %1355 = vmatpush1.msra.mxu0 0.0
    %1356 = vmatprep.subr.mxu0 0.0
    %1357 = vmatpush1.msra.mxu0 0.0
    %1358 = vmatprep.subr.mxu0 0.0
    %1359 = vmatpush1.msra.mxu0 0.0
    %1360 = vmatprep.subr.mxu0 0.0
    %1361 = vmatpush1.msra.mxu0 0.0
    %1362 = vmatprep.subr.mxu0 0.0
    %1363 = vmatpush1.msra.mxu0 0.0
    %1364 = vmatprep.subr.mxu0 0.0
    %1365 = vmatpush1.msra.mxu0 0.0
    %1366 = vmatprep.subr.mxu0 0.0
    %1367 = vmatpush1.msra.mxu0 0.0
    %1368 = vmatprep.subr.mxu0 0.0
    %1369 = vmatpush1.msra.mxu0 0.0
    %1370 = vmatprep.subr.mxu0 0.0
    %1371 = vmatpush1.msra.mxu0 0.0
    %1372 = vmatprep.subr.mxu0 0.0
    %1373 = vmatpush1.msra.mxu0 0.0
    %1374 = vmatprep.subr.mxu0 0.0
    %1375 = vmatpush1.msra.mxu0 0.0
    %1376 = vmatprep.subr.mxu0 0.0
    %1377 = vmatpush1.msra.mxu0 0.0
    %1378 = vmatprep.subr.mxu0 0.0
    %1379 = vmatpush1.msra.mxu0 0.0
    %1380 = vmatprep.subr.mxu0 0.0
    %1381 = vmatpush1.msra.mxu0 0.0
    %1382 = vmatprep.subr.mxu0 0.0
    %1383 = vmatpush1.msra.mxu0 0.0
    %1384 = vmatprep.subr.mxu0 0.0
    %1385 = vmatpush1.msra.mxu0 0.0
    %1386 = vmatprep.subr.mxu0 0.0
    %1387 = vmatpush1.msra.mxu0 0.0
    %1388 = vmatprep.subr.mxu0 0.0
    %1389 = vmatpush1.msra.mxu0 0.0
    %1390 = vmatprep.subr.mxu0 0.0
    %1391 = vmatpush1.msra.mxu0 0.0
    %1392 = vmatprep.subr.mxu0 0.0
    %1393 = vmatpush1.msra.mxu0 0.0
    %1394 = vmatprep.subr.mxu0 0.0
    %1395 = vmatpush1.msra.mxu0 0.0
    %1396 = vmatprep.subr.mxu0 0.0
    %1397 = vmatpush1.msra.mxu0 0.0
    %1398 = vmatprep.mubr.f32.mxu0 0.0
    %1399 = vmatmul.mubr.f32.gmra.mrb[0].mxu0 %v1332
    %v1400 = vpop.f32.mrb[0].mxu0
    %v1401 = vadd.f32 0.0, %v1400
    %v1402 = vpop.f32.mrb[0].mxu0
    %1403 = vdwg.mxu0
    %1404 = vrot.lane.b32.xlu0 %v208, 104
    %v1405 = vpop.permute.xlu0 %1404
    %1406 = vrot.lane.b32.xlu0 %v208, 72
    %v1407 = vpop.permute.xlu0 %1406
    %v1408 = vsel %vm214, %v1405, 0
    %v1410 = vsel %vm214, %v1407, 0
    %1412 = vmatprep.subr.mxu0 0.0
    %1413 = vmatpush1.xpose.msra.mxu0 %v1410
    %1414 = vmatprep.subr.mxu0 0.0
    %1415 = vmatpush1.xpose.msra.mxu0 0.0
    %1416 = vmatprep.subr.mxu0 0.0
    %1417 = vmatpush1.xpose.msra.mxu0 0.0
    %1418 = vmatprep.subr.mxu0 0.0
    %1419 = vmatpush1.xpose.msra.mxu0 0.0
    %1420 = vmatprep.subr.mxu0 0.0
    %1421 = vmatpush1.xpose.msra.mxu0 0.0
    %1422 = vmatprep.subr.mxu0 0.0
    %1423 = vmatpush1.xpose.msra.mxu0 0.0
    %1424 = vmatprep.subr.mxu0 0.0
    %1425 = vmatpush1.xpose.msra.mxu0 0.0
    %1426 = vmatprep.subr.mxu0 0.0
    %1427 = vmatpush1.xpose.msra.mxu0 0.0
    %1428 = vmatprep.subr.mxu0 0.0
    %1429 = vmatpush1.xpose.msra.mxu0 0.0
    %1430 = vmatprep.subr.mxu0 0.0
    %1431 = vmatpush1.xpose.msra.mxu0 0.0
    %1432 = vmatprep.subr.mxu0 0.0
    %1433 = vmatpush1.xpose.msra.mxu0 0.0
    %1434 = vmatprep.subr.mxu0 0.0
    %1435 = vmatpush1.xpose.msra.mxu0 0.0
    %1436 = vmatprep.subr.mxu0 0.0
    %1437 = vmatpush1.xpose.msra.mxu0 0.0
    %1438 = vmatprep.subr.mxu0 0.0
    %1439 = vmatpush1.xpose.msra.mxu0 0.0
    %1440 = vmatprep.subr.mxu0 0.0
    %1441 = vmatpush1.xpose.msra.mxu0 0.0
    %1442 = vmatprep.subr.mxu0 0.0
    %1443 = vmatpush1.xpose.msra.mxu0 0.0
    %1444 = vmatprep.subr.mxu0 0.0
    %1445 = vmatpush1.xpose.msra.mxu0 0.0
    %1446 = vmatprep.subr.mxu0 0.0
    %1447 = vmatpush1.xpose.msra.mxu0 0.0
    %1448 = vmatprep.subr.mxu0 0.0
    %1449 = vmatpush1.xpose.msra.mxu0 0.0
    %1450 = vmatprep.subr.mxu0 0.0
    %1451 = vmatpush1.xpose.msra.mxu0 0.0
    %1452 = vmatprep.subr.mxu0 0.0
    %1453 = vmatpush1.xpose.msra.mxu0 0.0
    %1454 = vmatprep.subr.mxu0 0.0
    %1455 = vmatpush1.xpose.msra.mxu0 0.0
    %1456 = vmatprep.subr.mxu0 0.0
    %1457 = vmatpush1.xpose.msra.mxu0 0.0
    %1458 = vmatprep.subr.mxu0 0.0
    %1459 = vmatpush1.xpose.msra.mxu0 0.0
    %1460 = vmatprep.subr.mxu0 0.0
    %1461 = vmatpush1.xpose.msra.mxu0 0.0
    %1462 = vmatprep.subr.mxu0 0.0
    %1463 = vmatpush1.xpose.msra.mxu0 0.0
    %1464 = vmatprep.subr.mxu0 0.0
    %1465 = vmatpush1.xpose.msra.mxu0 0.0
    %1466 = vmatprep.subr.mxu0 0.0
    %1467 = vmatpush1.xpose.msra.mxu0 0.0
    %1468 = vmatprep.subr.mxu0 0.0
    %1469 = vmatpush1.xpose.msra.mxu0 0.0
    %1470 = vmatprep.subr.mxu0 0.0
    %1471 = vmatpush1.xpose.msra.mxu0 0.0
    %1472 = vmatprep.subr.mxu0 0.0
    %1473 = vmatpush1.xpose.msra.mxu0 0.0
    %1474 = vmatprep.subr.mxu0 0.0
    %1475 = vmatpush1.xpose.msra.mxu0 0.0
    %1476 = vmatprep.mubr.f32.mxu0 0.0
    %1477 = vmatmul.mubr.f32.gmra.mrb[0].mxu0 %v1408
    %v1478 = vpop.f32.mrb[0].mxu0
    %v1479 = vadd.f32 0.0, %v1478
    %v1480 = vpop.f32.mrb[0].mxu0
    %1481 = vdwg.mxu0
    %v1482 = vmul.f32 %v1479, 0.35355338
    %v1483 = vadd.f32 %v1482, %v981
    %v1484 = vsel %vm214, %v1483, -inf
    %1485 = vmax.xlane.f32.xlu0 %v1484
    %v1486 = vpop.xlane.xlu0 %1485
    %v1487 = vsub.f32 %v1483, %v1486
    %v1488 = vmul.f32 %v1487, 1.442695
    %v1489 = vpow.pop %v1488
    %v1490 = vsel %vm214, %v1489, 0.0
    %1491 = vadd.xlane.f32.xlu0 %v1490
    %v1492 = vpop.xlane.xlu0 %1491
    %v1493 = vrcp.pop %v1492
    %v1494 = vmul.f32 %v1489, %v1493
    %1495 = vrot.lane.b32.xlu0 %v208, 40
    %v1496 = vpop.permute.xlu0 %1495
    %v1499 = vsel %vm214, %v1494, 0
    %1501 = vmatprep.subr.mxu0 0.0
    %1502 = vmatpush1.msra.mxu0 %v1496
    %1503 = vmatprep.subr.mxu0 0.0
    %1504 = vmatpush1.msra.mxu0 0.0
    %1505 = vmatprep.subr.mxu0 0.0
    %1506 = vmatpush1.msra.mxu0 0.0
    %1507 = vmatprep.subr.mxu0 0.0
    %1508 = vmatpush1.msra.mxu0 0.0
    %1509 = vmatprep.subr.mxu0 0.0
    %1510 = vmatpush1.msra.mxu0 0.0
    %1511 = vmatprep.subr.mxu0 0.0
    %1512 = vmatpush1.msra.mxu0 0.0
    %1513 = vmatprep.subr.mxu0 0.0
    %1514 = vmatpush1.msra.mxu0 0.0
    %1515 = vmatprep.subr.mxu0 0.0
    %1516 = vmatpush1.msra.mxu0 0.0
    %1517 = vmatprep.subr.mxu0 0.0
    %1518 = vmatpush1.msra.mxu0 0.0
    %1519 = vmatprep.subr.mxu0 0.0
    %1520 = vmatpush1.msra.mxu0 0.0
    %1521 = vmatprep.subr.mxu0 0.0
    %1522 = vmatpush1.msra.mxu0 0.0
    %1523 = vmatprep.subr.mxu0 0.0
    %1524 = vmatpush1.msra.mxu0 0.0
    %1525 = vmatprep.subr.mxu0 0.0
    %1526 = vmatpush1.msra.mxu0 0.0
    %1527 = vmatprep.subr.mxu0 0.0
    %1528 = vmatpush1.msra.mxu0 0.0
    %1529 = vmatprep.subr.mxu0 0.0
    %1530 = vmatpush1.msra.mxu0 0.0
    %1531 = vmatprep.subr.mxu0 0.0
    %1532 = vmatpush1.msra.mxu0 0.0
    %1533 = vmatprep.subr.mxu0 0.0
    %1534 = vmatpush1.msra.mxu0 0.0
    %1535 = vmatprep.subr.mxu0 0.0
    %1536 = vmatpush1.msra.mxu0 0.0
    %1537 = vmatprep.subr.mxu0 0.0
    %1538 = vmatpush1.msra.mxu0 0.0
    %1539 = vmatprep.subr.mxu0 0.0
    %1540 = vmatpush1.msra.mxu0 0.0
    %1541 = vmatprep.subr.mxu0 0.0
    %1542 = vmatpush1.msra.mxu0 0.0
    %1543 = vmatprep.subr.mxu0 0.0
    %1544 = vmatpush1.msra.mxu0 0.0
    %1545 = vmatprep.subr.mxu0 0.0
    %1546 = vmatpush1.msra.mxu0 0.0
    %1547 = vmatprep.subr.mxu0 0.0
    %1548 = vmatpush1.msra.mxu0 0.0
    %1549 = vmatprep.subr.mxu0 0.0
    %1550 = vmatpush1.msra.mxu0 0.0
    %1551 = vmatprep.subr.mxu0 0.0
    %1552 = vmatpush1.msra.mxu0 0.0
    %1553 = vmatprep.subr.mxu0 0.0
    %1554 = vmatpush1.msra.mxu0 0.0
    %1555 = vmatprep.subr.mxu0 0.0
    %1556 = vmatpush1.msra.mxu0 0.0
    %1557 = vmatprep.subr.mxu0 0.0
    %1558 = vmatpush1.msra.mxu0 0.0
    %1559 = vmatprep.subr.mxu0 0.0
    %1560 = vmatpush1.msra.mxu0 0.0
    %1561 = vmatprep.subr.mxu0 0.0
    %1562 = vmatpush1.msra.mxu0 0.0
    %1563 = vmatprep.subr.mxu0 0.0
    %1564 = vmatpush1.msra.mxu0 0.0
    %1565 = vmatprep.mubr.f32.mxu0 0.0
    %1566 = vmatmul.mubr.f32.gmra.mrb[0].mxu0 %v1499
    %v1567 = vpop.f32.mrb[0].mxu0
    %v1568 = vadd.f32 0.0, %v1567
    %v1569 = vpop.f32.mrb[0].mxu0
    %1570 = vdwg.mxu0
    %1572 = vrot.lane.b32.xlu0 %v1234, 8
    %v1573 = vpop.permute.xlu0 %1572
    %1576 = vrot.lane.b32.xlu0 %v1401, 16
    %v1577 = vpop.permute.xlu0 %1576
    %1580 = vrot.lane.b32.xlu0 %v1568, 24
    %v1581 = vpop.permute.xlu0 %1580
    %v1583 = vsel %vm214, %v1067, %v1573
    %v1584 = vsel %vm896, %v1583, %v1577
    %v1585 = vsel %vm898, %v1584, %v1581
    %v1586 = vld [vmem:[%s8] sm:$0xff]
    %v1587 = vld [vmem:[%s8 + $0x8] sm:$0xff]
    %v1588 = vld [vmem:[%s8 + $0x10] sm:$0xff]
    %v1589 = vld [vmem:[%s8 + $0x18] sm:$0xff]
    %v1590 = vld [vmem:[%s9] sm:$0x1]
    %v1592 = vlaneseq
    %v1593 = vshrl.u32 %v1592, 7
    %v1594 = vsub.s32 0, %v1593
    %v1595 = vrot.slane %v1590, %v1594
    %v1598 = vsel %vm72, %v899, 0
    %v1601 = vsel %vm72, %v1585, 0
    %1603 = vmatprep.subr.mxu0 0.0
    %1604 = vmatpush1.msra.mxu0 %v1586
    %1605 = vmatprep.subr.mxu0 0.0
    %1606 = vmatpush1.msra.mxu0 %v1587
    %1607 = vmatprep.subr.mxu0 0.0
    %1608 = vmatpush1.msra.mxu0 %v1588
    %1609 = vmatprep.subr.mxu0 0.0
    %1610 = vmatpush1.msra.mxu0 %v1589
    %1611 = vmatprep.subr.mxu0 0.0
    %1612 = vmatpush1.msra.mxu0 0.0
    %1613 = vmatprep.subr.mxu0 0.0
    %1614 = vmatpush1.msra.mxu0 0.0
    %1615 = vmatprep.subr.mxu0 0.0
    %1616 = vmatpush1.msra.mxu0 0.0
    %1617 = vmatprep.subr.mxu0 0.0
    %1618 = vmatpush1.msra.mxu0 0.0
    %1619 = vmatprep.subr.mxu0 0.0
    %1620 = vmatpush1.msra.mxu0 0.0
    %1621 = vmatprep.subr.mxu0 0.0
    %1622 = vmatpush1.msra.mxu0 0.0
    %1623 = vmatprep.subr.mxu0 0.0
    %1624 = vmatpush1.msra.mxu0 0.0
    %1625 = vmatprep.subr.mxu0 0.0
    %1626 = vmatpush1.msra.mxu0 0.0
    %1627 = vmatprep.subr.mxu0 0.0
    %1628 = vmatpush1.msra.mxu0 0.0
    %1629 = vmatprep.subr.mxu0 0.0
    %1630 = vmatpush1.msra.mxu0 0.0
    %1631 = vmatprep.subr.mxu0 0.0
    %1632 = vmatpush1.msra.mxu0 0.0
    %1633 = vmatprep.subr.mxu0 0.0
    %1634 = vmatpush1.msra.mxu0 0.0
    %1635 = vmatprep.subr.mxu0 0.0
    %1636 = vmatpush1.msra.mxu0 0.0
    %1637 = vmatprep.subr.mxu0 0.0
    %1638 = vmatpush1.msra.mxu0 0.0
    %1639 = vmatprep.subr.mxu0 0.0
    %1640 = vmatpush1.msra.mxu0 0.0
    %1641 = vmatprep.subr.mxu0 0.0
    %1642 = vmatpush1.msra.mxu0 0.0
    %1643 = vmatprep.subr.mxu0 0.0
    %1644 = vmatpush1.msra.mxu0 0.0
    %1645 = vmatprep.subr.mxu0 0.0
    %1646 = vmatpush1.msra.mxu0 0.0
    %1647 = vmatprep.subr.mxu0 0.0
    %1648 = vmatpush1.msra.mxu0 0.0
    %1649 = vmatprep.subr.mxu0 0.0
    %1650 = vmatpush1.msra.mxu0 0.0
    %1651 = vmatprep.subr.mxu0 0.0
    %1652 = vmatpush1.msra.mxu0 0.0
    %1653 = vmatprep.subr.mxu0 0.0
    %1654 = vmatpush1.msra.mxu0 0.0
    %1655 = vmatprep.subr.mxu0 0.0
    %1656 = vmatpush1.msra.mxu0 0.0
    %1657 = vmatprep.subr.mxu0 0.0
    %1658 = vmatpush1.msra.mxu0 0.0
    %1659 = vmatprep.subr.mxu0 0.0
    %1660 = vmatpush1.msra.mxu0 0.0
    %1661 = vmatprep.subr.mxu0 0.0
    %1662 = vmatpush1.msra.mxu0 0.0
    %1663 = vmatprep.subr.mxu0 0.0
    %1664 = vmatpush1.msra.mxu0 0.0
    %1665 = vmatprep.subr.mxu0 0.0
    %1666 = vmatpush1.msra.mxu0 0.0
    %1667 = vmatprep.mubr.f32.mxu0 0.0
    %1668 = vmatmul.mubr.f32.gmra.mrb[0].mxu0 %v1598
    %v1669 = vpop.f32.mrb[0].mxu0
    %v1670 = vadd.f32 %v1595, %v1669
    %v1671 = vpop.f32.mrb[0].mxu0
    %1672 = vmatprep.mubr.f32.mxu0 0.0
    %1673 = vmatmul.mubr.f32.gmra.mrb[0].mxu0 %v1601
    %v1674 = vpop.f32.mrb[0].mxu0
    %v1675 = vadd.f32 %v1595, %v1674
    %v1676 = vpop.f32.mrb[0].mxu0
    %1677 = vdwg.mxu0
    %v1678 = vadd.f32 %v1670, %v114
    %v1679 = vadd.f32 %v1675, %v115
    %v1680 = vld [vmem:[%s10] sm:$0x1]
    %v1681 = vld [vmem:[%s11] sm:$0x1]
    %v1682 = vsel %vm72, %v1678, 0.0
    %1683 = vadd.xlane.f32.xlu0 %v1682
    %v1684 = vpop.xlane.xlu0 %1683
    %v1685 = vsel %vm72, %v1679, 0.0
    %1686 = vadd.xlane.f32.xlu0 %v1685
    %v1687 = vpop.xlane.xlu0 %1686
    %v1688 = vmul.f32 %v1684, %v79
    %v1689 = vmul.f32 %v1687, %v79
    %v1690 = vsub.f32 %v1678, %v1688
    %v1691 = vsub.f32 %v1679, %v1689
    %v1692 = vmul.f32 %v1690, %v1690
    %v1693 = vmul.f32 %v1691, %v1691
    %v1694 = vsel %vm72, %v1692, 0.0
    %1695 = vadd.xlane.f32.xlu0 %v1694
    %v1696 = vpop.xlane.xlu0 %1695
    %v1697 = vsel %vm72, %v1693, 0.0
    %1698 = vadd.xlane.f32.xlu0 %v1697
    %v1699 = vpop.xlane.xlu0 %1698
    %v1700 = vmul.f32 %v1696, %v79
    %v1701 = vmul.f32 %v1699, %v79
    %v1702 = vadd.f32 %v1700, 1e-12
    %v1703 = vadd.f32 %v1701, 1e-12
    %v1704 = vrsqrt.pop %v1702
    %v1705 = vrsqrt.pop %v1703
    %v1706 = vmul.f32 %v1690, %v1704
    %v1707 = vmul.f32 %v1691, %v1705
    %v1709 = vlaneseq
    %v1710 = vshrl.u32 %v1709, 7
    %v1711 = vsub.s32 0, %v1710
    %v1712 = vrot.slane %v1680, %v1711
    %v1714 = vmul.f32 %v1706, %v1712
    %v1715 = vmul.f32 %v1707, %v1712
    %v1717 = vlaneseq
    %v1718 = vshrl.u32 %v1717, 7
    %v1719 = vsub.s32 0, %v1718
    %v1720 = vrot.slane %v1681, %v1719
    %v1722 = vadd.f32 %v1714, %v1720
    %v1723 = vadd.f32 %v1715, %v1720
    %v1724 = vld [vmem:[%s12] sm:$0xff]
    %v1725 = vld [vmem:[%s12 + $0x8] sm:$0xff]
    %v1726 = vld [vmem:[%s12 + $0x10] sm:$0xff]
    %v1727 = vld [vmem:[%s12 + $0x18] sm:$0xff]
    %v1728 = vld [vmem:[%s13] sm:$0x1]
    %v1730 = vlaneseq
    %v1731 = vshrl.u32 %v1730, 7
    %v1732 = vsub.s32 0, %v1731
    %v1733 = vrot.slane %v1728, %v1732
    %v1736 = vsel %vm72, %v1722, 0
    %v1739 = vsel %vm72, %v1723, 0
    %1741 = vmatprep.subr.mxu0 0.0
    %1742 = vmatpush1.msra.mxu0 %v1724
    %1743 = vmatprep.subr.mxu0 0.0
    %1744 = vmatpush1.msra.mxu0 %v1725
    %1745 = vmatprep.subr.mxu0 0.0
    %1746 = vmatpush1.msra.mxu0 %v1726
    %1747 = vmatprep.subr.mxu0 0.0
    %1748 = vmatpush1.msra.mxu0 %v1727
    %1749 = vmatprep.subr.mxu0 0.0
    %1750 = vmatpush1.msra.mxu0 0.0
    %1751 = vmatprep.subr.mxu0 0.0
    %1752 = vmatpush1.msra.mxu0 0.0
    %1753 = vmatprep.subr.mxu0 0.0
    %1754 = vmatpush1.msra.mxu0 0.0
    %1755 = vmatprep.subr.mxu0 0.0
    %1756 = vmatpush1.msra.mxu0 0.0
    %1757 = vmatprep.subr.mxu0 0.0
    %1758 = vmatpush1.msra.mxu0 0.0
    %1759 = vmatprep.subr.mxu0 0.0
    %1760 = vmatpush1.msra.mxu0 0.0
    %1761 = vmatprep.subr.mxu0 0.0
    %1762 = vmatpush1.msra.mxu0 0.0
    %1763 = vmatprep.subr.mxu0 0.0
    %1764 = vmatpush1.msra.mxu0 0.0
    %1765 = vmatprep.subr.mxu0 0.0
    %1766 = vmatpush1.msra.mxu0 0.0
    %1767 = vmatprep.subr.mxu0 0.0
    %1768 = vmatpush1.msra.mxu0 0.0
    %1769 = vmatprep.subr.mxu0 0.0
    %1770 = vmatpush1.msra.mxu0 0.0
    %1771 = vmatprep.subr.mxu0 0.0
    %1772 = vmatpush1.msra.mxu0 0.0
    %1773 = vmatprep.subr.mxu0 0.0
    %1774 = vmatpush1.msra.mxu0 0.0
    %1775 = vmatprep.subr.mxu0 0.0
    %1776 = vmatpush1.msra.mxu0 0.0
    %1777 = vmatprep.subr.mxu0 0.0
    %1778 = vmatpush1.msra.mxu0 0.0
    %1779 = vmatprep.subr.mxu0 0.0
    %1780 = vmatpush1.msra.mxu0 0.0
    %1781 = vmatprep.subr.mxu0 0.0
    %1782 = vmatpush1.msra.mxu0 0.0
    %1783 = vmatprep.subr.mxu0 0.0
    %1784 = vmatpush1.msra.mxu0 0.0
    %1785 = vmatprep.subr.mxu0 0.0
    %1786 = vmatpush1.msra.mxu0 0.0
    %1787 = vmatprep.subr.mxu0 0.0
    %1788 = vmatpush1.msra.mxu0 0.0
    %1789 = vmatprep.subr.mxu0 0.0
    %1790 = vmatpush1.msra.mxu0 0.0
    %1791 = vmatprep.subr.mxu0 0.0
    %1792 = vmatpush1.msra.mxu0 0.0
    %1793 = vmatprep.subr.mxu0 0.0
    %1794 = vmatpush1.msra.mxu0 0.0
    %1795 = vmatprep.subr.mxu0 0.0
    %1796 = vmatpush1.msra.mxu0 0.0
    %1797 = vmatprep.subr.mxu0 0.0
    %1798 = vmatpush1.msra.mxu0 0.0
    %1799 = vmatprep.subr.mxu0 0.0
    %1800 = vmatpush1.msra.mxu0 0.0
    %1801 = vmatprep.subr.mxu0 0.0
    %1802 = vmatpush1.msra.mxu0 0.0
    %1803 = vmatprep.subr.mxu0 0.0
    %1804 = vmatpush1.msra.mxu0 0.0
    %1805 = vmatprep.mubr.f32.mxu0 0.0
    %1806 = vmatmul.mubr.f32.gmra.mrb[0].mxu0 %v1736
    %v1807 = vpop.f32.mrb[0].mxu0
    %v1808 = vadd.f32 %v1733, %v1807
    %v1809 = vpop.f32.mrb[0].mxu0
    %1810 = vmatprep.mubr.f32.mxu0 0.0
    %1811 = vmatmul.mubr.f32.gmra.mrb[0].mxu0 %v1739
    %v1812 = vpop.f32.mrb[0].mxu0
    %v1813 = vadd.f32 %v1733, %v1812
    %v1814 = vpop.f32.mrb[0].mxu0
    %1815 = vdwg.mxu0
    %v1816 = vmul.f32 %v1808, 0.5
    %v1817 = vmul.f32 %v1813, 0.5
    %v1818 = vmul.f32 %v1808, 0.044715
    %v1819 = vmul.f32 %v1813, 0.044715
    %v1820 = vmul.f32 %v1818, %v1808
    %v1821 = vmul.f32 %v1819, %v1813
    %v1822 = vmul.f32 %v1820, %v1808
    %v1823 = vmul.f32 %v1821, %v1813
    %v1824 = vadd.f32 %v1808, %v1822
    %v1825 = vadd.f32 %v1813, %v1823
    %v1826 = vmul.f32 %v1824, 0.7978846
    %v1827 = vmul.f32 %v1825, 0.7978846
    %v1828 = vtanh.pop %v1826
    %v1829 = vtanh.pop %v1827
    %v1830 = vadd.f32 %v1828, 1.0
    %v1831 = vadd.f32 %v1829, 1.0
    %v1832 = vmul.f32 %v1816, %v1830
    %v1833 = vmul.f32 %v1817, %v1831
    %v1834 = vld [vmem:[%s14] sm:$0xff]
    %v1835 = vld [vmem:[%s14 + $0x8] sm:$0xff]
    %v1836 = vld [vmem:[%s14 + $0x10] sm:$0xff]
    %v1837 = vld [vmem:[%s14 + $0x18] sm:$0xff]
    %v1838 = vld [vmem:[%s14 + $0x20] sm:$0xff]
    %v1839 = vld [vmem:[%s14 + $0x28] sm:$0xff]
    %v1840 = vld [vmem:[%s14 + $0x30] sm:$0xff]
    %v1841 = vld [vmem:[%s14 + $0x38] sm:$0xff]
    %v1842 = vld [vmem:[%s15] sm:$0x1]
    %v1844 = vlaneseq
    %v1845 = vshrl.u32 %v1844, 7
    %v1846 = vsub.s32 0, %v1845
    %v1847 = vrot.slane %v1842, %v1846
    %vm1849 = vcmask 523264
    %v1851 = vsel %vm1849, %v1832, 0
    %v1854 = vsel %vm1849, %v1833, 0
    %1856 = vmatprep.subr.mxu0 0.0
    %1857 = vmatpush1.msra.mxu0 %v1834
    %1858 = vmatprep.subr.mxu0 0.0
    %1859 = vmatpush1.msra.mxu0 %v1835
    %1860 = vmatprep.subr.mxu0 0.0
    %1861 = vmatpush1.msra.mxu0 %v1836
    %1862 = vmatprep.subr.mxu0 0.0
    %1863 = vmatpush1.msra.mxu0 %v1837
    %1864 = vmatprep.subr.mxu0 0.0
    %1865 = vmatpush1.msra.mxu0 %v1838
    %1866 = vmatprep.subr.mxu0 0.0
    %1867 = vmatpush1.msra.mxu0 %v1839
    %1868 = vmatprep.subr.mxu0 0.0
    %1869 = vmatpush1.msra.mxu0 %v1840
    %1870 = vmatprep.subr.mxu0 0.0
    %1871 = vmatpush1.msra.mxu0 %v1841
    %1872 = vmatprep.subr.mxu0 0.0
    %1873 = vmatpush1.msra.mxu0 0.0
    %1874 = vmatprep.subr.mxu0 0.0
    %1875 = vmatpush1.msra.mxu0 0.0
    %1876 = vmatprep.subr.mxu0 0.0
    %1877 = vmatpush1.msra.mxu0 0.0
    %1878 = vmatprep.subr.mxu0 0.0
    %1879 = vmatpush1.msra.mxu0 0.0
    %1880 = vmatprep.subr.mxu0 0.0
    %1881 = vmatpush1.msra.mxu0 0.0
    %1882 = vmatprep.subr.mxu0 0.0
    %1883 = vmatpush1.msra.mxu0 0.0
    %1884 = vmatprep.subr.mxu0 0.0
    %1885 = vmatpush1.msra.mxu0 0.0
    %1886 = vmatprep.subr.mxu0 0.0
    %1887 = vmatpush1.msra.mxu0 0.0
    %1888 = vmatprep.subr.mxu0 0.0
    %1889 = vmatpush1.msra.mxu0 0.0
    %1890 = vmatprep.subr.mxu0 0.0
    %1891 = vmatpush1.msra.mxu0 0.0
    %1892 = vmatprep.subr.mxu0 0.0
    %1893 = vmatpush1.msra.mxu0 0.0
    %1894 = vmatprep.subr.mxu0 0.0
    %1895 = vmatpush1.msra.mxu0 0.0
    %1896 = vmatprep.subr.mxu0 0.0
    %1897 = vmatpush1.msra.mxu0 0.0
    %1898 = vmatprep.subr.mxu0 0.0
    %1899 = vmatpush1.msra.mxu0 0.0
    %1900 = vmatprep.subr.mxu0 0.0
    %1901 = vmatpush1.msra.mxu0 0.0
    %1902 = vmatprep.subr.mxu0 0.0
    %1903 = vmatpush1.msra.mxu0 0.0
    %1904 = vmatprep.subr.mxu0 0.0
    %1905 = vmatpush1.msra.mxu0 0.0
    %1906 = vmatprep.subr.mxu0 0.0
    %1907 = vmatpush1.msra.mxu0 0.0
    %1908 = vmatprep.subr.mxu0 0.0
    %1909 = vmatpush1.msra.mxu0 0.0
    %1910 = vmatprep.subr.mxu0 0.0
    %1911 = vmatpush1.msra.mxu0 0.0
    %1912 = vmatprep.subr.mxu0 0.0
    %1913 = vmatpush1.msra.mxu0 0.0
    %1914 = vmatprep.subr.mxu0 0.0
    %1915 = vmatpush1.msra.mxu0 0.0
    %1916 = vmatprep.subr.mxu0 0.0
    %1917 = vmatpush1.msra.mxu0 0.0
    %1918 = vmatprep.subr.mxu0 0.0
    %1919 = vmatpush1.msra.mxu0 0.0
    %1920 = vmatprep.mubr.f32.mxu0 0.0
    %1921 = vmatmul.mubr.f32.gmra.mrb[0].mxu0 %v1851
    %v1922 = vpop.f32.mrb[0].mxu0
    %v1923 = vadd.f32 %v1847, %v1922
    %v1924 = vpop.f32.mrb[0].mxu0
    %1925 = vmatprep.mubr.f32.mxu0 0.0
    %1926 = vmatmul.mubr.f32.gmra.mrb[0].mxu0 %v1854
    %v1927 = vpop.f32.mrb[0].mxu0
    %v1928 = vadd.f32 %v1847, %v1927
    %v1929 = vpop.f32.mrb[0].mxu0
    %1930 = vdwg.mxu0
    %v1931 = vadd.f32 %v1923, %v1722
    %v1932 = vadd.f32 %v1928, %v1723
    %v1933 = vld [vmem:[%s16] sm:$0x1]
    %v1934 = vld [vmem:[%s17] sm:$0x1]
    %v1935 = vsel %vm72, %v1931, 0.0
    %1936 = vadd.xlane.f32.xlu0 %v1935
    %v1937 = vpop.xlane.xlu0 %1936
    %v1938 = vsel %vm72, %v1932, 0.0
    %1939 = vadd.xlane.f32.xlu0 %v1938
    %v1940 = vpop.xlane.xlu0 %1939
    %v1941 = vmul.f32 %v1937, %v79
    %v1942 = vmul.f32 %v1940, %v79
    %v1943 = vsub.f32 %v1931, %v1941
    %v1944 = vsub.f32 %v1932, %v1942
    %v1945 = vmul.f32 %v1943, %v1943
    %v1946 = vmul.f32 %v1944, %v1944
    %v1947 = vsel %vm72, %v1945, 0.0
    %1948 = vadd.xlane.f32.xlu0 %v1947
    %v1949 = vpop.xlane.xlu0 %1948
    %v1950 = vsel %vm72, %v1946, 0.0
    %1951 = vadd.xlane.f32.xlu0 %v1950
    %v1952 = vpop.xlane.xlu0 %1951
    %v1953 = vmul.f32 %v1949, %v79
    %v1954 = vmul.f32 %v1952, %v79
    %v1955 = vadd.f32 %v1953, 1e-12
    %v1956 = vadd.f32 %v1954, 1e-12
    %v1957 = vrsqrt.pop %v1955
    %v1958 = vrsqrt.pop %v1956
    %v1959 = vmul.f32 %v1943, %v1957
    %v1960 = vmul.f32 %v1944, %v1958
    %v1962 = vlaneseq
    %v1963 = vshrl.u32 %v1962, 7
    %v1964 = vsub.s32 0, %v1963
    %v1965 = vrot.slane %v1933, %v1964
    %v1967 = vmul.f32 %v1959, %v1965
    %v1968 = vmul.f32 %v1960, %v1965
    %v1970 = vlaneseq
    %v1971 = vshrl.u32 %v1970, 7
    %v1972 = vsub.s32 0, %v1971
    %v1973 = vrot.slane %v1934, %v1972
    %v1975 = vadd.f32 %v1967, %v1973
    %v1976 = vadd.f32 %v1968, %v1973
    %s1977 = scalar_lea.vmem %s6, 32
    %v1978 = vld [vmem:[%s1977] sm:$0xff]
    %v1979 = vld [vmem:[%s1977 + $0x8] sm:$0xff]
    %v1980 = vld [vmem:[%s1977 + $0x10] sm:$0xff]
    %v1981 = vld [vmem:[%s1977 + $0x18] sm:$0xff]
    %s1982 = scalar_lea.vmem %s7, 1
    %v1983 = vld [vmem:[%s1982] sm:$0x1]
    %v1985 = vlaneseq
    %v1986 = vshrl.u32 %v1985, 7
    %v1987 = vsub.s32 0, %v1986
    %v1988 = vrot.slane %v1983, %v1987
    %v1991 = vsel %vm72, %v1975, 0
    %v1994 = vsel %vm72, %v1976, 0
    %1996 = vmatprep.subr.mxu0 0.0
    %1997 = vmatpush1.msra.mxu0 %v1978
    %1998 = vmatprep.subr.mxu0 0.0
    %1999 = vmatpush1.msra.mxu0 %v1979
    %2000 = vmatprep.subr.mxu0 0.0
    %2001 = vmatpush1.msra.mxu0 %v1980
    %2002 = vmatprep.subr.mxu0 0.0
    %2003 = vmatpush1.msra.mxu0 %v1981
    %2004 = vmatprep.subr.mxu0 0.0
    %2005 = vmatpush1.msra.mxu0 0.0
    %2006 = vmatprep.subr.mxu0 0.0
    %2007 = vmatpush1.msra.mxu0 0.0
    %2008 = vmatprep.subr.mxu0 0.0
    %2009 = vmatpush1.msra.mxu0 0.0
    %2010 = vmatprep.subr.mxu0 0.0
    %2011 = vmatpush1.msra.mxu0 0.0
    %2012 = vmatprep.subr.mxu0 0.0
    %2013 = vmatpush1.msra.mxu0 0.0
    %2014 = vmatprep.subr.mxu0 0.0
    %2015 = vmatpush1.msra.mxu0 0.0
    %2016 = vmatprep.subr.mxu0 0.0
    %2017 = vmatpush1.msra.mxu0 0.0
    %2018 = vmatprep.subr.mxu0 0.0
    %2019 = vmatpush1.msra.mxu0 0.0
    %2020 = vmatprep.subr.mxu0 0.0
    %2021 = vmatpush1.msra.mxu0 0.0
    %2022 = vmatprep.subr.mxu0 0.0
    %2023 = vmatpush1.msra.mxu0 0.0
    %2024 = vmatprep.subr.mxu0 0.0
    %2025 = vmatpush1.msra.mxu0 0.0
    %2026 = vmatprep.subr.mxu0 0.0
    %2027 = vmatpush1.msra.mxu0 0.0
    %2028 = vmatprep.subr.mxu0 0.0
    %2029 = vmatpush1.msra.mxu0 0.0
    %2030 = vmatprep.subr.mxu0 0.0
    %2031 = vmatpush1.msra.mxu0 0.0
    %2032 = vmatprep.subr.mxu0 0.0
    %2033 = vmatpush1.msra.mxu0 0.0
    %2034 = vmatprep.subr.mxu0 0.0
    %2035 = vmatpush1.msra.mxu0 0.0
    %2036 = vmatprep.subr.mxu0 0.0
    %2037 = vmatpush1.msra.mxu0 0.0
    %2038 = vmatprep.subr.mxu0 0.0
    %2039 = vmatpush1.msra.mxu0 0.0
    %2040 = vmatprep.subr.mxu0 0.0
    %2041 = vmatpush1.msra.mxu0 0.0
    %2042 = vmatprep.subr.mxu0 0.0
    %2043 = vmatpush1.msra.mxu0 0.0
    %2044 = vmatprep.subr.mxu0 0.0
    %2045 = vmatpush1.msra.mxu0 0.0
    %2046 = vmatprep.subr.mxu0 0.0
    %2047 = vmatpush1.msra.mxu0 0.0
    %2048 = vmatprep.subr.mxu0 0.0
    %2049 = vmatpush1.msra.mxu0 0.0
    %2050 = vmatprep.subr.mxu0 0.0
    %2051 = vmatpush1.msra.mxu0 0.0
    %2052 = vmatprep.subr.mxu0 0.0
    %2053 = vmatpush1.msra.mxu0 0.0
    %2054 = vmatprep.subr.mxu0 0.0
    %2055 = vmatpush1.msra.mxu0 0.0
    %2056 = vmatprep.subr.mxu0 0.0
    %2057 = vmatpush1.msra.mxu0 0.0
    %2058 = vmatprep.subr.mxu0 0.0
    %2059 = vmatpush1.msra.mxu0 0.0
    %2060 = vmatprep.mubr.f32.mxu0 0.0
    %2061 = vmatmul.mubr.f32.gmra.mrb[0].mxu0 %v1991
    %v2062 = vpop.f32.mrb[0].mxu0
    %v2063 = vadd.f32 %v1988, %v2062
    %v2064 = vpop.f32.mrb[0].mxu0
    %2065 = vmatprep.mubr.f32.mxu0 0.0
    %2066 = vmatmul.mubr.f32.gmra.mrb[0].mxu0 %v1994
    %v2067 = vpop.f32.mrb[0].mxu0
    %v2068 = vadd.f32 %v1988, %v2067
    %v2069 = vpop.f32.mrb[0].mxu0
    %2070 = vdwg.mxu0
    %2072 = vrot.lane.b32.xlu0 %v2063, 96
    %v2073 = vpop.permute.xlu0 %2072
    %v2074 = vsel %vm214, %v2063, 0
    %v2076 = vsel %vm214, %v2073, 0
    %2078 = vmatprep.subr.mxu0 0.0
    %2079 = vmatpush1.xpose.msra.mxu0 %v2076
    %2080 = vmatprep.subr.mxu0 0.0
    %2081 = vmatpush1.xpose.msra.mxu0 0.0
    %2082 = vmatprep.subr.mxu0 0.0
    %2083 = vmatpush1.xpose.msra.mxu0 0.0
    %2084 = vmatprep.subr.mxu0 0.0
    %2085 = vmatpush1.xpose.msra.mxu0 0.0
    %2086 = vmatprep.subr.mxu0 0.0
    %2087 = vmatpush1.xpose.msra.mxu0 0.0
    %2088 = vmatprep.subr.mxu0 0.0
    %2089 = vmatpush1.xpose.msra.mxu0 0.0
    %2090 = vmatprep.subr.mxu0 0.0
    %2091 = vmatpush1.xpose.msra.mxu0 0.0
    %2092 = vmatprep.subr.mxu0 0.0
    %2093 = vmatpush1.xpose.msra.mxu0 0.0
    %2094 = vmatprep.subr.mxu0 0.0
    %2095 = vmatpush1.xpose.msra.mxu0 0.0
    %2096 = vmatprep.subr.mxu0 0.0
    %2097 = vmatpush1.xpose.msra.mxu0 0.0
    %2098 = vmatprep.subr.mxu0 0.0
    %2099 = vmatpush1.xpose.msra.mxu0 0.0
    %2100 = vmatprep.subr.mxu0 0.0
    %2101 = vmatpush1.xpose.msra.mxu0 0.0
    %2102 = vmatprep.subr.mxu0 0.0
    %2103 = vmatpush1.xpose.msra.mxu0 0.0
    %2104 = vmatprep.subr.mxu0 0.0
    %2105 = vmatpush1.xpose.msra.mxu0 0.0
    %2106 = vmatprep.subr.mxu0 0.0
    %2107 = vmatpush1.xpose.msra.mxu0 0.0
    %2108 = vmatprep.subr.mxu0 0.0
    %2109 = vmatpush1.xpose.msra.mxu0 0.0
    %2110 = vmatprep.subr.mxu0 0.0
    %2111 = vmatpush1.xpose.msra.mxu0 0.0
    %2112 = vmatprep.subr.mxu0 0.0
    %2113 = vmatpush1.xpose.msra.mxu0 0.0
    %2114 = vmatprep.subr.mxu0 0.0
    %2115 = vmatpush1.xpose.msra.mxu0 0.0
    %2116 = vmatprep.subr.mxu0 0.0
    %2117 = vmatpush1.xpose.msra.mxu0 0.0
    %2118 = vmatprep.subr.mxu0 0.0
    %2119 = vmatpush1.xpose.msra.mxu0 0.0
    %2120 = vmatprep.subr.mxu0 0.0
    %2121 = vmatpush1.xpose.msra.mxu0 0.0
    %2122 = vmatprep.subr.mxu0 0.0
    %2123 = vmatpush1.xpose.msra.mxu0 0.0
    %2124 = vmatprep.subr.mxu0 0.0
    %2125 = vmatpush1.xpose.msra.mxu0 0.0
    %2126 = vmatprep.subr.mxu0 0.0
    %2127 = vmatpush1.xpose.msra.mxu0 0.0
    %2128 = vmatprep.subr.mxu0 0.0
    %2129 = vmatpush1.xpose.msra.mxu0 0.0
    %2130 = vmatprep.subr.mxu0 0.0
    %2131 = vmatpush1.xpose.msra.mxu0 0.0
    %2132 = vmatprep.subr.mxu0 0.0
    %2133 = vmatpush1.xpose.msra.mxu0 0.0
    %2134 = vmatprep.subr.mxu0 0.0
    %2135 = vmatpush1.xpose.msra.mxu0 0.0
    %2136 = vmatprep.subr.mxu0 0.0
    %2137 = vmatpush1.xpose.msra.mxu0 0.0
    %2138 = vmatprep.subr.mxu0 0.0
    %2139 = vmatpush1.xpose.msra.mxu0 0.0
    %2140 = vmatprep.subr.mxu0 0.0
    %2141 = vmatpush1.xpose.msra.mxu0 0.0
    %2142 = vmatprep.mubr.f32.mxu0 0.0
    %2143 = vmatmul.mubr.f32.gmra.mrb[0].mxu0 %v2074
    %v2144 = vpop.f32.mrb[0].mxu0
    %v2145 = vadd.f32 0.0, %v2144
    %v2146 = vpop.f32.mrb[0].mxu0
    %2147 = vdwg.mxu0
    %v2148 = vmul.f32 %v2145, 0.35355338
    %v2149 = vadd.f32 %v2148, %v293
    %v2150 = vsel %vm214, %v2149, -inf
    %2151 = vmax.xlane.f32.xlu0 %v2150
    %v2152 = vpop.xlane.xlu0 %2151
    %v2153 = vsub.f32 %v2149, %v2152
    %v2154 = vmul.f32 %v2153, 1.442695
    %v2155 = vpow.pop %v2154
    %v2156 = vsel %vm214, %v2155, 0.0
    %2157 = vadd.xlane.f32.xlu0 %v2156
    %v2158 = vpop.xlane.xlu0 %2157
    %v2159 = vrcp.pop %v2158
    %v2160 = vmul.f32 %v2155, %v2159
    %2161 = vrot.lane.b32.xlu0 %v2063, 64
    %v2162 = vpop.permute.xlu0 %2161
    %v2165 = vsel %vm214, %v2160, 0
    %2167 = vmatprep.subr.mxu0 0.0
    %2168 = vmatpush1.msra.mxu0 %v2162
    %2169 = vmatprep.subr.mxu0 0.0
    %2170 = vmatpush1.msra.mxu0 0.0
    %2171 = vmatprep.subr.mxu0 0.0
    %2172 = vmatpush1.msra.mxu0 0.0
    %2173 = vmatprep.subr.mxu0 0.0
    %2174 = vmatpush1.msra.mxu0 0.0
    %2175 = vmatprep.subr.mxu0 0.0
    %2176 = vmatpush1.msra.mxu0 0.0
    %2177 = vmatprep.subr.mxu0 0.0
    %2178 = vmatpush1.msra.mxu0 0.0
    %2179 = vmatprep.subr.mxu0 0.0
    %2180 = vmatpush1.msra.mxu0 0.0
    %2181 = vmatprep.subr.mxu0 0.0
    %2182 = vmatpush1.msra.mxu0 0.0
    %2183 = vmatprep.subr.mxu0 0.0
    %2184 = vmatpush1.msra.mxu0 0.0
    %2185 = vmatprep.subr.mxu0 0.0
    %2186 = vmatpush1.msra.mxu0 0.0
    %2187 = vmatprep.subr.mxu0 0.0
    %2188 = vmatpush1.msra.mxu0 0.0
    %2189 = vmatprep.subr.mxu0 0.0
    %2190 = vmatpush1.msra.mxu0 0.0
    %2191 = vmatprep.subr.mxu0 0.0
    %2192 = vmatpush1.msra.mxu0 0.0
    %2193 = vmatprep.subr.mxu0 0.0
    %2194 = vmatpush1.msra.mxu0 0.0
    %2195 = vmatprep.subr.mxu0 0.0
    %2196 = vmatpush1.msra.mxu0 0.0
    %2197 = vmatprep.subr.mxu0 0.0
    %2198 = vmatpush1.msra.mxu0 0.0
    %2199 = vmatprep.subr.mxu0 0.0
    %2200 = vmatpush1.msra.mxu0 0.0
    %2201 = vmatprep.subr.mxu0 0.0
    %2202 = vmatpush1.msra.mxu0 0.0
    %2203 = vmatprep.subr.mxu0 0.0
    %2204 = vmatpush1.msra.mxu0 0.0
    %2205 = vmatprep.subr.mxu0 0.0
    %2206 = vmatpush1.msra.mxu0 0.0
    %2207 = vmatprep.subr.mxu0 0.0
    %2208 = vmatpush1.msra.mxu0 0.0
    %2209 = vmatprep.subr.mxu0 0.0
    %2210 = vmatpush1.msra.mxu0 0.0
    %2211 = vmatprep.subr.mxu0 0.0
    %2212 = vmatpush1.msra.mxu0 0.0
    %2213 = vmatprep.subr.mxu0 0.0
    %2214 = vmatpush1.msra.mxu0 0.0
    %2215 = vmatprep.subr.mxu0 0.0
    %2216 = vmatpush1.msra.mxu0 0.0
    %2217 = vmatprep.subr.mxu0 0.0
    %2218 = vmatpush1.msra.mxu0 0.0
    %2219 = vmatprep.subr.mxu0 0.0
    %2220 = vmatpush1.msra.mxu0 0.0
    %2221 = vmatprep.subr.mxu0 0.0
    %2222 = vmatpush1.msra.mxu0 0.0
    %2223 = vmatprep.subr.mxu0 0.0
    %2224 = vmatpush1.msra.mxu0 0.0
    %2225 = vmatprep.subr.mxu0 0.0
    %2226 = vmatpush1.msra.mxu0 0.0
    %2227 = vmatprep.subr.mxu0 0.0
    %2228 = vmatpush1.msra.mxu0 0.0
    %2229 = vmatprep.subr.mxu0 0.0
    %2230 = vmatpush1.msra.mxu0 0.0
    %2231 = vmatprep.mubr.f32.mxu0 0.0
    %2232 = vmatmul.mubr.f32.gmra.mrb[0].mxu0 %v2165
    %v2233 = vpop.f32.mrb[0].mxu0
    %v2234 = vadd.f32 0.0, %v2233
    %v2235 = vpop.f32.mrb[0].mxu0
    %2236 = vdwg.mxu0
    %2237 = vrot.lane.b32.xlu0 %v2063, 120
    %v2238 = vpop.permute.xlu0 %2237
    %2239 = vrot.lane.b32.xlu0 %v2063, 88
    %v2240 = vpop.permute.xlu0 %2239
    %v2241 = vsel %vm214, %v2238, 0
    %v2243 = vsel %vm214, %v2240, 0
    %2245 = vmatprep.subr.mxu0 0.0
    %2246 = vmatpush1.xpose.msra.mxu0 %v2243
    %2247 = vmatprep.subr.mxu0 0.0
    %2248 = vmatpush1.xpose.msra.mxu0 0.0
    %2249 = vmatprep.subr.mxu0 0.0
    %2250 = vmatpush1.xpose.msra.mxu0 0.0
    %2251 = vmatprep.subr.mxu0 0.0
    %2252 = vmatpush1.xpose.msra.mxu0 0.0
    %2253 = vmatprep.subr.mxu0 0.0
    %2254 = vmatpush1.xpose.msra.mxu0 0.0
    %2255 = vmatprep.subr.mxu0 0.0
    %2256 = vmatpush1.xpose.msra.mxu0 0.0
    %2257 = vmatprep.subr.mxu0 0.0
    %2258 = vmatpush1.xpose.msra.mxu0 0.0
    %2259 = vmatprep.subr.mxu0 0.0
    %2260 = vmatpush1.xpose.msra.mxu0 0.0
    %2261 = vmatprep.subr.mxu0 0.0
    %2262 = vmatpush1.xpose.msra.mxu0 0.0
    %2263 = vmatprep.subr.mxu0 0.0
    %2264 = vmatpush1.xpose.msra.mxu0 0.0
    %2265 = vmatprep.subr.mxu0 0.0
    %2266 = vmatpush1.xpose.msra.mxu0 0.0
    %2267 = vmatprep.subr.mxu0 0.0
    %2268 = vmatpush1.xpose.msra.mxu0 0.0
    %2269 = vmatprep.subr.mxu0 0.0
    %2270 = vmatpush1.xpose.msra.mxu0 0.0
    %2271 = vmatprep.subr.mxu0 0.0
    %2272 = vmatpush1.xpose.msra.mxu0 0.0
    %2273 = vmatprep.subr.mxu0 0.0
    %2274 = vmatpush1.xpose.msra.mxu0 0.0
    %2275 = vmatprep.subr.mxu0 0.0
    %2276 = vmatpush1.xpose.msra.mxu0 0.0
    %2277 = vmatprep.subr.mxu0 0.0
    %2278 = vmatpush1.xpose.msra.mxu0 0.0
    %2279 = vmatprep.subr.mxu0 0.0
    %2280 = vmatpush1.xpose.msra.mxu0 0.0
    %2281 = vmatprep.subr.mxu0 0.0
    %2282 = vmatpush1.xpose.msra.mxu0 0.0
    %2283 = vmatprep.subr.mxu0 0.0
    %2284 = vmatpush1.xpose.msra.mxu0 0.0
    %2285 = vmatprep.subr.mxu0 0.0
    %2286 = vmatpush1.xpose.msra.mxu0 0.0
    %2287 = vmatprep.subr.mxu0 0.0
    %2288 = vmatpush1.xpose.msra.mxu0 0.0
    %2289 = vmatprep.subr.mxu0 0.0
    %2290 = vmatpush1.xpose.msra.mxu0 0.0
    %2291 = vmatprep.subr.mxu0 0.0
    %2292 = vmatpush1.xpose.msra.mxu0 0.0
    %2293 = vmatprep.subr.mxu0 0.0
    %2294 = vmatpush1.xpose.msra.mxu0 0.0
    %2295 = vmatprep.subr.mxu0 0.0
    %2296 = vmatpush1.xpose.msra.mxu0 0.0
    %2297 = vmatprep.subr.mxu0 0.0
    %2298 = vmatpush1.xpose.msra.mxu0 0.0
    %2299 = vmatprep.subr.mxu0 0.0
    %2300 = vmatpush1.xpose.msra.mxu0 0.0
    %2301 = vmatprep.subr.mxu0 0.0
    %2302 = vmatpush1.xpose.msra.mxu0 0.0
    %2303 = vmatprep.subr.mxu0 0.0
    %2304 = vmatpush1.xpose.msra.mxu0 0.0
    %2305 = vmatprep.subr.mxu0 0.0
    %2306 = vmatpush1.xpose.msra.mxu0 0.0
    %2307 = vmatprep.subr.mxu0 0.0
    %2308 = vmatpush1.xpose.msra.mxu0 0.0
    %2309 = vmatprep.mubr.f32.mxu0 0.0
    %2310 = vmatmul.mubr.f32.gmra.mrb[0].mxu0 %v2241
    %v2311 = vpop.f32.mrb[0].mxu0
    %v2312 = vadd.f32 0.0, %v2311
    %v2313 = vpop.f32.mrb[0].mxu0
    %2314 = vdwg.mxu0
    %v2315 = vmul.f32 %v2312, 0.35355338
    %v2316 = vadd.f32 %v2315, %v293
    %v2317 = vsel %vm214, %v2316, -inf
    %2318 = vmax.xlane.f32.xlu0 %v2317
    %v2319 = vpop.xlane.xlu0 %2318
    %v2320 = vsub.f32 %v2316, %v2319
    %v2321 = vmul.f32 %v2320, 1.442695
    %v2322 = vpow.pop %v2321
    %v2323 = vsel %vm214, %v2322, 0.0
    %2324 = vadd.xlane.f32.xlu0 %v2323
    %v2325 = vpop.xlane.xlu0 %2324
    %v2326 = vrcp.pop %v2325
    %v2327 = vmul.f32 %v2322, %v2326
    %2328 = vrot.lane.b32.xlu0 %v2063, 56
    %v2329 = vpop.permute.xlu0 %2328
    %v2332 = vsel %vm214, %v2327, 0
    %2334 = vmatprep.subr.mxu0 0.0
    %2335 = vmatpush1.msra.mxu0 %v2329
    %2336 = vmatprep.subr.mxu0 0.0
    %2337 = vmatpush1.msra.mxu0 0.0
    %2338 = vmatprep.subr.mxu0 0.0
    %2339 = vmatpush1.msra.mxu0 0.0
    %2340 = vmatprep.subr.mxu0 0.0
    %2341 = vmatpush1.msra.mxu0 0.0
    %2342 = vmatprep.subr.mxu0 0.0
    %2343 = vmatpush1.msra.mxu0 0.0
    %2344 = vmatprep.subr.mxu0 0.0
    %2345 = vmatpush1.msra.mxu0 0.0
    %2346 = vmatprep.subr.mxu0 0.0
    %2347 = vmatpush1.msra.mxu0 0.0
    %2348 = vmatprep.subr.mxu0 0.0
    %2349 = vmatpush1.msra.mxu0 0.0
    %2350 = vmatprep.subr.mxu0 0.0
    %2351 = vmatpush1.msra.mxu0 0.0
    %2352 = vmatprep.subr.mxu0 0.0
    %2353 = vmatpush1.msra.mxu0 0.0
    %2354 = vmatprep.subr.mxu0 0.0
    %2355 = vmatpush1.msra.mxu0 0.0
    %2356 = vmatprep.subr.mxu0 0.0
    %2357 = vmatpush1.msra.mxu0 0.0
    %2358 = vmatprep.subr.mxu0 0.0
    %2359 = vmatpush1.msra.mxu0 0.0
    %2360 = vmatprep.subr.mxu0 0.0
    %2361 = vmatpush1.msra.mxu0 0.0
    %2362 = vmatprep.subr.mxu0 0.0
    %2363 = vmatpush1.msra.mxu0 0.0
    %2364 = vmatprep.subr.mxu0 0.0
    %2365 = vmatpush1.msra.mxu0 0.0
    %2366 = vmatprep.subr.mxu0 0.0
    %2367 = vmatpush1.msra.mxu0 0.0
    %2368 = vmatprep.subr.mxu0 0.0
    %2369 = vmatpush1.msra.mxu0 0.0
    %2370 = vmatprep.subr.mxu0 0.0
    %2371 = vmatpush1.msra.mxu0 0.0
    %2372 = vmatprep.subr.mxu0 0.0
    %2373 = vmatpush1.msra.mxu0 0.0
    %2374 = vmatprep.subr.mxu0 0.0
    %2375 = vmatpush1.msra.mxu0 0.0
    %2376 = vmatprep.subr.mxu0 0.0
    %2377 = vmatpush1.msra.mxu0 0.0
    %2378 = vmatprep.subr.mxu0 0.0
    %2379 = vmatpush1.msra.mxu0 0.0
    %2380 = vmatprep.subr.mxu0 0.0
    %2381 = vmatpush1.msra.mxu0 0.0
    %2382 = vmatprep.subr.mxu0 0.0
    %2383 = vmatpush1.msra.mxu0 0.0
    %2384 = vmatprep.subr.mxu0 0.0
    %2385 = vmatpush1.msra.mxu0 0.0
    %2386 = vmatprep.subr.mxu0 0.0
    %2387 = vmatpush1.msra.mxu0 0.0
    %2388 = vmatprep.subr.mxu0 0.0
    %2389 = vmatpush1.msra.mxu0 0.0
    %2390 = vmatprep.subr.mxu0 0.0
    %2391 = vmatpush1.msra.mxu0 0.0
    %2392 = vmatprep.subr.mxu0 0.0
    %2393 = vmatpush1.msra.mxu0 0.0
    %2394 = vmatprep.subr.mxu0 0.0
    %2395 = vmatpush1.msra.mxu0 0.0
    %2396 = vmatprep.subr.mxu0 0.0
    %2397 = vmatpush1.msra.mxu0 0.0
    %2398 = vmatprep.mubr.f32.mxu0 0.0
    %2399 = vmatmul.mubr.f32.gmra.mrb[0].mxu0 %v2332
    %v2400 = vpop.f32.mrb[0].mxu0
    %v2401 = vadd.f32 0.0, %v2400
    %v2402 = vpop.f32.mrb[0].mxu0
    %2403 = vdwg.mxu0
    %2404 = vrot.lane.b32.xlu0 %v2063, 112
    %v2405 = vpop.permute.xlu0 %2404
    %2406 = vrot.lane.b32.xlu0 %v2063, 80
    %v2407 = vpop.permute.xlu0 %2406
    %v2408 = vsel %vm214, %v2405, 0
    %v2410 = vsel %vm214, %v2407, 0
    %2412 = vmatprep.subr.mxu0 0.0
    %2413 = vmatpush1.xpose.msra.mxu0 %v2410
    %2414 = vmatprep.subr.mxu0 0.0
    %2415 = vmatpush1.xpose.msra.mxu0 0.0
    %2416 = vmatprep.subr.mxu0 0.0
    %2417 = vmatpush1.xpose.msra.mxu0 0.0
    %2418 = vmatprep.subr.mxu0 0.0
    %2419 = vmatpush1.xpose.msra.mxu0 0.0
    %2420 = vmatprep.subr.mxu0 0.0
    %2421 = vmatpush1.xpose.msra.mxu0 0.0
    %2422 = vmatprep.subr.mxu0 0.0
    %2423 = vmatpush1.xpose.msra.mxu0 0.0
    %2424 = vmatprep.subr.mxu0 0.0
    %2425 = vmatpush1.xpose.msra.mxu0 0.0
    %2426 = vmatprep.subr.mxu0 0.0
    %2427 = vmatpush1.xpose.msra.mxu0 0.0
    %2428 = vmatprep.subr.mxu0 0.0
    %2429 = vmatpush1.xpose.msra.mxu0 0.0
    %2430 = vmatprep.subr.mxu0 0.0
    %2431 = vmatpush1.xpose.msra.mxu0 0.0
    %2432 = vmatprep.subr.mxu0 0.0
    %2433 = vmatpush1.xpose.msra.mxu0 0.0
    %2434 = vmatprep.subr.mxu0 0.0
    %2435 = vmatpush1.xpose.msra.mxu0 0.0
    %2436 = vmatprep.subr.mxu0 0.0
    %2437 = vmatpush1.xpose.msra.mxu0 0.0
    %2438 = vmatprep.subr.mxu0 0.0
    %2439 = vmatpush1.xpose.msra.mxu0 0.0
    %2440 = vmatprep.subr.mxu0 0.0
    %2441 = vmatpush1.xpose.msra.mxu0 0.0
    %2442 = vmatprep.subr.mxu0 0.0
    %2443 = vmatpush1.xpose.msra.mxu0 0.0
    %2444 = vmatprep.subr.mxu0 0.0
    %2445 = vmatpush1.xpose.msra.mxu0 0.0
    %2446 = vmatprep.subr.mxu0 0.0
    %2447 = vmatpush1.xpose.msra.mxu0 0.0
    %2448 = vmatprep.subr.mxu0 0.0
    %2449 = vmatpush1.xpose.msra.mxu0 0.0
    %2450 = vmatprep.subr.mxu0 0.0
    %2451 = vmatpush1.xpose.msra.mxu0 0.0
    %2452 = vmatprep.subr.mxu0 0.0
    %2453 = vmatpush1.xpose.msra.mxu0 0.0
    %2454 = vmatprep.subr.mxu0 0.0
    %2455 = vmatpush1.xpose.msra.mxu0 0.0
    %2456 = vmatprep.subr.mxu0 0.0
    %2457 = vmatpush1.xpose.msra.mxu0 0.0
    %2458 = vmatprep.subr.mxu0 0.0
    %2459 = vmatpush1.xpose.msra.mxu0 0.0
    %2460 = vmatprep.subr.mxu0 0.0
    %2461 = vmatpush1.xpose.msra.mxu0 0.0
    %2462 = vmatprep.subr.mxu0 0.0
    %2463 = vmatpush1.xpose.msra.mxu0 0.0
    %2464 = vmatprep.subr.mxu0 0.0
    %2465 = vmatpush1.xpose.msra.mxu0 0.0
    %2466 = vmatprep.subr.mxu0 0.0
    %2467 = vmatpush1.xpose.msra.mxu0 0.0
    %2468 = vmatprep.subr.mxu0 0.0
    %2469 = vmatpush1.xpose.msra.mxu0 0.0
    %2470 = vmatprep.subr.mxu0 0.0
    %2471 = vmatpush1.xpose.msra.mxu0 0.0
    %2472 = vmatprep.subr.mxu0 0.0
    %2473 = vmatpush1.xpose.msra.mxu0 0.0
    %2474 = vmatprep.subr.mxu0 0.0
    %2475 = vmatpush1.xpose.msra.mxu0 0.0
    %2476 = vmatprep.mubr.f32.mxu0 0.0
    %2477 = vmatmul.mubr.f32.gmra.mrb[0].mxu0 %v2408
    %v2478 = vpop.f32.mrb[0].mxu0
    %v2479 = vadd.f32 0.0, %v2478
    %v2480 = vpop.f32.mrb[0].mxu0
    %2481 = vdwg.mxu0
    %v2482 = vmul.f32 %v2479, 0.35355338
    %v2483 = vadd.f32 %v2482, %v293
    %v2484 = vsel %vm214, %v2483, -inf
    %2485 = vmax.xlane.f32.xlu0 %v2484
    %v2486 = vpop.xlane.xlu0 %2485
    %v2487 = vsub.f32 %v2483, %v2486
    %v2488 = vmul.f32 %v2487, 1.442695
    %v2489 = vpow.pop %v2488
    %v2490 = vsel %vm214, %v2489, 0.0
    %2491 = vadd.xlane.f32.xlu0 %v2490
    %v2492 = vpop.xlane.xlu0 %2491
    %v2493 = vrcp.pop %v2492
    %v2494 = vmul.f32 %v2489, %v2493
    %2495 = vrot.lane.b32.xlu0 %v2063, 48
    %v2496 = vpop.permute.xlu0 %2495
    %v2499 = vsel %vm214, %v2494, 0
    %2501 = vmatprep.subr.mxu0 0.0
    %2502 = vmatpush1.msra.mxu0 %v2496
    %2503 = vmatprep.subr.mxu0 0.0
    %2504 = vmatpush1.msra.mxu0 0.0
    %2505 = vmatprep.subr.mxu0 0.0
    %2506 = vmatpush1.msra.mxu0 0.0
    %2507 = vmatprep.subr.mxu0 0.0
    %2508 = vmatpush1.msra.mxu0 0.0
    %2509 = vmatprep.subr.mxu0 0.0
    %2510 = vmatpush1.msra.mxu0 0.0
    %2511 = vmatprep.subr.mxu0 0.0
    %2512 = vmatpush1.msra.mxu0 0.0
    %2513 = vmatprep.subr.mxu0 0.0
    %2514 = vmatpush1.msra.mxu0 0.0
    %2515 = vmatprep.subr.mxu0 0.0
    %2516 = vmatpush1.msra.mxu0 0.0
    %2517 = vmatprep.subr.mxu0 0.0
    %2518 = vmatpush1.msra.mxu0 0.0
    %2519 = vmatprep.subr.mxu0 0.0
    %2520 = vmatpush1.msra.mxu0 0.0
    %2521 = vmatprep.subr.mxu0 0.0
    %2522 = vmatpush1.msra.mxu0 0.0
    %2523 = vmatprep.subr.mxu0 0.0
    %2524 = vmatpush1.msra.mxu0 0.0
    %2525 = vmatprep.subr.mxu0 0.0
    %2526 = vmatpush1.msra.mxu0 0.0
    %2527 = vmatprep.subr.mxu0 0.0
    %2528 = vmatpush1.msra.mxu0 0.0
    %2529 = vmatprep.subr.mxu0 0.0
    %2530 = vmatpush1.msra.mxu0 0.0
    %2531 = vmatprep.subr.mxu0 0.0
    %2532 = vmatpush1.msra.mxu0 0.0
    %2533 = vmatprep.subr.mxu0 0.0
    %2534 = vmatpush1.msra.mxu0 0.0
    %2535 = vmatprep.subr.mxu0 0.0
    %2536 = vmatpush1.msra.mxu0 0.0
    %2537 = vmatprep.subr.mxu0 0.0
    %2538 = vmatpush1.msra.mxu0 0.0
    %2539 = vmatprep.subr.mxu0 0.0
    %2540 = vmatpush1.msra.mxu0 0.0
    %2541 = vmatprep.subr.mxu0 0.0
    %2542 = vmatpush1.msra.mxu0 0.0
    %2543 = vmatprep.subr.mxu0 0.0
    %2544 = vmatpush1.msra.mxu0 0.0
    %2545 = vmatprep.subr.mxu0 0.0
    %2546 = vmatpush1.msra.mxu0 0.0
    %2547 = vmatprep.subr.mxu0 0.0
    %2548 = vmatpush1.msra.mxu0 0.0
    %2549 = vmatprep.subr.mxu0 0.0
    %2550 = vmatpush1.msra.mxu0 0.0
    %2551 = vmatprep.subr.mxu0 0.0
    %2552 = vmatpush1.msra.mxu0 0.0
    %2553 = vmatprep.subr.mxu0 0.0
    %2554 = vmatpush1.msra.mxu0 0.0
    %2555 = vmatprep.subr.mxu0 0.0
    %2556 = vmatpush1.msra.mxu0 0.0
    %2557 = vmatprep.subr.mxu0 0.0
    %2558 = vmatpush1.msra.mxu0 0.0
    %2559 = vmatprep.subr.mxu0 0.0
    %2560 = vmatpush1.msra.mxu0 0.0
    %2561 = vmatprep.subr.mxu0 0.0
    %2562 = vmatpush1.msra.mxu0 0.0
    %2563 = vmatprep.subr.mxu0 0.0
    %2564 = vmatpush1.msra.mxu0 0.0
    %2565 = vmatprep.mubr.f32.mxu0 0.0
    %2566 = vmatmul.mubr.f32.gmra.mrb[0].mxu0 %v2499
    %v2567 = vpop.f32.mrb[0].mxu0
    %v2568 = vadd.f32 0.0, %v2567
    %v2569 = vpop.f32.mrb[0].mxu0
    %2570 = vdwg.mxu0
    %2571 = vrot.lane.b32.xlu0 %v2063, 104
    %v2572 = vpop.permute.xlu0 %2571
    %2573 = vrot.lane.b32.xlu0 %v2063, 72
    %v2574 = vpop.permute.xlu0 %2573
    %v2575 = vsel %vm214, %v2572, 0
    %v2577 = vsel %vm214, %v2574, 0
    %2579 = vmatprep.subr.mxu0 0.0
    %2580 = vmatpush1.xpose.msra.mxu0 %v2577
    %2581 = vmatprep.subr.mxu0 0.0
    %2582 = vmatpush1.xpose.msra.mxu0 0.0
    %2583 = vmatprep.subr.mxu0 0.0
    %2584 = vmatpush1.xpose.msra.mxu0 0.0
    %2585 = vmatprep.subr.mxu0 0.0
    %2586 = vmatpush1.xpose.msra.mxu0 0.0
    %2587 = vmatprep.subr.mxu0 0.0
    %2588 = vmatpush1.xpose.msra.mxu0 0.0
    %2589 = vmatprep.subr.mxu0 0.0
    %2590 = vmatpush1.xpose.msra.mxu0 0.0
    %2591 = vmatprep.subr.mxu0 0.0
    %2592 = vmatpush1.xpose.msra.mxu0 0.0
    %2593 = vmatprep.subr.mxu0 0.0
    %2594 = vmatpush1.xpose.msra.mxu0 0.0
    %2595 = vmatprep.subr.mxu0 0.0
    %2596 = vmatpush1.xpose.msra.mxu0 0.0
    %2597 = vmatprep.subr.mxu0 0.0
    %2598 = vmatpush1.xpose.msra.mxu0 0.0
    %2599 = vmatprep.subr.mxu0 0.0
    %2600 = vmatpush1.xpose.msra.mxu0 0.0
    %2601 = vmatprep.subr.mxu0 0.0
    %2602 = vmatpush1.xpose.msra.mxu0 0.0
    %2603 = vmatprep.subr.mxu0 0.0
    %2604 = vmatpush1.xpose.msra.mxu0 0.0
    %2605 = vmatprep.subr.mxu0 0.0
    %2606 = vmatpush1.xpose.msra.mxu0 0.0
    %2607 = vmatprep.subr.mxu0 0.0
    %2608 = vmatpush1.xpose.msra.mxu0 0.0
    %2609 = vmatprep.subr.mxu0 0.0
    %2610 = vmatpush1.xpose.msra.mxu0 0.0
    %2611 = vmatprep.subr.mxu0 0.0
    %2612 = vmatpush1.xpose.msra.mxu0 0.0
    %2613 = vmatprep.subr.mxu0 0.0
    %2614 = vmatpush1.xpose.msra.mxu0 0.0
    %2615 = vmatprep.subr.mxu0 0.0
    %2616 = vmatpush1.xpose.msra.mxu0 0.0
    %2617 = vmatprep.subr.mxu0 0.0
    %2618 = vmatpush1.xpose.msra.mxu0 0.0
    %2619 = vmatprep.subr.mxu0 0.0
    %2620 = vmatpush1.xpose.msra.mxu0 0.0
    %2621 = vmatprep.subr.mxu0 0.0
    %2622 = vmatpush1.xpose.msra.mxu0 0.0
    %2623 = vmatprep.subr.mxu0 0.0
    %2624 = vmatpush1.xpose.msra.mxu0 0.0
    %2625 = vmatprep.subr.mxu0 0.0
    %2626 = vmatpush1.xpose.msra.mxu0 0.0
    %2627 = vmatprep.subr.mxu0 0.0
    %2628 = vmatpush1.xpose.msra.mxu0 0.0
    %2629 = vmatprep.subr.mxu0 0.0
    %2630 = vmatpush1.xpose.msra.mxu0 0.0
    %2631 = vmatprep.subr.mxu0 0.0
    %2632 = vmatpush1.xpose.msra.mxu0 0.0
    %2633 = vmatprep.subr.mxu0 0.0
    %2634 = vmatpush1.xpose.msra.mxu0 0.0
    %2635 = vmatprep.subr.mxu0 0.0
    %2636 = vmatpush1.xpose.msra.mxu0 0.0
    %2637 = vmatprep.subr.mxu0 0.0
    %2638 = vmatpush1.xpose.msra.mxu0 0.0
    %2639 = vmatprep.subr.mxu0 0.0
    %2640 = vmatpush1.xpose.msra.mxu0 0.0
    %2641 = vmatprep.subr.mxu0 0.0
    %2642 = vmatpush1.xpose.msra.mxu0 0.0
    %2643 = vmatprep.mubr.f32.mxu0 0.0
    %2644 = vmatmul.mubr.f32.gmra.mrb[0].mxu0 %v2575
    %v2645 = vpop.f32.mrb[0].mxu0
    %v2646 = vadd.f32 0.0, %v2645
    %v2647 = vpop.f32.mrb[0].mxu0
    %2648 = vdwg.mxu0
    %v2649 = vmul.f32 %v2646, 0.35355338
    %v2650 = vadd.f32 %v2649, %v293
    %v2651 = vsel %vm214, %v2650, -inf
    %2652 = vmax.xlane.f32.xlu0 %v2651
    %v2653 = vpop.xlane.xlu0 %2652
    %v2654 = vsub.f32 %v2650, %v2653
    %v2655 = vmul.f32 %v2654, 1.442695
    %v2656 = vpow.pop %v2655
    %v2657 = vsel %vm214, %v2656, 0.0
    %2658 = vadd.xlane.f32.xlu0 %v2657
    %v2659 = vpop.xlane.xlu0 %2658
    %v2660 = vrcp.pop %v2659
    %v2661 = vmul.f32 %v2656, %v2660
    %2662 = vrot.lane.b32.xlu0 %v2063, 40
    %v2663 = vpop.permute.xlu0 %2662
    %v2666 = vsel %vm214, %v2661, 0
    %2668 = vmatprep.subr.mxu0 0.0
    %2669 = vmatpush1.msra.mxu0 %v2663
    %2670 = vmatprep.subr.mxu0 0.0
    %2671 = vmatpush1.msra.mxu0 0.0
    %2672 = vmatprep.subr.mxu0 0.0
    %2673 = vmatpush1.msra.mxu0 0.0
    %2674 = vmatprep.subr.mxu0 0.0
    %2675 = vmatpush1.msra.mxu0 0.0
    %2676 = vmatprep.subr.mxu0 0.0
    %2677 = vmatpush1.msra.mxu0 0.0
    %2678 = vmatprep.subr.mxu0 0.0
    %2679 = vmatpush1.msra.mxu0 0.0
    %2680 = vmatprep.subr.mxu0 0.0
    %2681 = vmatpush1.msra.mxu0 0.0
    %2682 = vmatprep.subr.mxu0 0.0
    %2683 = vmatpush1.msra.mxu0 0.0
    %2684 = vmatprep.subr.mxu0 0.0
    %2685 = vmatpush1.msra.mxu0 0.0
    %2686 = vmatprep.subr.mxu0 0.0
    %2687 = vmatpush1.msra.mxu0 0.0
    %2688 = vmatprep.subr.mxu0 0.0
    %2689 = vmatpush1.msra.mxu0 0.0
    %2690 = vmatprep.subr.mxu0 0.0
    %2691 = vmatpush1.msra.mxu0 0.0
    %2692 = vmatprep.subr.mxu0 0.0
    %2693 = vmatpush1.msra.mxu0 0.0
    %2694 = vmatprep.subr.mxu0 0.0
    %2695 = vmatpush1.msra.mxu0 0.0
    %2696 = vmatprep.subr.mxu0 0.0
    %2697 = vmatpush1.msra.mxu0 0.0
    %2698 = vmatprep.subr.mxu0 0.0
    %2699 = vmatpush1.msra.mxu0 0.0
    %2700 = vmatprep.subr.mxu0 0.0
    %2701 = vmatpush1.msra.mxu0 0.0
    %2702 = vmatprep.subr.mxu0 0.0
    %2703 = vmatpush1.msra.mxu0 0.0
    %2704 = vmatprep.subr.mxu0 0.0
    %2705 = vmatpush1.msra.mxu0 0.0
    %2706 = vmatprep.subr.mxu0 0.0
    %2707 = vmatpush1.msra.mxu0 0.0
    %2708 = vmatprep.subr.mxu0 0.0
    %2709 = vmatpush1.msra.mxu0 0.0
    %2710 = vmatprep.subr.mxu0 0.0
    %2711 = vmatpush1.msra.mxu0 0.0
    %2712 = vmatprep.subr.mxu0 0.0
    %2713 = vmatpush1.msra.mxu0 0.0
    %2714 = vmatprep.subr.mxu0 0.0
    %2715 = vmatpush1.msra.mxu0 0.0
    %2716 = vmatprep.subr.mxu0 0.0
    %2717 = vmatpush1.msra.mxu0 0.0
    %2718 = vmatprep.subr.mxu0 0.0
    %2719 = vmatpush1.msra.mxu0 0.0
    %2720 = vmatprep.subr.mxu0 0.0
    %2721 = vmatpush1.msra.mxu0 0.0
    %2722 = vmatprep.subr.mxu0 0.0
    %2723 = vmatpush1.msra.mxu0 0.0
    %2724 = vmatprep.subr.mxu0 0.0
    %2725 = vmatpush1.msra.mxu0 0.0
    %2726 = vmatprep.subr.mxu0 0.0
    %2727 = vmatpush1.msra.mxu0 0.0
    %2728 = vmatprep.subr.mxu0 0.0
    %2729 = vmatpush1.msra.mxu0 0.0
    %2730 = vmatprep.subr.mxu0 0.0
    %2731 = vmatpush1.msra.mxu0 0.0
    %2732 = vmatprep.mubr.f32.mxu0 0.0
    %2733 = vmatmul.mubr.f32.gmra.mrb[0].mxu0 %v2666
    %v2734 = vpop.f32.mrb[0].mxu0
    %v2735 = vadd.f32 0.0, %v2734
    %v2736 = vpop.f32.mrb[0].mxu0
    %2737 = vdwg.mxu0
    %2739 = vrot.lane.b32.xlu0 %v2401, 8
    %v2740 = vpop.permute.xlu0 %2739
    %2743 = vrot.lane.b32.xlu0 %v2568, 16
    %v2744 = vpop.permute.xlu0 %2743
    %2747 = vrot.lane.b32.xlu0 %v2735, 24
    %v2748 = vpop.permute.xlu0 %2747
    %v2750 = vsel %vm214, %v2234, %v2740
    %v2751 = vsel %vm896, %v2750, %v2744
    %v2752 = vsel %vm898, %v2751, %v2748
    %2754 = vrot.lane.b32.xlu0 %v2068, 96
    %v2755 = vpop.permute.xlu0 %2754
    %v2756 = vsel %vm214, %v2068, 0
    %v2758 = vsel %vm214, %v2755, 0
    %2760 = vmatprep.subr.mxu0 0.0
    %2761 = vmatpush1.xpose.msra.mxu0 %v2758
    %2762 = vmatprep.subr.mxu0 0.0
    %2763 = vmatpush1.xpose.msra.mxu0 0.0
    %2764 = vmatprep.subr.mxu0 0.0
    %2765 = vmatpush1.xpose.msra.mxu0 0.0
    %2766 = vmatprep.subr.mxu0 0.0
    %2767 = vmatpush1.xpose.msra.mxu0 0.0
    %2768 = vmatprep.subr.mxu0 0.0
    %2769 = vmatpush1.xpose.msra.mxu0 0.0
    %2770 = vmatprep.subr.mxu0 0.0
    %2771 = vmatpush1.xpose.msra.mxu0 0.0
    %2772 = vmatprep.subr.mxu0 0.0
    %2773 = vmatpush1.xpose.msra.mxu0 0.0
    %2774 = vmatprep.subr.mxu0 0.0
    %2775 = vmatpush1.xpose.msra.mxu0 0.0
    %2776 = vmatprep.subr.mxu0 0.0
    %2777 = vmatpush1.xpose.msra.mxu0 0.0
    %2778 = vmatprep.subr.mxu0 0.0
    %2779 = vmatpush1.xpose.msra.mxu0 0.0
    %2780 = vmatprep.subr.mxu0 0.0
    %2781 = vmatpush1.xpose.msra.mxu0 0.0
    %2782 = vmatprep.subr.mxu0 0.0
    %2783 = vmatpush1.xpose.msra.mxu0 0.0
    %2784 = vmatprep.subr.mxu0 0.0
    %2785 = vmatpush1.xpose.msra.mxu0 0.0
    %2786 = vmatprep.subr.mxu0 0.0
    %2787 = vmatpush1.xpose.msra.mxu0 0.0
    %2788 = vmatprep.subr.mxu0 0.0
    %2789 = vmatpush1.xpose.msra.mxu0 0.0
    %2790 = vmatprep.subr.mxu0 0.0
    %2791 = vmatpush1.xpose.msra.mxu0 0.0
    %2792 = vmatprep.subr.mxu0 0.0
    %2793 = vmatpush1.xpose.msra.mxu0 0.0
    %2794 = vmatprep.subr.mxu0 0.0
    %2795 = vmatpush1.xpose.msra.mxu0 0.0
    %2796 = vmatprep.subr.mxu0 0.0
    %2797 = vmatpush1.xpose.msra.mxu0 0.0
    %2798 = vmatprep.subr.mxu0 0.0
    %2799 = vmatpush1.xpose.msra.mxu0 0.0
    %2800 = vmatprep.subr.mxu0 0.0
    %2801 = vmatpush1.xpose.msra.mxu0 0.0
    %2802 = vmatprep.subr.mxu0 0.0
    %2803 = vmatpush1.xpose.msra.mxu0 0.0
    %2804 = vmatprep.subr.mxu0 0.0
    %2805 = vmatpush1.xpose.msra.mxu0 0.0
    %2806 = vmatprep.subr.mxu0 0.0
    %2807 = vmatpush1.xpose.msra.mxu0 0.0
    %2808 = vmatprep.subr.mxu0 0.0
    %2809 = vmatpush1.xpose.msra.mxu0 0.0
    %2810 = vmatprep.subr.mxu0 0.0
    %2811 = vmatpush1.xpose.msra.mxu0 0.0
    %2812 = vmatprep.subr.mxu0 0.0
    %2813 = vmatpush1.xpose.msra.mxu0 0.0
    %2814 = vmatprep.subr.mxu0 0.0
    %2815 = vmatpush1.xpose.msra.mxu0 0.0
    %2816 = vmatprep.subr.mxu0 0.0
    %2817 = vmatpush1.xpose.msra.mxu0 0.0
    %2818 = vmatprep.subr.mxu0 0.0
    %2819 = vmatpush1.xpose.msra.mxu0 0.0
    %2820 = vmatprep.subr.mxu0 0.0
    %2821 = vmatpush1.xpose.msra.mxu0 0.0
    %2822 = vmatprep.subr.mxu0 0.0
    %2823 = vmatpush1.xpose.msra.mxu0 0.0
    %2824 = vmatprep.mubr.f32.mxu0 0.0
    %2825 = vmatmul.mubr.f32.gmra.mrb[0].mxu0 %v2756
    %v2826 = vpop.f32.mrb[0].mxu0
    %v2827 = vadd.f32 0.0, %v2826
    %v2828 = vpop.f32.mrb[0].mxu0
    %2829 = vdwg.mxu0
    %v2830 = vmul.f32 %v2827, 0.35355338
    %v2831 = vadd.f32 %v2830, %v981
    %v2832 = vsel %vm214, %v2831, -inf
    %2833 = vmax.xlane.f32.xlu0 %v2832
    %v2834 = vpop.xlane.xlu0 %2833
    %v2835 = vsub.f32 %v2831, %v2834
    %v2836 = vmul.f32 %v2835, 1.442695
    %v2837 = vpow.pop %v2836
    %v2838 = vsel %vm214, %v2837, 0.0
    %2839 = vadd.xlane.f32.xlu0 %v2838
    %v2840 = vpop.xlane.xlu0 %2839
    %v2841 = vrcp.pop %v2840
    %v2842 = vmul.f32 %v2837, %v2841
    %2843 = vrot.lane.b32.xlu0 %v2068, 64
    %v2844 = vpop.permute.xlu0 %2843
    %v2847 = vsel %vm214, %v2842, 0
    %2849 = vmatprep.subr.mxu0 0.0
    %2850 = vmatpush1.msra.mxu0 %v2844
    %2851 = vmatprep.subr.mxu0 0.0
    %2852 = vmatpush1.msra.mxu0 0.0
    %2853 = vmatprep.subr.mxu0 0.0
    %2854 = vmatpush1.msra.mxu0 0.0
    %2855 = vmatprep.subr.mxu0 0.0
    %2856 = vmatpush1.msra.mxu0 0.0
    %2857 = vmatprep.subr.mxu0 0.0
    %2858 = vmatpush1.msra.mxu0 0.0
    %2859 = vmatprep.subr.mxu0 0.0
    %2860 = vmatpush1.msra.mxu0 0.0
    %2861 = vmatprep.subr.mxu0 0.0
    %2862 = vmatpush1.msra.mxu0 0.0
    %2863 = vmatprep.subr.mxu0 0.0
    %2864 = vmatpush1.msra.mxu0 0.0
    %2865 = vmatprep.subr.mxu0 0.0
    %2866 = vmatpush1.msra.mxu0 0.0
    %2867 = vmatprep.subr.mxu0 0.0
    %2868 = vmatpush1.msra.mxu0 0.0
    %2869 = vmatprep.subr.mxu0 0.0
    %2870 = vmatpush1.msra.mxu0 0.0
    %2871 = vmatprep.subr.mxu0 0.0
    %2872 = vmatpush1.msra.mxu0 0.0
    %2873 = vmatprep.subr.mxu0 0.0
    %2874 = vmatpush1.msra.mxu0 0.0
    %2875 = vmatprep.subr.mxu0 0.0
    %2876 = vmatpush1.msra.mxu0 0.0
    %2877 = vmatprep.subr.mxu0 0.0
    %2878 = vmatpush1.msra.mxu0 0.0
    %2879 = vmatprep.subr.mxu0 0.0
    %2880 = vmatpush1.msra.mxu0 0.0
    %2881 = vmatprep.subr.mxu0 0.0
    %2882 = vmatpush1.msra.mxu0 0.0
    %2883 = vmatprep.subr.mxu0 0.0
    %2884 = vmatpush1.msra.mxu0 0.0
    %2885 = vmatprep.subr.mxu0 0.0
    %2886 = vmatpush1.msra.mxu0 0.0
    %2887 = vmatprep.subr.mxu0 0.0
    %2888 = vmatpush1.msra.mxu0 0.0
    %2889 = vmatprep.subr.mxu0 0.0
    %2890 = vmatpush1.msra.mxu0 0.0
    %2891 = vmatprep.subr.mxu0 0.0
    %2892 = vmatpush1.msra.mxu0 0.0
    %2893 = vmatprep.subr.mxu0 0.0
    %2894 = vmatpush1.msra.mxu0 0.0
    %2895 = vmatprep.subr.mxu0 0.0
    %2896 = vmatpush1.msra.mxu0 0.0
    %2897 = vmatprep.subr.mxu0 0.0
    %2898 = vmatpush1.msra.mxu0 0.0
    %2899 = vmatprep.subr.mxu0 0.0
    %2900 = vmatpush1.msra.mxu0 0.0
    %2901 = vmatprep.subr.mxu0 0.0
    %2902 = vmatpush1.msra.mxu0 0.0
    %2903 = vmatprep.subr.mxu0 0.0
    %2904 = vmatpush1.msra.mxu0 0.0
    %2905 = vmatprep.subr.mxu0 0.0
    %2906 = vmatpush1.msra.mxu0 0.0
    %2907 = vmatprep.subr.mxu0 0.0
    %2908 = vmatpush1.msra.mxu0 0.0
    %2909 = vmatprep.subr.mxu0 0.0
    %2910 = vmatpush1.msra.mxu0 0.0
    %2911 = vmatprep.subr.mxu0 0.0
    %2912 = vmatpush1.msra.mxu0 0.0
    %2913 = vmatprep.mubr.f32.mxu0 0.0
    %2914 = vmatmul.mubr.f32.gmra.mrb[0].mxu0 %v2847
    %v2915 = vpop.f32.mrb[0].mxu0
    %v2916 = vadd.f32 0.0, %v2915
    %v2917 = vpop.f32.mrb[0].mxu0
    %2918 = vdwg.mxu0
    %2919 = vrot.lane.b32.xlu0 %v2068, 120
    %v2920 = vpop.permute.xlu0 %2919
    %2921 = vrot.lane.b32.xlu0 %v2068, 88
    %v2922 = vpop.permute.xlu0 %2921
    %v2923 = vsel %vm214, %v2920, 0
    %v2925 = vsel %vm214, %v2922, 0
    %2927 = vmatprep.subr.mxu0 0.0
    %2928 = vmatpush1.xpose.msra.mxu0 %v2925
    %2929 = vmatprep.subr.mxu0 0.0
    %2930 = vmatpush1.xpose.msra.mxu0 0.0
    %2931 = vmatprep.subr.mxu0 0.0
    %2932 = vmatpush1.xpose.msra.mxu0 0.0
    %2933 = vmatprep.subr.mxu0 0.0
    %2934 = vmatpush1.xpose.msra.mxu0 0.0
    %2935 = vmatprep.subr.mxu0 0.0
    %2936 = vmatpush1.xpose.msra.mxu0 0.0
    %2937 = vmatprep.subr.mxu0 0.0
    %2938 = vmatpush1.xpose.msra.mxu0 0.0
    %2939 = vmatprep.subr.mxu0 0.0
    %2940 = vmatpush1.xpose.msra.mxu0 0.0
    %2941 = vmatprep.subr.mxu0 0.0
    %2942 = vmatpush1.xpose.msra.mxu0 0.0
    %2943 = vmatprep.subr.mxu0 0.0
    %2944 = vmatpush1.xpose.msra.mxu0 0.0
    %2945 = vmatprep.subr.mxu0 0.0
    %2946 = vmatpush1.xpose.msra.mxu0 0.0
    %2947 = vmatprep.subr.mxu0 0.0
    %2948 = vmatpush1.xpose.msra.mxu0 0.0
    %2949 = vmatprep.subr.mxu0 0.0
    %2950 = vmatpush1.xpose.msra.mxu0 0.0
    %2951 = vmatprep.subr.mxu0 0.0
    %2952 = vmatpush1.xpose.msra.mxu0 0.0
    %2953 = vmatprep.subr.mxu0 0.0
    %2954 = vmatpush1.xpose.msra.mxu0 0.0
    %2955 = vmatprep.subr.mxu0 0.0
    %2956 = vmatpush1.xpose.msra.mxu0 0.0
    %2957 = vmatprep.subr.mxu0 0.0
    %2958 = vmatpush1.xpose.msra.mxu0 0.0
    %2959 = vmatprep.subr.mxu0 0.0
    %2960 = vmatpush1.xpose.msra.mxu0 0.0
    %2961 = vmatprep.subr.mxu0 0.0
    %2962 = vmatpush1.xpose.msra.mxu0 0.0
    %2963 = vmatprep.subr.mxu0 0.0
    %2964 = vmatpush1.xpose.msra.mxu0 0.0
    %2965 = vmatprep.subr.mxu0 0.0
    %2966 = vmatpush1.xpose.msra.mxu0 0.0
    %2967 = vmatprep.subr.mxu0 0.0
    %2968 = vmatpush1.xpose.msra.mxu0 0.0
    %2969 = vmatprep.subr.mxu0 0.0
    %2970 = vmatpush1.xpose.msra.mxu0 0.0
    %2971 = vmatprep.subr.mxu0 0.0
    %2972 = vmatpush1.xpose.msra.mxu0 0.0
    %2973 = vmatprep.subr.mxu0 0.0
    %2974 = vmatpush1.xpose.msra.mxu0 0.0
    %2975 = vmatprep.subr.mxu0 0.0
    %2976 = vmatpush1.xpose.msra.mxu0 0.0
    %2977 = vmatprep.subr.mxu0 0.0
    %2978 = vmatpush1.xpose.msra.mxu0 0.0
    %2979 = vmatprep.subr.mxu0 0.0
    %2980 = vmatpush1.xpose.msra.mxu0 0.0
    %2981 = vmatprep.subr.mxu0 0.0
    %2982 = vmatpush1.xpose.msra.mxu0 0.0
    %2983 = vmatprep.subr.mxu0 0.0
    %2984 = vmatpush1.xpose.msra.mxu0 0.0
    %2985 = vmatprep.subr.mxu0 0.0
    %2986 = vmatpush1.xpose.msra.mxu0 0.0
    %2987 = vmatprep.subr.mxu0 0.0
    %2988 = vmatpush1.xpose.msra.mxu0 0.0
    %2989 = vmatprep.subr.mxu0 0.0
    %2990 = vmatpush1.xpose.msra.mxu0 0.0
    %2991 = vmatprep.mubr.f32.mxu0 0.0
    %2992 = vmatmul.mubr.f32.gmra.mrb[0].mxu0 %v2923
    %v2993 = vpop.f32.mrb[0].mxu0
    %v2994 = vadd.f32 0.0, %v2993
    %v2995 = vpop.f32.mrb[0].mxu0
    %2996 = vdwg.mxu0
    %v2997 = vmul.f32 %v2994, 0.35355338
    %v2998 = vadd.f32 %v2997, %v981
    %v2999 = vsel %vm214, %v2998, -inf
    %3000 = vmax.xlane.f32.xlu0 %v2999
    %v3001 = vpop.xlane.xlu0 %3000
    %v3002 = vsub.f32 %v2998, %v3001
    %v3003 = vmul.f32 %v3002, 1.442695
    %v3004 = vpow.pop %v3003
    %v3005 = vsel %vm214, %v3004, 0.0
    %3006 = vadd.xlane.f32.xlu0 %v3005
    %v3007 = vpop.xlane.xlu0 %3006
    %v3008 = vrcp.pop %v3007
    %v3009 = vmul.f32 %v3004, %v3008
    %3010 = vrot.lane.b32.xlu0 %v2068, 56
    %v3011 = vpop.permute.xlu0 %3010
    %v3014 = vsel %vm214, %v3009, 0
    %3016 = vmatprep.subr.mxu0 0.0
    %3017 = vmatpush1.msra.mxu0 %v3011
    %3018 = vmatprep.subr.mxu0 0.0
    %3019 = vmatpush1.msra.mxu0 0.0
    %3020 = vmatprep.subr.mxu0 0.0
    %3021 = vmatpush1.msra.mxu0 0.0
    %3022 = vmatprep.subr.mxu0 0.0
    %3023 = vmatpush1.msra.mxu0 0.0
    %3024 = vmatprep.subr.mxu0 0.0
    %3025 = vmatpush1.msra.mxu0 0.0
    %3026 = vmatprep.subr.mxu0 0.0
    %3027 = vmatpush1.msra.mxu0 0.0
    %3028 = vmatprep.subr.mxu0 0.0
    %3029 = vmatpush1.msra.mxu0 0.0
    %3030 = vmatprep.subr.mxu0 0.0
    %3031 = vmatpush1.msra.mxu0 0.0
    %3032 = vmatprep.subr.mxu0 0.0
    %3033 = vmatpush1.msra.mxu0 0.0
    %3034 = vmatprep.subr.mxu0 0.0
    %3035 = vmatpush1.msra.mxu0 0.0
    %3036 = vmatprep.subr.mxu0 0.0
    %3037 = vmatpush1.msra.mxu0 0.0
    %3038 = vmatprep.subr.mxu0 0.0
    %3039 = vmatpush1.msra.mxu0 0.0
    %3040 = vmatprep.subr.mxu0 0.0
    %3041 = vmatpush1.msra.mxu0 0.0
    %3042 = vmatprep.subr.mxu0 0.0
    %3043 = vmatpush1.msra.mxu0 0.0
    %3044 = vmatprep.subr.mxu0 0.0
    %3045 = vmatpush1.msra.mxu0 0.0
    %3046 = vmatprep.subr.mxu0 0.0
    %3047 = vmatpush1.msra.mxu0 0.0
    %3048 = vmatprep.subr.mxu0 0.0
    %3049 = vmatpush1.msra.mxu0 0.0
    %3050 = vmatprep.subr.mxu0 0.0
    %3051 = vmatpush1.msra.mxu0 0.0
    %3052 = vmatprep.subr.mxu0 0.0
    %3053 = vmatpush1.msra.mxu0 0.0
    %3054 = vmatprep.subr.mxu0 0.0
    %3055 = vmatpush1.msra.mxu0 0.0
    %3056 = vmatprep.subr.mxu0 0.0
    %3057 = vmatpush1.msra.mxu0 0.0
    %3058 = vmatprep.subr.mxu0 0.0
    %3059 = vmatpush1.msra.mxu0 0.0
    %3060 = vmatprep.subr.mxu0 0.0
    %3061 = vmatpush1.msra.mxu0 0.0
    %3062 = vmatprep.subr.mxu0 0.0
    %3063 = vmatpush1.msra.mxu0 0.0
    %3064 = vmatprep.subr.mxu0 0.0
    %3065 = vmatpush1.msra.mxu0 0.0
    %3066 = vmatprep.subr.mxu0 0.0
    %3067 = vmatpush1.msra.mxu0 0.0
    %3068 = vmatprep.subr.mxu0 0.0
    %3069 = vmatpush1.msra.mxu0 0.0
    %3070 = vmatprep.subr.mxu0 0.0
    %3071 = vmatpush1.msra.mxu0 0.0
    %3072 = vmatprep.subr.mxu0 0.0
    %3073 = vmatpush1.msra.mxu0 0.0
    %3074 = vmatprep.subr.mxu0 0.0
    %3075 = vmatpush1.msra.mxu0 0.0
    %3076 = vmatprep.subr.mxu0 0.0
    %3077 = vmatpush1.msra.mxu0 0.0
    %3078 = vmatprep.subr.mxu0 0.0
    %3079 = vmatpush1.msra.mxu0 0.0
    %3080 = vmatprep.mubr.f32.mxu0 0.0
    %3081 = vmatmul.mubr.f32.gmra.mrb[0].mxu0 %v3014
    %v3082 = vpop.f32.mrb[0].mxu0
    %v3083 = vadd.f32 0.0, %v3082
    %v3084 = vpop.f32.mrb[0].mxu0
    %3085 = vdwg.mxu0
    %3086 = vrot.lane.b32.xlu0 %v2068, 112
    %v3087 = vpop.permute.xlu0 %3086
    %3088 = vrot.lane.b32.xlu0 %v2068, 80
    %v3089 = vpop.permute.xlu0 %3088
    %v3090 = vsel %vm214, %v3087, 0
    %v3092 = vsel %vm214, %v3089, 0
    %3094 = vmatprep.subr.mxu0 0.0
    %3095 = vmatpush1.xpose.msra.mxu0 %v3092
    %3096 = vmatprep.subr.mxu0 0.0
    %3097 = vmatpush1.xpose.msra.mxu0 0.0
    %3098 = vmatprep.subr.mxu0 0.0
    %3099 = vmatpush1.xpose.msra.mxu0 0.0
    %3100 = vmatprep.subr.mxu0 0.0
    %3101 = vmatpush1.xpose.msra.mxu0 0.0
    %3102 = vmatprep.subr.mxu0 0.0
    %3103 = vmatpush1.xpose.msra.mxu0 0.0
    %3104 = vmatprep.subr.mxu0 0.0
    %3105 = vmatpush1.xpose.msra.mxu0 0.0
    %3106 = vmatprep.subr.mxu0 0.0
    %3107 = vmatpush1.xpose.msra.mxu0 0.0
    %3108 = vmatprep.subr.mxu0 0.0
    %3109 = vmatpush1.xpose.msra.mxu0 0.0
    %3110 = vmatprep.subr.mxu0 0.0
    %3111 = vmatpush1.xpose.msra.mxu0 0.0
    %3112 = vmatprep.subr.mxu0 0.0
    %3113 = vmatpush1.xpose.msra.mxu0 0.0
    %3114 = vmatprep.subr.mxu0 0.0
    %3115 = vmatpush1.xpose.msra.mxu0 0.0
    %3116 = vmatprep.subr.mxu0 0.0
    %3117 = vmatpush1.xpose.msra.mxu0 0.0
    %3118 = vmatprep.subr.mxu0 0.0
    %3119 = vmatpush1.xpose.msra.mxu0 0.0
    %3120 = vmatprep.subr.mxu0 0.0
    %3121 = vmatpush1.xpose.msra.mxu0 0.0
    %3122 = vmatprep.subr.mxu0 0.0
    %3123 = vmatpush1.xpose.msra.mxu0 0.0
    %3124 = vmatprep.subr.mxu0 0.0
    %3125 = vmatpush1.xpose.msra.mxu0 0.0
    %3126 = vmatprep.subr.mxu0 0.0
    %3127 = vmatpush1.xpose.msra.mxu0 0.0
    %3128 = vmatprep.subr.mxu0 0.0
    %3129 = vmatpush1.xpose.msra.mxu0 0.0
    %3130 = vmatprep.subr.mxu0 0.0
    %3131 = vmatpush1.xpose.msra.mxu0 0.0
    %3132 = vmatprep.subr.mxu0 0.0
    %3133 = vmatpush1.xpose.msra.mxu0 0.0
    %3134 = vmatprep.subr.mxu0 0.0
    %3135 = vmatpush1.xpose.msra.mxu0 0.0
    %3136 = vmatprep.subr.mxu0 0.0
    %3137 = vmatpush1.xpose.msra.mxu0 0.0
    %3138 = vmatprep.subr.mxu0 0.0
    %3139 = vmatpush1.xpose.msra.mxu0 0.0
    %3140 = vmatprep.subr.mxu0 0.0
    %3141 = vmatpush1.xpose.msra.mxu0 0.0
    %3142 = vmatprep.subr.mxu0 0.0
    %3143 = vmatpush1.xpose.msra.mxu0 0.0
    %3144 = vmatprep.subr.mxu0 0.0
    %3145 = vmatpush1.xpose.msra.mxu0 0.0
    %3146 = vmatprep.subr.mxu0 0.0
    %3147 = vmatpush1.xpose.msra.mxu0 0.0
    %3148 = vmatprep.subr.mxu0 0.0
    %3149 = vmatpush1.xpose.msra.mxu0 0.0
    %3150 = vmatprep.subr.mxu0 0.0
    %3151 = vmatpush1.xpose.msra.mxu0 0.0
    %3152 = vmatprep.subr.mxu0 0.0
    %3153 = vmatpush1.xpose.msra.mxu0 0.0
    %3154 = vmatprep.subr.mxu0 0.0
    %3155 = vmatpush1.xpose.msra.mxu0 0.0
    %3156 = vmatprep.subr.mxu0 0.0
    %3157 = vmatpush1.xpose.msra.mxu0 0.0
    %3158 = vmatprep.mubr.f32.mxu0 0.0
    %3159 = vmatmul.mubr.f32.gmra.mrb[0].mxu0 %v3090
    %v3160 = vpop.f32.mrb[0].mxu0
    %v3161 = vadd.f32 0.0, %v3160
    %v3162 = vpop.f32.mrb[0].mxu0
    %3163 = vdwg.mxu0
    %v3164 = vmul.f32 %v3161, 0.35355338
    %v3165 = vadd.f32 %v3164, %v981
    %v3166 = vsel %vm214, %v3165, -inf
    %3167 = vmax.xlane.f32.xlu0 %v3166
    %v3168 = vpop.xlane.xlu0 %3167
    %v3169 = vsub.f32 %v3165, %v3168
    %v3170 = vmul.f32 %v3169, 1.442695
    %v3171 = vpow.pop %v3170
    %v3172 = vsel %vm214, %v3171, 0.0
    %3173 = vadd.xlane.f32.xlu0 %v3172
    %v3174 = vpop.xlane.xlu0 %3173
    %v3175 = vrcp.pop %v3174
    %v3176 = vmul.f32 %v3171, %v3175
    %3177 = vrot.lane.b32.xlu0 %v2068, 48
    %v3178 = vpop.permute.xlu0 %3177
    %v3181 = vsel %vm214, %v3176, 0
    %3183 = vmatprep.subr.mxu0 0.0
    %3184 = vmatpush1.msra.mxu0 %v3178
    %3185 = vmatprep.subr.mxu0 0.0
    %3186 = vmatpush1.msra.mxu0 0.0
    %3187 = vmatprep.subr.mxu0 0.0
    %3188 = vmatpush1.msra.mxu0 0.0
    %3189 = vmatprep.subr.mxu0 0.0
    %3190 = vmatpush1.msra.mxu0 0.0
    %3191 = vmatprep.subr.mxu0 0.0
    %3192 = vmatpush1.msra.mxu0 0.0
    %3193 = vmatprep.subr.mxu0 0.0
    %3194 = vmatpush1.msra.mxu0 0.0
    %3195 = vmatprep.subr.mxu0 0.0
    %3196 = vmatpush1.msra.mxu0 0.0
    %3197 = vmatprep.subr.mxu0 0.0
    %3198 = vmatpush1.msra.mxu0 0.0
    %3199 = vmatprep.subr.mxu0 0.0
    %3200 = vmatpush1.msra.mxu0 0.0
    %3201 = vmatprep.subr.mxu0 0.0
    %3202 = vmatpush1.msra.mxu0 0.0
    %3203 = vmatprep.subr.mxu0 0.0
    %3204 = vmatpush1.msra.mxu0 0.0
    %3205 = vmatprep.subr.mxu0 0.0
    %3206 = vmatpush1.msra.mxu0 0.0
    %3207 = vmatprep.subr.mxu0 0.0
    %3208 = vmatpush1.msra.mxu0 0.0
    %3209 = vmatprep.subr.mxu0 0.0
    %3210 = vmatpush1.msra.mxu0 0.0
    %3211 = vmatprep.subr.mxu0 0.0
    %3212 = vmatpush1.msra.mxu0 0.0
    %3213 = vmatprep.subr.mxu0 0.0
    %3214 = vmatpush1.msra.mxu0 0.0
    %3215 = vmatprep.subr.mxu0 0.0
    %3216 = vmatpush1.msra.mxu0 0.0
    %3217 = vmatprep.subr.mxu0 0.0
    %3218 = vmatpush1.msra.mxu0 0.0
    %3219 = vmatprep.subr.mxu0 0.0
    %3220 = vmatpush1.msra.mxu0 0.0
    %3221 = vmatprep.subr.mxu0 0.0
    %3222 = vmatpush1.msra.mxu0 0.0
    %3223 = vmatprep.subr.mxu0 0.0
    %3224 = vmatpush1.msra.mxu0 0.0
    %3225 = vmatprep.subr.mxu0 0.0
    %3226 = vmatpush1.msra.mxu0 0.0
    %3227 = vmatprep.subr.mxu0 0.0
    %3228 = vmatpush1.msra.mxu0 0.0
    %3229 = vmatprep.subr.mxu0 0.0
    %3230 = vmatpush1.msra.mxu0 0.0
    %3231 = vmatprep.subr.mxu0 0.0
    %3232 = vmatpush1.msra.mxu0 0.0
    %3233 = vmatprep.subr.mxu0 0.0
    %3234 = vmatpush1.msra.mxu0 0.0
    %3235 = vmatprep.subr.mxu0 0.0
    %3236 = vmatpush1.msra.mxu0 0.0
    %3237 = vmatprep.subr.mxu0 0.0
    %3238 = vmatpush1.msra.mxu0 0.0
    %3239 = vmatprep.subr.mxu0 0.0
    %3240 = vmatpush1.msra.mxu0 0.0
    %3241 = vmatprep.subr.mxu0 0.0
    %3242 = vmatpush1.msra.mxu0 0.0
    %3243 = vmatprep.subr.mxu0 0.0
    %3244 = vmatpush1.msra.mxu0 0.0
    %3245 = vmatprep.subr.mxu0 0.0
    %3246 = vmatpush1.msra.mxu0 0.0
    %3247 = vmatprep.mubr.f32.mxu0 0.0
    %3248 = vmatmul.mubr.f32.gmra.mrb[0].mxu0 %v3181
    %v3249 = vpop.f32.mrb[0].mxu0
    %v3250 = vadd.f32 0.0, %v3249
    %v3251 = vpop.f32.mrb[0].mxu0
    %3252 = vdwg.mxu0
    %3253 = vrot.lane.b32.xlu0 %v2068, 104
    %v3254 = vpop.permute.xlu0 %3253
    %3255 = vrot.lane.b32.xlu0 %v2068, 72
    %v3256 = vpop.permute.xlu0 %3255
    %v3257 = vsel %vm214, %v3254, 0
    %v3259 = vsel %vm214, %v3256, 0
    %3261 = vmatprep.subr.mxu0 0.0
    %3262 = vmatpush1.xpose.msra.mxu0 %v3259
    %3263 = vmatprep.subr.mxu0 0.0
    %3264 = vmatpush1.xpose.msra.mxu0 0.0
    %3265 = vmatprep.subr.mxu0 0.0
    %3266 = vmatpush1.xpose.msra.mxu0 0.0
    %3267 = vmatprep.subr.mxu0 0.0
    %3268 = vmatpush1.xpose.msra.mxu0 0.0
    %3269 = vmatprep.subr.mxu0 0.0
    %3270 = vmatpush1.xpose.msra.mxu0 0.0
    %3271 = vmatprep.subr.mxu0 0.0
    %3272 = vmatpush1.xpose.msra.mxu0 0.0
    %3273 = vmatprep.subr.mxu0 0.0
    %3274 = vmatpush1.xpose.msra.mxu0 0.0
    %3275 = vmatprep.subr.mxu0 0.0
    %3276 = vmatpush1.xpose.msra.mxu0 0.0
    %3277 = vmatprep.subr.mxu0 0.0
    %3278 = vmatpush1.xpose.msra.mxu0 0.0
    %3279 = vmatprep.subr.mxu0 0.0
    %3280 = vmatpush1.xpose.msra.mxu0 0.0
    %3281 = vmatprep.subr.mxu0 0.0
    %3282 = vmatpush1.xpose.msra.mxu0 0.0
    %3283 = vmatprep.subr.mxu0 0.0
    %3284 = vmatpush1.xpose.msra.mxu0 0.0
    %3285 = vmatprep.subr.mxu0 0.0
    %3286 = vmatpush1.xpose.msra.mxu0 0.0
    %3287 = vmatprep.subr.mxu0 0.0
    %3288 = vmatpush1.xpose.msra.mxu0 0.0
    %3289 = vmatprep.subr.mxu0 0.0
    %3290 = vmatpush1.xpose.msra.mxu0 0.0
    %3291 = vmatprep.subr.mxu0 0.0
    %3292 = vmatpush1.xpose.msra.mxu0 0.0
    %3293 = vmatprep.subr.mxu0 0.0
    %3294 = vmatpush1.xpose.msra.mxu0 0.0
    %3295 = vmatprep.subr.mxu0 0.0
    %3296 = vmatpush1.xpose.msra.mxu0 0.0
    %3297 = vmatprep.subr.mxu0 0.0
    %3298 = vmatpush1.xpose.msra.mxu0 0.0
    %3299 = vmatprep.subr.mxu0 0.0
    %3300 = vmatpush1.xpose.msra.mxu0 0.0
    %3301 = vmatprep.subr.mxu0 0.0
    %3302 = vmatpush1.xpose.msra.mxu0 0.0
    %3303 = vmatprep.subr.mxu0 0.0
    %3304 = vmatpush1.xpose.msra.mxu0 0.0
    %3305 = vmatprep.subr.mxu0 0.0
    %3306 = vmatpush1.xpose.msra.mxu0 0.0
    %3307 = vmatprep.subr.mxu0 0.0
    %3308 = vmatpush1.xpose.msra.mxu0 0.0
    %3309 = vmatprep.subr.mxu0 0.0
    %3310 = vmatpush1.xpose.msra.mxu0 0.0
    %3311 = vmatprep.subr.mxu0 0.0
    %3312 = vmatpush1.xpose.msra.mxu0 0.0
    %3313 = vmatprep.subr.mxu0 0.0
    %3314 = vmatpush1.xpose.msra.mxu0 0.0
    %3315 = vmatprep.subr.mxu0 0.0
    %3316 = vmatpush1.xpose.msra.mxu0 0.0
    %3317 = vmatprep.subr.mxu0 0.0
    %3318 = vmatpush1.xpose.msra.mxu0 0.0
    %3319 = vmatprep.subr.mxu0 0.0
    %3320 = vmatpush1.xpose.msra.mxu0 0.0
    %3321 = vmatprep.subr.mxu0 0.0
    %3322 = vmatpush1.xpose.msra.mxu0 0.0
    %3323 = vmatprep.subr.mxu0 0.0
    %3324 = vmatpush1.xpose.msra.mxu0 0.0
    %3325 = vmatprep.mubr.f32.mxu0 0.0
    %3326 = vmatmul.mubr.f32.gmra.mrb[0].mxu0 %v3257
    %v3327 = vpop.f32.mrb[0].mxu0
    %v3328 = vadd.f32 0.0, %v3327
    %v3329 = vpop.f32.mrb[0].mxu0
    %3330 = vdwg.mxu0
    %v3331 = vmul.f32 %v3328, 0.35355338
    %v3332 = vadd.f32 %v3331, %v981
    %v3333 = vsel %vm214, %v3332, -inf
    %3334 = vmax.xlane.f32.xlu0 %v3333
    %v3335 = vpop.xlane.xlu0 %3334
    %v3336 = vsub.f32 %v3332, %v3335
    %v3337 = vmul.f32 %v3336, 1.442695
    %v3338 = vpow.pop %v3337
    %v3339 = vsel %vm214, %v3338, 0.0
    %3340 = vadd.xlane.f32.xlu0 %v3339
    %v3341 = vpop.xlane.xlu0 %3340
    %v3342 = vrcp.pop %v3341
    %v3343 = vmul.f32 %v3338, %v3342
    %3344 = vrot.lane.b32.xlu0 %v2068, 40
    %v3345 = vpop.permute.xlu0 %3344
    %v3348 = vsel %vm214, %v3343, 0
    %3350 = vmatprep.subr.mxu0 0.0
    %3351 = vmatpush1.msra.mxu0 %v3345
    %3352 = vmatprep.subr.mxu0 0.0
    %3353 = vmatpush1.msra.mxu0 0.0
    %3354 = vmatprep.subr.mxu0 0.0
    %3355 = vmatpush1.msra.mxu0 0.0
    %3356 = vmatprep.subr.mxu0 0.0
    %3357 = vmatpush1.msra.mxu0 0.0
    %3358 = vmatprep.subr.mxu0 0.0
    %3359 = vmatpush1.msra.mxu0 0.0
    %3360 = vmatprep.subr.mxu0 0.0
    %3361 = vmatpush1.msra.mxu0 0.0
    %3362 = vmatprep.subr.mxu0 0.0
    %3363 = vmatpush1.msra.mxu0 0.0
    %3364 = vmatprep.subr.mxu0 0.0
    %3365 = vmatpush1.msra.mxu0 0.0
    %3366 = vmatprep.subr.mxu0 0.0
    %3367 = vmatpush1.msra.mxu0 0.0
    %3368 = vmatprep.subr.mxu0 0.0
    %3369 = vmatpush1.msra.mxu0 0.0
    %3370 = vmatprep.subr.mxu0 0.0
    %3371 = vmatpush1.msra.mxu0 0.0
    %3372 = vmatprep.subr.mxu0 0.0
    %3373 = vmatpush1.msra.mxu0 0.0
    %3374 = vmatprep.subr.mxu0 0.0
    %3375 = vmatpush1.msra.mxu0 0.0
    %3376 = vmatprep.subr.mxu0 0.0
    %3377 = vmatpush1.msra.mxu0 0.0
    %3378 = vmatprep.subr.mxu0 0.0
    %3379 = vmatpush1.msra.mxu0 0.0
    %3380 = vmatprep.subr.mxu0 0.0
    %3381 = vmatpush1.msra.mxu0 0.0
    %3382 = vmatprep.subr.mxu0 0.0
    %3383 = vmatpush1.msra.mxu0 0.0
    %3384 = vmatprep.subr.mxu0 0.0
    %3385 = vmatpush1.msra.mxu0 0.0
    %3386 = vmatprep.subr.mxu0 0.0
    %3387 = vmatpush1.msra.mxu0 0.0
    %3388 = vmatprep.subr.mxu0 0.0
    %3389 = vmatpush1.msra.mxu0 0.0
    %3390 = vmatprep.subr.mxu0 0.0
    %3391 = vmatpush1.msra.mxu0 0.0
    %3392 = vmatprep.subr.mxu0 0.0
    %3393 = vmatpush1.msra.mxu0 0.0
    %3394 = vmatprep.subr.mxu0 0.0
    %3395 = vmatpush1.msra.mxu0 0.0
    %3396 = vmatprep.subr.mxu0 0.0
    %3397 = vmatpush1.msra.mxu0 0.0
    %3398 = vmatprep.subr.mxu0 0.0
    %3399 = vmatpush1.msra.mxu0 0.0
    %3400 = vmatprep.subr.mxu0 0.0
    %3401 = vmatpush1.msra.mxu0 0.0
    %3402 = vmatprep.subr.mxu0 0.0
    %3403 = vmatpush1.msra.mxu0 0.0
    %3404 = vmatprep.subr.mxu0 0.0
    %3405 = vmatpush1.msra.mxu0 0.0
    %3406 = vmatprep.subr.mxu0 0.0
    %3407 = vmatpush1.msra.mxu0 0.0
    %3408 = vmatprep.subr.mxu0 0.0
    %3409 = vmatpush1.msra.mxu0 0.0
    %3410 = vmatprep.subr.mxu0 0.0
    %3411 = vmatpush1.msra.mxu0 0.0
    %3412 = vmatprep.subr.mxu0 0.0
    %3413 = vmatpush1.msra.mxu0 0.0
    %3414 = vmatprep.mubr.f32.mxu0 0.0
    %3415 = vmatmul.mubr.f32.gmra.mrb[0].mxu0 %v3348
    %v3416 = vpop.f32.mrb[0].mxu0
    %v3417 = vadd.f32 0.0, %v3416
    %v3418 = vpop.f32.mrb[0].mxu0
    %3419 = vdwg.mxu0
    %3421 = vrot.lane.b32.xlu0 %v3083, 8
    %v3422 = vpop.permute.xlu0 %3421
    %3425 = vrot.lane.b32.xlu0 %v3250, 16
    %v3426 = vpop.permute.xlu0 %3425
    %3429 = vrot.lane.b32.xlu0 %v3417, 24
    %v3430 = vpop.permute.xlu0 %3429
    %v3432 = vsel %vm214, %v2916, %v3422
    %v3433 = vsel %vm896, %v3432, %v3426
    %v3434 = vsel %vm898, %v3433, %v3430
    %s3435 = scalar_lea.vmem %s8, 32
    %v3436 = vld [vmem:[%s3435] sm:$0xff]
    %v3437 = vld [vmem:[%s3435 + $0x8] sm:$0xff]
    %v3438 = vld [vmem:[%s3435 + $0x10] sm:$0xff]
    %v3439 = vld [vmem:[%s3435 + $0x18] sm:$0xff]
    %s3440 = scalar_lea.vmem %s9, 1
    %v3441 = vld [vmem:[%s3440] sm:$0x1]
    %v3443 = vlaneseq
    %v3444 = vshrl.u32 %v3443, 7
    %v3445 = vsub.s32 0, %v3444
    %v3446 = vrot.slane %v3441, %v3445
    %v3449 = vsel %vm72, %v2752, 0
    %v3452 = vsel %vm72, %v3434, 0
    %3454 = vmatprep.subr.mxu0 0.0
    %3455 = vmatpush1.msra.mxu0 %v3436
    %3456 = vmatprep.subr.mxu0 0.0
    %3457 = vmatpush1.msra.mxu0 %v3437
    %3458 = vmatprep.subr.mxu0 0.0
    %3459 = vmatpush1.msra.mxu0 %v3438
    %3460 = vmatprep.subr.mxu0 0.0
    %3461 = vmatpush1.msra.mxu0 %v3439
    %3462 = vmatprep.subr.mxu0 0.0
    %3463 = vmatpush1.msra.mxu0 0.0
    %3464 = vmatprep.subr.mxu0 0.0
    %3465 = vmatpush1.msra.mxu0 0.0
    %3466 = vmatprep.subr.mxu0 0.0
    %3467 = vmatpush1.msra.mxu0 0.0
    %3468 = vmatprep.subr.mxu0 0.0
    %3469 = vmatpush1.msra.mxu0 0.0
    %3470 = vmatprep.subr.mxu0 0.0
    %3471 = vmatpush1.msra.mxu0 0.0
    %3472 = vmatprep.subr.mxu0 0.0
    %3473 = vmatpush1.msra.mxu0 0.0
    %3474 = vmatprep.subr.mxu0 0.0
    %3475 = vmatpush1.msra.mxu0 0.0
    %3476 = vmatprep.subr.mxu0 0.0
    %3477 = vmatpush1.msra.mxu0 0.0
    %3478 = vmatprep.subr.mxu0 0.0
    %3479 = vmatpush1.msra.mxu0 0.0
    %3480 = vmatprep.subr.mxu0 0.0
    %3481 = vmatpush1.msra.mxu0 0.0
    %3482 = vmatprep.subr.mxu0 0.0
    %3483 = vmatpush1.msra.mxu0 0.0
    %3484 = vmatprep.subr.mxu0 0.0
    %3485 = vmatpush1.msra.mxu0 0.0
    %3486 = vmatprep.subr.mxu0 0.0
    %3487 = vmatpush1.msra.mxu0 0.0
    %3488 = vmatprep.subr.mxu0 0.0
    %3489 = vmatpush1.msra.mxu0 0.0
    %3490 = vmatprep.subr.mxu0 0.0
    %3491 = vmatpush1.msra.mxu0 0.0
    %3492 = vmatprep.subr.mxu0 0.0
    %3493 = vmatpush1.msra.mxu0 0.0
    %3494 = vmatprep.subr.mxu0 0.0
    %3495 = vmatpush1.msra.mxu0 0.0
    %3496 = vmatprep.subr.mxu0 0.0
    %3497 = vmatpush1.msra.mxu0 0.0
    %3498 = vmatprep.subr.mxu0 0.0
    %3499 = vmatpush1.msra.mxu0 0.0
    %3500 = vmatprep.subr.mxu0 0.0
    %3501 = vmatpush1.msra.mxu0 0.0
    %3502 = vmatprep.subr.mxu0 0.0
    %3503 = vmatpush1.msra.mxu0 0.0
    %3504 = vmatprep.subr.mxu0 0.0
    %3505 = vmatpush1.msra.mxu0 0.0
    %3506 = vmatprep.subr.mxu0 0.0
    %3507 = vmatpush1.msra.mxu0 0.0
    %3508 = vmatprep.subr.mxu0 0.0
    %3509 = vmatpush1.msra.mxu0 0.0
    %3510 = vmatprep.subr.mxu0 0.0
    %3511 = vmatpush1.msra.mxu0 0.0
    %3512 = vmatprep.subr.mxu0 0.0
    %3513 = vmatpush1.msra.mxu0 0.0
    %3514 = vmatprep.subr.mxu0 0.0
    %3515 = vmatpush1.msra.mxu0 0.0
    %3516 = vmatprep.subr.mxu0 0.0
    %3517 = vmatpush1.msra.mxu0 0.0
    %3518 = vmatprep.mubr.f32.mxu0 0.0
    %3519 = vmatmul.mubr.f32.gmra.mrb[0].mxu0 %v3449
    %v3520 = vpop.f32.mrb[0].mxu0
    %v3521 = vadd.f32 %v3446, %v3520
    %v3522 = vpop.f32.mrb[0].mxu0
    %3523 = vmatprep.mubr.f32.mxu0 0.0
    %3524 = vmatmul.mubr.f32.gmra.mrb[0].mxu0 %v3452
    %v3525 = vpop.f32.mrb[0].mxu0
    %v3526 = vadd.f32 %v3446, %v3525
    %v3527 = vpop.f32.mrb[0].mxu0
    %3528 = vdwg.mxu0
    %v3529 = vadd.f32 %v3521, %v1975
    %v3530 = vadd.f32 %v3526, %v1976
    %s3531 = scalar_lea.vmem %s10, 1
    %v3532 = vld [vmem:[%s3531] sm:$0x1]
    %s3533 = scalar_lea.vmem %s11, 1
    %v3534 = vld [vmem:[%s3533] sm:$0x1]
    %v3535 = vsel %vm72, %v3529, 0.0
    %3536 = vadd.xlane.f32.xlu0 %v3535
    %v3537 = vpop.xlane.xlu0 %3536
    %v3538 = vsel %vm72, %v3530, 0.0
    %3539 = vadd.xlane.f32.xlu0 %v3538
    %v3540 = vpop.xlane.xlu0 %3539
    %v3541 = vmul.f32 %v3537, %v79
    %v3542 = vmul.f32 %v3540, %v79
    %v3543 = vsub.f32 %v3529, %v3541
    %v3544 = vsub.f32 %v3530, %v3542
    %v3545 = vmul.f32 %v3543, %v3543
    %v3546 = vmul.f32 %v3544, %v3544
    %v3547 = vsel %vm72, %v3545, 0.0
    %3548 = vadd.xlane.f32.xlu0 %v3547
    %v3549 = vpop.xlane.xlu0 %3548
    %v3550 = vsel %vm72, %v3546, 0.0
    %3551 = vadd.xlane.f32.xlu0 %v3550
    %v3552 = vpop.xlane.xlu0 %3551
    %v3553 = vmul.f32 %v3549, %v79
    %v3554 = vmul.f32 %v3552, %v79
    %v3555 = vadd.f32 %v3553, 1e-12
    %v3556 = vadd.f32 %v3554, 1e-12
    %v3557 = vrsqrt.pop %v3555
    %v3558 = vrsqrt.pop %v3556
    %v3559 = vmul.f32 %v3543, %v3557
    %v3560 = vmul.f32 %v3544, %v3558
    %v3562 = vlaneseq
    %v3563 = vshrl.u32 %v3562, 7
    %v3564 = vsub.s32 0, %v3563
    %v3565 = vrot.slane %v3532, %v3564
    %v3567 = vmul.f32 %v3559, %v3565
    %v3568 = vmul.f32 %v3560, %v3565
    %v3570 = vlaneseq
    %v3571 = vshrl.u32 %v3570, 7
    %v3572 = vsub.s32 0, %v3571
    %v3573 = vrot.slane %v3534, %v3572
    %v3575 = vadd.f32 %v3567, %v3573
    %v3576 = vadd.f32 %v3568, %v3573
    %s3577 = scalar_lea.vmem %s12, 32
    %v3578 = vld [vmem:[%s3577] sm:$0xff]
    %v3579 = vld [vmem:[%s3577 + $0x8] sm:$0xff]
    %v3580 = vld [vmem:[%s3577 + $0x10] sm:$0xff]
    %v3581 = vld [vmem:[%s3577 + $0x18] sm:$0xff]
    %s3582 = scalar_lea.vmem %s13, 1
    %v3583 = vld [vmem:[%s3582] sm:$0x1]
    %v3585 = vlaneseq
    %v3586 = vshrl.u32 %v3585, 7
    %v3587 = vsub.s32 0, %v3586
    %v3588 = vrot.slane %v3583, %v3587
    %v3591 = vsel %vm72, %v3575, 0
    %v3594 = vsel %vm72, %v3576, 0
    %3596 = vmatprep.subr.mxu0 0.0
    %3597 = vmatpush1.msra.mxu0 %v3578
    %3598 = vmatprep.subr.mxu0 0.0
    %3599 = vmatpush1.msra.mxu0 %v3579
    %3600 = vmatprep.subr.mxu0 0.0
    %3601 = vmatpush1.msra.mxu0 %v3580
    %3602 = vmatprep.subr.mxu0 0.0
    %3603 = vmatpush1.msra.mxu0 %v3581
    %3604 = vmatprep.subr.mxu0 0.0
    %3605 = vmatpush1.msra.mxu0 0.0
    %3606 = vmatprep.subr.mxu0 0.0
    %3607 = vmatpush1.msra.mxu0 0.0
    %3608 = vmatprep.subr.mxu0 0.0
    %3609 = vmatpush1.msra.mxu0 0.0
    %3610 = vmatprep.subr.mxu0 0.0
    %3611 = vmatpush1.msra.mxu0 0.0
    %3612 = vmatprep.subr.mxu0 0.0
    %3613 = vmatpush1.msra.mxu0 0.0
    %3614 = vmatprep.subr.mxu0 0.0
    %3615 = vmatpush1.msra.mxu0 0.0
    %3616 = vmatprep.subr.mxu0 0.0
    %3617 = vmatpush1.msra.mxu0 0.0
    %3618 = vmatprep.subr.mxu0 0.0
    %3619 = vmatpush1.msra.mxu0 0.0
    %3620 = vmatprep.subr.mxu0 0.0
    %3621 = vmatpush1.msra.mxu0 0.0
    %3622 = vmatprep.subr.mxu0 0.0
    %3623 = vmatpush1.msra.mxu0 0.0
    %3624 = vmatprep.subr.mxu0 0.0
    %3625 = vmatpush1.msra.mxu0 0.0
    %3626 = vmatprep.subr.mxu0 0.0
    %3627 = vmatpush1.msra.mxu0 0.0
    %3628 = vmatprep.subr.mxu0 0.0
    %3629 = vmatpush1.msra.mxu0 0.0
    %3630 = vmatprep.subr.mxu0 0.0
    %3631 = vmatpush1.msra.mxu0 0.0
    %3632 = vmatprep.subr.mxu0 0.0
    %3633 = vmatpush1.msra.mxu0 0.0
    %3634 = vmatprep.subr.mxu0 0.0
    %3635 = vmatpush1.msra.mxu0 0.0
    %3636 = vmatprep.subr.mxu0 0.0
    %3637 = vmatpush1.msra.mxu0 0.0
    %3638 = vmatprep.subr.mxu0 0.0
    %3639 = vmatpush1.msra.mxu0 0.0
    %3640 = vmatprep.subr.mxu0 0.0
    %3641 = vmatpush1.msra.mxu0 0.0
    %3642 = vmatprep.subr.mxu0 0.0
    %3643 = vmatpush1.msra.mxu0 0.0
    %3644 = vmatprep.subr.mxu0 0.0
    %3645 = vmatpush1.msra.mxu0 0.0
    %3646 = vmatprep.subr.mxu0 0.0
    %3647 = vmatpush1.msra.mxu0 0.0
    %3648 = vmatprep.subr.mxu0 0.0
    %3649 = vmatpush1.msra.mxu0 0.0
    %3650 = vmatprep.subr.mxu0 0.0
    %3651 = vmatpush1.msra.mxu0 0.0
    %3652 = vmatprep.subr.mxu0 0.0
    %3653 = vmatpush1.msra.mxu0 0.0
    %3654 = vmatprep.subr.mxu0 0.0
    %3655 = vmatpush1.msra.mxu0 0.0
    %3656 = vmatprep.subr.mxu0 0.0
    %3657 = vmatpush1.msra.mxu0 0.0
    %3658 = vmatprep.subr.mxu0 0.0
    %3659 = vmatpush1.msra.mxu0 0.0
    %3660 = vmatprep.mubr.f32.mxu0 0.0
    %3661 = vmatmul.mubr.f32.gmra.mrb[0].mxu0 %v3591
    %v3662 = vpop.f32.mrb[0].mxu0
    %v3663 = vadd.f32 %v3588, %v3662
    %v3664 = vpop.f32.mrb[0].mxu0
    %3665 = vmatprep.mubr.f32.mxu0 0.0
    %3666 = vmatmul.mubr.f32.gmra.mrb[0].mxu0 %v3594
    %v3667 = vpop.f32.mrb[0].mxu0
    %v3668 = vadd.f32 %v3588, %v3667
    %v3669 = vpop.f32.mrb[0].mxu0
    %3670 = vdwg.mxu0
    %v3671 = vmul.f32 %v3663, 0.5
    %v3672 = vmul.f32 %v3668, 0.5
    %v3673 = vmul.f32 %v3663, 0.044715
    %v3674 = vmul.f32 %v3668, 0.044715
    %v3675 = vmul.f32 %v3673, %v3663
    %v3676 = vmul.f32 %v3674, %v3668
    %v3677 = vmul.f32 %v3675, %v3663
    %v3678 = vmul.f32 %v3676, %v3668
    %v3679 = vadd.f32 %v3663, %v3677
    %v3680 = vadd.f32 %v3668, %v3678
    %v3681 = vmul.f32 %v3679, 0.7978846
    %v3682 = vmul.f32 %v3680, 0.7978846
    %v3683 = vtanh.pop %v3681
    %v3684 = vtanh.pop %v3682
    %v3685 = vadd.f32 %v3683, 1.0
    %v3686 = vadd.f32 %v3684, 1.0
    %v3687 = vmul.f32 %v3671, %v3685
    %v3688 = vmul.f32 %v3672, %v3686
    %s3689 = scalar_lea.vmem %s14, 64
    %v3690 = vld [vmem:[%s3689] sm:$0xff]
    %v3691 = vld [vmem:[%s3689 + $0x8] sm:$0xff]
    %v3692 = vld [vmem:[%s3689 + $0x10] sm:$0xff]
    %v3693 = vld [vmem:[%s3689 + $0x18] sm:$0xff]
    %v3694 = vld [vmem:[%s3689 + $0x20] sm:$0xff]
    %v3695 = vld [vmem:[%s3689 + $0x28] sm:$0xff]
    %v3696 = vld [vmem:[%s3689 + $0x30] sm:$0xff]
    %v3697 = vld [vmem:[%s3689 + $0x38] sm:$0xff]
    %s3698 = scalar_lea.vmem %s15, 1
    %v3699 = vld [vmem:[%s3698] sm:$0x1]
    %v3701 = vlaneseq
    %v3702 = vshrl.u32 %v3701, 7
    %v3703 = vsub.s32 0, %v3702
    %v3704 = vrot.slane %v3699, %v3703
    %v3707 = vsel %vm1849, %v3687, 0
    %v3710 = vsel %vm1849, %v3688, 0
    %3712 = vmatprep.subr.mxu0 0.0
    %3713 = vmatpush1.msra.mxu0 %v3690
    %3714 = vmatprep.subr.mxu0 0.0
    %3715 = vmatpush1.msra.mxu0 %v3691
    %3716 = vmatprep.subr.mxu0 0.0
    %3717 = vmatpush1.msra.mxu0 %v3692
    %3718 = vmatprep.subr.mxu0 0.0
    %3719 = vmatpush1.msra.mxu0 %v3693
    %3720 = vmatprep.subr.mxu0 0.0
    %3721 = vmatpush1.msra.mxu0 %v3694
    %3722 = vmatprep.subr.mxu0 0.0
    %3723 = vmatpush1.msra.mxu0 %v3695
    %3724 = vmatprep.subr.mxu0 0.0
    %3725 = vmatpush1.msra.mxu0 %v3696
    %3726 = vmatprep.subr.mxu0 0.0
    %3727 = vmatpush1.msra.mxu0 %v3697
    %3728 = vmatprep.subr.mxu0 0.0
    %3729 = vmatpush1.msra.mxu0 0.0
    %3730 = vmatprep.subr.mxu0 0.0
    %3731 = vmatpush1.msra.mxu0 0.0
    %3732 = vmatprep.subr.mxu0 0.0
    %3733 = vmatpush1.msra.mxu0 0.0
    %3734 = vmatprep.subr.mxu0 0.0
    %3735 = vmatpush1.msra.mxu0 0.0
    %3736 = vmatprep.subr.mxu0 0.0
    %3737 = vmatpush1.msra.mxu0 0.0
    %3738 = vmatprep.subr.mxu0 0.0
    %3739 = vmatpush1.msra.mxu0 0.0
    %3740 = vmatprep.subr.mxu0 0.0
    %3741 = vmatpush1.msra.mxu0 0.0
    %3742 = vmatprep.subr.mxu0 0.0
    %3743 = vmatpush1.msra.mxu0 0.0
    %3744 = vmatprep.subr.mxu0 0.0
    %3745 = vmatpush1.msra.mxu0 0.0
    %3746 = vmatprep.subr.mxu0 0.0
    %3747 = vmatpush1.msra.mxu0 0.0
    %3748 = vmatprep.subr.mxu0 0.0
    %3749 = vmatpush1.msra.mxu0 0.0
    %3750 = vmatprep.subr.mxu0 0.0
    %3751 = vmatpush1.msra.mxu0 0.0
    %3752 = vmatprep.subr.mxu0 0.0
    %3753 = vmatpush1.msra.mxu0 0.0
    %3754 = vmatprep.subr.mxu0 0.0
    %3755 = vmatpush1.msra.mxu0 0.0
    %3756 = vmatprep.subr.mxu0 0.0
    %3757 = vmatpush1.msra.mxu0 0.0
    %3758 = vmatprep.subr.mxu0 0.0
    %3759 = vmatpush1.msra.mxu0 0.0
    %3760 = vmatprep.subr.mxu0 0.0
    %3761 = vmatpush1.msra.mxu0 0.0
    %3762 = vmatprep.subr.mxu0 0.0
    %3763 = vmatpush1.msra.mxu0 0.0
    %3764 = vmatprep.subr.mxu0 0.0
    %3765 = vmatpush1.msra.mxu0 0.0
    %3766 = vmatprep.subr.mxu0 0.0
    %3767 = vmatpush1.msra.mxu0 0.0
    %3768 = vmatprep.subr.mxu0 0.0
    %3769 = vmatpush1.msra.mxu0 0.0
    %3770 = vmatprep.subr.mxu0 0.0
    %3771 = vmatpush1.msra.mxu0 0.0
    %3772 = vmatprep.subr.mxu0 0.0
    %3773 = vmatpush1.msra.mxu0 0.0
    %3774 = vmatprep.subr.mxu0 0.0
    %3775 = vmatpush1.msra.mxu0 0.0
    %3776 = vmatprep.mubr.f32.mxu0 0.0
    %3777 = vmatmul.mubr.f32.gmra.mrb[0].mxu0 %v3707
    %v3778 = vpop.f32.mrb[0].mxu0
    %v3779 = vadd.f32 %v3704, %v3778
    %v3780 = vpop.f32.mrb[0].mxu0
    %3781 = vmatprep.mubr.f32.mxu0 0.0
    %3782 = vmatmul.mubr.f32.gmra.mrb[0].mxu0 %v3710
    %v3783 = vpop.f32.mrb[0].mxu0
    %v3784 = vadd.f32 %v3704, %v3783
    %v3785 = vpop.f32.mrb[0].mxu0
    %3786 = vdwg.mxu0
    %v3787 = vadd.f32 %v3779, %v3575
    %v3788 = vadd.f32 %v3784, %v3576
    %s3789 = scalar_lea.vmem %s16, 1
    %v3790 = vld [vmem:[%s3789] sm:$0x1]
    %s3791 = scalar_lea.vmem %s17, 1
    %v3792 = vld [vmem:[%s3791] sm:$0x1]
    %v3793 = vsel %vm72, %v3787, 0.0
    %3794 = vadd.xlane.f32.xlu0 %v3793
    %v3795 = vpop.xlane.xlu0 %3794
    %v3796 = vsel %vm72, %v3788, 0.0
    %3797 = vadd.xlane.f32.xlu0 %v3796
    %v3798 = vpop.xlane.xlu0 %3797
    %v3799 = vmul.f32 %v3795, %v79
    %v3800 = vmul.f32 %v3798, %v79
    %v3801 = vsub.f32 %v3787, %v3799
    %v3802 = vsub.f32 %v3788, %v3800
    %v3803 = vmul.f32 %v3801, %v3801
    %v3804 = vmul.f32 %v3802, %v3802
    %v3805 = vsel %vm72, %v3803, 0.0
    %3806 = vadd.xlane.f32.xlu0 %v3805
    %v3807 = vpop.xlane.xlu0 %3806
    %v3808 = vsel %vm72, %v3804, 0.0
    %3809 = vadd.xlane.f32.xlu0 %v3808
    %v3810 = vpop.xlane.xlu0 %3809
    %v3811 = vmul.f32 %v3807, %v79
    %v3812 = vmul.f32 %v3810, %v79
    %v3813 = vadd.f32 %v3811, 1e-12
    %v3814 = vadd.f32 %v3812, 1e-12
    %v3815 = vrsqrt.pop %v3813
    %v3816 = vrsqrt.pop %v3814
    %v3817 = vmul.f32 %v3801, %v3815
    %v3818 = vmul.f32 %v3802, %v3816
    %v3820 = vlaneseq
    %v3821 = vshrl.u32 %v3820, 7
    %v3822 = vsub.s32 0, %v3821
    %v3823 = vrot.slane %v3790, %v3822
    %v3825 = vmul.f32 %v3817, %v3823
    %v3826 = vmul.f32 %v3818, %v3823
    %v3828 = vlaneseq
    %v3829 = vshrl.u32 %v3828, 7
    %v3830 = vsub.s32 0, %v3829
    %v3831 = vrot.slane %v3792, %v3830
    %v3833 = vadd.f32 %v3825, %v3831
    %v3834 = vadd.f32 %v3826, %v3831
    %v3836 = vrot.slane %v3834, 7
    %vm3838 = vcmask 1040384
    %v3839 = vsel %vm3838, %v3833, %v3836
    %vm3840 = vcmask 254976
    %3841 = vst.msk [vmem:[#allocation2] sm:$0x3] %vm3840, %v3839
    // Predicated region
    $region74: #{simcse_forward.1} parent=1 // pred_check
      _
    $region75: #{simcse_forward.1} parent=1 // pred_check_branch
      %3843 = sbr.rel (0) target = $region77
    $region76: #{simcse_forward.1} parent=1 // pred_region
      %s3845 = ssub.s32 32, 32
      %3846 = vsyncadd [#allocation3], %s3845
      %s3848 = sshll.u32 [#allocation2], 4
      %s3849 = int_to_ptr.vmem [resolvable:$true] %s3848
      %3851 = dma.vmem_to_hbm [thread:$0]  %s3849, 32, %s18, [#allocation3]
    $region77: #{simcse_forward.1} parent=1 // pred_fallthru
      _
    // Predicated region
    $region78: #{simcse_forward.1} parent=1 // pred_check
      _
    $region79: #{simcse_forward.1} parent=1 // pred_check_branch
      %3853 = sbr.rel (0) target = $region81
    $region80: #{simcse_forward.1} parent=1 // pred_region
      %3854 = dma.done [#allocation3], 32
    $region81: #{simcse_forward.1} parent=1 // pred_fallthru
      _
    %3855 = vsyncpa [#allocation3], 1

</llo_original>
